<compile_context>
chip_gen: v7x
topology: tpu7x:2x2x1
jax: 0.10.0
libtpu: 0.0.40
codegen_flags: <defaults>
</compile_context>

<pallas_src>
import functools

import jax
import jax.numpy as jnp
import numpy as np
from jax import lax
from jax.experimental import pallas as pl
from jax.experimental.pallas import tpu as pltpu

_LANE = 128      # TPU lane width: channel dims are padded to a multiple of this
_SUBLANE = 8     # f32 sublane tile: padded-scratch W axis rounded up to this


def _round_up(v, m):
    return (v + m - 1) // m * m


def _pad_axis(a, axis, target):
    if a.shape[axis] == target:
        return a
    widths = [(0, 0)] * a.ndim
    widths[axis] = (0, target - a.shape[axis])
    return jnp.pad(a, widths)


# --------------------------------------------------------------------------
# Pallas kernel
# --------------------------------------------------------------------------
def _bottleneck_kernel(x_ref, w1_ref, b1_ref, w2_ref, b2_ref, w3_ref, b3_ref,
                       out_ref, buf_ref, *, H, W, dilation, drs, delta):
    """One batch element per grid step (NHWC, channels padded to 128 lanes).

    x_ref  : (1, H, W, C)   bf16  input tile (also the identity residual)
    w1_ref : (C, P)         bf16  conv1 1x1 weights (BN1 scale folded in)
    w2_ref : (3, 3, P, P)   bf16  conv2 3x3 weights (BN2 scale folded in)
    w3_ref : (P, C)         bf16  conv3 1x1 weights (BN3 scale folded in)
    b*_ref : (1, P or C)    f32   folded BatchNorm biases
    out_ref: (1, H, W, C)   f32   output tile
    buf_ref: (H+2p, Wpp, P) f32   zero-padded conv2 activation scratch
    """
    pad = dilation
    Hp, Wpp, P = buf_ref.shape
    C = out_ref.shape[-1]
    f32 = jnp.float32
    zeros = lambda s: jnp.zeros(s, f32)

    # ---- zero only the halo border of the padded scratch (perimeter strips).
    # Done every step: the interior is fully overwritten by stage 1 below, and
    # re-zeroing the halo keeps the kernel correct when the batch axis is
    # sharded across TensorCores ("parallel" semantics -> per-core scratch).
    buf_ref[pl.ds(0, pad), :, :] = zeros((pad, Wpp, P))                 # top rows
    buf_ref[pl.ds(pad + H, pad), :, :] = zeros((pad, Wpp, P))           # bottom rows
    buf_ref[pl.ds(pad, H), pl.ds(0, pad), :] = zeros((H, pad, P))       # left cols
    buf_ref[pl.ds(pad, H), pl.ds(pad + W, Wpp - pad - W), :] = (        # right cols
        zeros((H, Wpp - pad - W, P)))

    # ---- stage 1: conv1 (1x1) + bias + ReLU — one (H*W, C) x (C, P) matmul ----
    x2d = x_ref[0].reshape(H * W, C)                                    # bf16
    h1 = jnp.dot(x2d, w1_ref[...], preferred_element_type=f32)
    h1 = jnp.maximum(h1 + b1_ref[...], 0.0)                             # (H*W, P) f32
    buf_ref[pl.ds(pad, H), pl.ds(pad, W), :] = h1.reshape(H, W, P)

    # ---- stage 2: conv2 (3x3, dilated) + bias + ReLU ----
    # 9 taps, one large (H*W, P) x (P, P) bf16 matmul per tap, f32 accumulation.
    acc = jnp.zeros((H * W, P), f32)
    for kh in range(3):
        band = buf_ref[pl.ds(kh * dilation, H), :, :]                   # aligned load
        for kw in range(3):
            patch = band[:, kw * dilation:kw * dilation + W, :]
            patch = patch.reshape(H * W, P).astype(jnp.bfloat16)
            acc = acc + jnp.dot(patch, w2_ref[kh, kw],
                                preferred_element_type=f32)
    h2 = jnp.maximum(acc + b2_ref[...], 0.0).astype(jnp.bfloat16)       # (H*W, P)

    # ---- stage 3: conv3 (1x1) + bias + identity residual + ReLU (+ DRS) ----
    h3 = jnp.dot(h2, w3_ref[...], preferred_element_type=f32) + b3_ref[...]
    y = jnp.maximum(h3 + x2d.astype(f32), 0.0)                          # (H*W, C)
    if drs:
        # Per-channel spatial max of this sample, from the live value
        # (no extra read pass over out_ref).
        m = jnp.max(y, axis=0, keepdims=True)                           # (1, C)
        y = jnp.minimum(y, m * delta)
    out_ref[0] = y.reshape(H, W, C)


# --------------------------------------------------------------------------
# Wrapper
# --------------------------------------------------------------------------
def bottleneck_forward(x_nchw, params, *, dilation=1, drs=False, delta=0.55):
    """Bottleneck forward. Input/output in NCHW (PyTorch convention)."""
    x = jnp.transpose(x_nchw, (0, 2, 3, 1))                     # NCHW -> NHWC
    N, H, W, Cin = x.shape
    assert Cin == params["cin"] == params["cout"], \
        "identity residual requires Cin == Cout (downsample branch not implemented)"

    Cin_p = params["w1"].shape[0]
    Pp = params["w1"].shape[1]
    Cout_p = params["w3"].shape[1]
    Cout = params["cout"]

    pad = dilation
    Hp = H + 2 * pad
    Wpp = _round_up(W + 2 * pad, _SUBLANE)

    x_p = _pad_axis(x, 3, Cin_p).astype(jnp.bfloat16)

    kernel = functools.partial(_bottleneck_kernel, H=H, W=W, dilation=dilation,
                               drs=drs, delta=float(delta))

    full = lambda shape: pl.BlockSpec(shape, lambda i: (0,) * len(shape))

    out = pl.pallas_call(
        kernel,
        out_shape=jax.ShapeDtypeStruct((N, H, W, Cout_p), jnp.float32),
        grid_spec=pltpu.PrefetchScalarGridSpec(
            num_scalar_prefetch=0,
            grid=(N,),
            in_specs=[
                pl.BlockSpec((1, H, W, Cin_p), lambda i: (i, 0, 0, 0)),   # x
                full((Cin_p, Pp)), full((1, Pp)),                         # conv1 / bn1
                full((3, 3, Pp, Pp)), full((1, Pp)),                      # conv2 / bn2
                full((Pp, Cout_p)), full((1, Cout_p)),                    # conv3 / bn3
            ],
            out_specs=pl.BlockSpec((1, H, W, Cout_p), lambda i: (i, 0, 0, 0)),
            scratch_shapes=[pltpu.VMEM((Hp, Wpp, Pp), jnp.float32)],
        ),
        # Batch elements are independent -> shard the batch axis across
        # TensorCores on multi-core chips (v7x); harmless on 1-TC v5e/v6e.
        compiler_params=pltpu.CompilerParams(
            dimension_semantics=("parallel",)),
    )(x_p, params["w1"], params["b1"], params["w2"], params["b2"],
      params["w3"], params["b3"])

    out = out[..., :Cout]                                       # drop channel padding
    return jnp.transpose(out, (0, 3, 1, 2))                     # NHWC -> NCHW


# --------------------------------------------------------------------------
# Host-side parameter preparation (BN folding, channel padding, bf16 cast)
# --------------------------------------------------------------------------
def prepare_kernel_params(conv1_w, bn1, conv2_w, bn2, conv3_w, bn3, eps=1e-5):
    P, Cin = conv1_w.shape[0], conv1_w.shape[1]
    Cout = conv3_w.shape[0]
    Pp = _round_up(P, _LANE)
    Cin_p = _round_up(Cin, _LANE)
    Cout_p = _round_up(Cout, _LANE)

    def fold(p):
        scale = p["gamma"] / jnp.sqrt(p["var"] + eps)
        return scale, p["beta"] - p["mean"] * scale

    s1, b1 = fold(bn1)
    s2, b2 = fold(bn2)
    s3, b3 = fold(bn3)

    # Fold the BN scale into the conv weights (per output channel).
    w1 = (conv1_w[:, :, 0, 0] * s1[:, None]).T                            # (Cin, P)
    w2 = jnp.transpose(conv2_w * s2[:, None, None, None], (2, 3, 1, 0))   # (kh,kw,in,out)
    w3 = (conv3_w[:, :, 0, 0] * s3[:, None]).T                            # (P, Cout)

    bf16 = jnp.bfloat16
    return {
        "w1": _pad_axis(_pad_axis(w1, 0, Cin_p), 1, Pp).astype(bf16),
        "w2": _pad_axis(_pad_axis(w2, 2, Pp), 3, Pp).astype(bf16),
        "w3": _pad_axis(_pad_axis(w3, 0, Pp), 1, Cout_p).astype(bf16),
        "b1": _pad_axis(b1[None, :], 1, Pp).astype(jnp.float32),
        "b2": _pad_axis(b2[None, :], 1, Pp).astype(jnp.float32),
        "b3": _pad_axis(b3[None, :], 1, Cout_p).astype(jnp.float32),
        "cin": int(Cin), "cout": int(Cout),
    }


# --------------------------------------------------------------------------
# Pure-JAX reference (mirrors the PyTorch forward exactly, in f32)
# --------------------------------------------------------------------------
def _ref_bottleneck(x, conv1_w, bn1, conv2_w, bn2, conv3_w, bn3,
                    *, dilation, drs, delta, eps=1e-5):
    dn = ("NCHW", "OIHW", "NCHW")

    def bn(x, p):
        scale = p["gamma"] / jnp.sqrt(p["var"] + eps)
        bias = p["beta"] - p["mean"] * scale
        return x * scale[None, :, None, None] + bias[None, :, None, None]

    o = lax.conv_general_dilated(x, conv1_w, (1, 1), "VALID", dimension_numbers=dn)
    o = jax.nn.relu(bn(o, bn1))
    o = lax.conv_general_dilated(o, conv2_w, (1, 1), [(dilation, dilation)] * 2,
                                 rhs_dilation=(dilation, dilation),
                                 dimension_numbers=dn)
    o = jax.nn.relu(bn(o, bn2))
    o = lax.conv_general_dilated(o, conv3_w, (1, 1), "VALID", dimension_numbers=dn)
    o = bn(o, bn3)
    o = jax.nn.relu(o + x)          # downsample is None -> identity residual
    if drs:
        m = jnp.max(o, axis=(2, 3), keepdims=True)
        o = jnp.minimum(o, m * delta)
    return o


# --------------------------------------------------------------------------
# Deterministic parameter construction + demo
# --------------------------------------------------------------------------
def _make_torch_params(key, inplanes, planes):
    expansion = 4
    ks = list(jax.random.split(key, 6))

    def bn_params(k, c):
        k1, k2, k3, k4 = jax.random.split(k, 4)
        return {
            "gamma": jax.random.uniform(k1, (c,), jnp.float32, 0.5, 1.5),
            "beta": 0.1 * jax.random.normal(k2, (c,), jnp.float32),
            "mean": 0.1 * jax.random.normal(k3, (c,), jnp.float32),
            "var": jax.random.uniform(k4, (c,), jnp.float32, 0.5, 1.5),
        }

    conv1_w = 0.3 * jax.random.normal(ks[0], (planes, inplanes, 1, 1), jnp.float32)
    conv2_w = 0.3 * jax.random.normal(ks[1], (planes, planes, 3, 3), jnp.float32)
    conv3_w = 0.3 * jax.random.normal(ks[2], (planes * expansion, planes, 1, 1),
                                      jnp.float32)
    return (conv1_w, bn_params(ks[3], planes),
            conv2_w, bn_params(ks[4], planes),
            conv3_w, bn_params(ks[5], planes * expansion))


if __name__ == "__main__":
    # Small Bottleneck instance: inplanes=16, planes=4 (expansion 4 -> 16 out),
    # stride=1, downsample=None.  Two configs: (dilation=1, DRS head) as in
    # layer4, and (dilation=2, plain ReLU) to exercise the dilated conv path.
    N, inplanes, planes, H, W = 2, 16, 4, 16, 16
    delta = 0.55
    key = jax.random.PRNGKey(0)

    for dilation, drs in ((1, True), (2, False)):
        key, kx, kp = jax.random.split(key, 3)
        x = jax.random.normal(kx, (N, inplanes, H, W), jnp.float32)   # NCHW

        torch_params = _make_torch_params(kp, inplanes, planes)
        kparams = prepare_kernel_params(*torch_params)

        out = jax.block_until_ready(
            bottleneck_forward(x, kparams, dilation=dilation, drs=drs, delta=delta))
        ref = jax.block_until_ready(
            _ref_bottleneck(x, *torch_params, dilation=dilation, drs=drs, delta=delta))

        # bf16 MXU operands with f32 accumulation -> ~1e-2-level agreement.
        np.testing.assert_allclose(np.asarray(out), np.asarray(ref),
                                   rtol=2e-2, atol=5e-2)

    print("KERNEL_OK")
</pallas_src>

<mosaic_0001>
module attributes {stable_mosaic.version = 11 : i64} {
  func.func @_bottleneck_kernel(%arg0: i32, %arg1: memref<1x16x16x128xbf16, #tpu.memory_space<vmem>>, %arg2: memref<128x128xbf16, #tpu.memory_space<vmem>>, %arg3: memref<1x128xf32, #tpu.memory_space<vmem>>, %arg4: memref<3x3x128x128xbf16, #tpu.memory_space<vmem>>, %arg5: memref<1x128xf32, #tpu.memory_space<vmem>>, %arg6: memref<128x128xbf16, #tpu.memory_space<vmem>>, %arg7: memref<1x128xf32, #tpu.memory_space<vmem>>, %arg8: memref<1x16x16x128xf32, #tpu.memory_space<vmem>>, %arg9: memref<18x24x128xf32, #tpu.memory_space<vmem>>) attributes {dimension_semantics = [#tpu.dimension_semantics<parallel>], iteration_bounds = array<i64: 2>, scalar_prefetch = 0 : i64, scratch_operands = 1 : i64, tpu.core_type = #tpu.core_type<tc>, window_params = [{transform_indices = @transform_0, window_bounds = array<i64: 1, 16, 16, 128>}, {pipeline_mode = #tpu.pipeline_mode<synchronous>, transform_indices = @transform_1, window_bounds = array<i64: 128, 128>}, {pipeline_mode = #tpu.pipeline_mode<synchronous>, transform_indices = @transform_2, window_bounds = array<i64: 1, 128>}, {pipeline_mode = #tpu.pipeline_mode<synchronous>, transform_indices = @transform_3, window_bounds = array<i64: 3, 3, 128, 128>}, {pipeline_mode = #tpu.pipeline_mode<synchronous>, transform_indices = @transform_4, window_bounds = array<i64: 1, 128>}, {pipeline_mode = #tpu.pipeline_mode<synchronous>, transform_indices = @transform_5, window_bounds = array<i64: 128, 128>}, {pipeline_mode = #tpu.pipeline_mode<synchronous>, transform_indices = @transform_6, window_bounds = array<i64: 1, 128>}, {transform_indices = @transform_7, window_bounds = array<i64: 1, 16, 16, 128>}]} {
    %cst = arith.constant 0.000000e+00 : f32
    %0 = vector.broadcast %cst : f32 to vector<1x24x128xf32>
    %c0 = arith.constant 0 : index
    %c0_0 = arith.constant 0 : index
    %c0_1 = arith.constant 0 : index
    %1 = vector.load %arg9[%c0, %c0_0, %c0_1] : memref<18x24x128xf32, #tpu.memory_space<vmem>>, vector<1x24x128xf32>
    tpu.vector_store %arg9[%c0, %c0_0, %c0_1], %0 {strides = array<i32>} : memref<18x24x128xf32, #tpu.memory_space<vmem>>, vector<1x24x128xf32>,
    %cst_2 = arith.constant 0.000000e+00 : f32
    %2 = vector.broadcast %cst_2 : f32 to vector<1x24x128xf32>
    %c17 = arith.constant 17 : index
    %c0_3 = arith.constant 0 : index
    %c0_4 = arith.constant 0 : index
    %3 = vector.load %arg9[%c17, %c0_3, %c0_4] : memref<18x24x128xf32, #tpu.memory_space<vmem>>, vector<1x24x128xf32>
    tpu.vector_store %arg9[%c17, %c0_3, %c0_4], %2 {strides = array<i32>} : memref<18x24x128xf32, #tpu.memory_space<vmem>>, vector<1x24x128xf32>,
    %cst_5 = arith.constant 0.000000e+00 : f32
    %4 = vector.broadcast %cst_5 : f32 to vector<16x1x128xf32>
    %c1 = arith.constant 1 : index
    %c0_6 = arith.constant 0 : index
    %c0_7 = arith.constant 0 : index
    %5 = vector.load %arg9[%c1, %c0_6, %c0_7] : memref<18x24x128xf32, #tpu.memory_space<vmem>>, vector<16x1x128xf32>
    tpu.vector_store %arg9[%c1, %c0_6, %c0_7], %4 {strides = array<i32>} : memref<18x24x128xf32, #tpu.memory_space<vmem>>, vector<16x1x128xf32>,
    %cst_8 = arith.constant 0.000000e+00 : f32
    %6 = vector.broadcast %cst_8 : f32 to vector<16x7x128xf32>
    %c1_9 = arith.constant 1 : index
    %c17_10 = arith.constant 17 : index
    %c0_11 = arith.constant 0 : index
    %7 = vector.load %arg9[%c1_9, %c17_10, %c0_11] : memref<18x24x128xf32, #tpu.memory_space<vmem>>, vector<16x7x128xf32>
    tpu.vector_store %arg9[%c1_9, %c17_10, %c0_11], %6 {strides = array<i32>} : memref<18x24x128xf32, #tpu.memory_space<vmem>>, vector<16x7x128xf32>,
    %c0_12 = arith.constant 0 : index
    %c0_13 = arith.constant 0 : index
    %c0_14 = arith.constant 0 : index
    %c0_15 = arith.constant 0 : index
    %8 = vector.load %arg1[%c0_12, %c0_13, %c0_14, %c0_15] : memref<1x16x16x128xbf16, #tpu.memory_space<vmem>>, vector<1x16x16x128xbf16>
    %9 = vector.shape_cast %8 : vector<1x16x16x128xbf16> to vector<16x16x128xbf16>
    %10 = vector.shape_cast %9 : vector<16x16x128xbf16> to vector<256x128xbf16>
    %c0_16 = arith.constant 0 : index
    %c0_17 = arith.constant 0 : index
    %11 = vector.load %arg2[%c0_16, %c0_17] : memref<128x128xbf16, #tpu.memory_space<vmem>>, vector<128x128xbf16>
    %cst_18 = arith.constant dense<0.000000e+00> : vector<256x128xf32>
    %12 = tpu.matmul %10, %11, %cst_18 {dimension_numbers = #tpu.dot_dimension_numbers<[1], [0], [0], [1], [0, 0, 1, 1], [], []>} : vector<256x128xbf16>, vector<128x128xbf16>, vector<256x128xf32> -> vector<256x128xf32>
    %c0_19 = arith.constant 0 : index
    %c0_20 = arith.constant 0 : index
    %13 = vector.load %arg3[%c0_19, %c0_20] : memref<1x128xf32, #tpu.memory_space<vmem>>, vector<1x128xf32>
    %14 = vector.broadcast %13 : vector<1x128xf32> to vector<256x128xf32>
    %15 = arith.addf %12, %14 : vector<256x128xf32>
    %cst_21 = arith.constant 0.000000e+00 : f32
    %16 = vector.broadcast %cst_21 : f32 to vector<256x128xf32>
    %17 = arith.maximumf %15, %16 : vector<256x128xf32>
    %18 = vector.shape_cast %17 : vector<256x128xf32> to vector<16x16x128xf32>
    %c1_22 = arith.constant 1 : index
    %c1_23 = arith.constant 1 : index
    %c0_24 = arith.constant 0 : index
    %19 = vector.load %arg9[%c1_22, %c1_23, %c0_24] : memref<18x24x128xf32, #tpu.memory_space<vmem>>, vector<16x16x128xf32>
    tpu.vector_store %arg9[%c1_22, %c1_23, %c0_24], %18 {strides = array<i32>} : memref<18x24x128xf32, #tpu.memory_space<vmem>>, vector<16x16x128xf32>,
    %cst_25 = arith.constant 0.000000e+00 : f32
    %20 = vector.broadcast %cst_25 : f32 to vector<256x128xf32>
    %c0_26 = arith.constant 0 : index
    %c0_27 = arith.constant 0 : index
    %c0_28 = arith.constant 0 : index
    %21 = vector.load %arg9[%c0_26, %c0_27, %c0_28] : memref<18x24x128xf32, #tpu.memory_space<vmem>>, vector<16x24x128xf32>
    %22 = vector.extract_strided_slice %21 {offsets = [0, 0, 0], sizes = [16, 16, 128], strides = [1, 1, 1]} : vector<16x24x128xf32> to vector<16x16x128xf32>
    %23 = vector.shape_cast %22 : vector<16x16x128xf32> to vector<256x128xf32>
    %24 = arith.truncf %23 : vector<256x128xf32> to vector<256x128xbf16>
    %c0_29 = arith.constant 0 : index
    %c0_30 = arith.constant 0 : index
    %c0_31 = arith.constant 0 : index
    %c0_32 = arith.constant 0 : index
    %25 = vector.load %arg4[%c0_29, %c0_30, %c0_31, %c0_32] : memref<3x3x128x128xbf16, #tpu.memory_space<vmem>>, vector<1x1x128x128xbf16>
    %26 = vector.shape_cast %25 : vector<1x1x128x128xbf16> to vector<128x128xbf16>
    %cst_33 = arith.constant dense<0.000000e+00> : vector<256x128xf32>
    %27 = tpu.matmul %24, %26, %cst_33 {dimension_numbers = #tpu.dot_dimension_numbers<[1], [0], [0], [1], [0, 0, 1, 1], [], []>} : vector<256x128xbf16>, vector<128x128xbf16>, vector<256x128xf32> -> vector<256x128xf32>
    %28 = arith.addf %20, %27 : vector<256x128xf32>
    %29 = vector.extract_strided_slice %21 {offsets = [0, 1, 0], sizes = [16, 16, 128], strides = [1, 1, 1]} : vector<16x24x128xf32> to vector<16x16x128xf32>
    %30 = vector.shape_cast %29 : vector<16x16x128xf32> to vector<256x128xf32>
    %31 = arith.truncf %30 : vector<256x128xf32> to vector<256x128xbf16>
    %c0_34 = arith.constant 0 : index
    %c1_35 = arith.constant 1 : index
    %c0_36 = arith.constant 0 : index
    %c0_37 = arith.constant 0 : index
    %32 = vector.load %arg4[%c0_34, %c1_35, %c0_36, %c0_37] : memref<3x3x128x128xbf16, #tpu.memory_space<vmem>>, vector<1x1x128x128xbf16>
    %33 = vector.shape_cast %32 : vector<1x1x128x128xbf16> to vector<128x128xbf16>
    %cst_38 = arith.constant dense<0.000000e+00> : vector<256x128xf32>
    %34 = tpu.matmul %31, %33, %cst_38 {dimension_numbers = #tpu.dot_dimension_numbers<[1], [0], [0], [1], [0, 0, 1, 1], [], []>} : vector<256x128xbf16>, vector<128x128xbf16>, vector<256x128xf32> -> vector<256x128xf32>
    %35 = arith.addf %28, %34 : vector<256x128xf32>
    %36 = vector.extract_strided_slice %21 {offsets = [0, 2, 0], sizes = [16, 16, 128], strides = [1, 1, 1]} : vector<16x24x128xf32> to vector<16x16x128xf32>
    %37 = vector.shape_cast %36 : vector<16x16x128xf32> to vector<256x128xf32>
    %38 = arith.truncf %37 : vector<256x128xf32> to vector<256x128xbf16>
    %c0_39 = arith.constant 0 : index
    %c2 = arith.constant 2 : index
    %c0_40 = arith.constant 0 : index
    %c0_41 = arith.constant 0 : index
    %39 = vector.load %arg4[%c0_39, %c2, %c0_40, %c0_41] : memref<3x3x128x128xbf16, #tpu.memory_space<vmem>>, vector<1x1x128x128xbf16>
    %40 = vector.shape_cast %39 : vector<1x1x128x128xbf16> to vector<128x128xbf16>
    %cst_42 = arith.constant dense<0.000000e+00> : vector<256x128xf32>
    %41 = tpu.matmul %38, %40, %cst_42 {dimension_numbers = #tpu.dot_dimension_numbers<[1], [0], [0], [1], [0, 0, 1, 1], [], []>} : vector<256x128xbf16>, vector<128x128xbf16>, vector<256x128xf32> -> vector<256x128xf32>
    %42 = arith.addf %35, %41 : vector<256x128xf32>
    %c1_43 = arith.constant 1 : index
    %c0_44 = arith.constant 0 : index
    %c0_45 = arith.constant 0 : index
    %43 = vector.load %arg9[%c1_43, %c0_44, %c0_45] : memref<18x24x128xf32, #tpu.memory_space<vmem>>, vector<16x24x128xf32>
    %44 = vector.extract_strided_slice %43 {offsets = [0, 0, 0], sizes = [16, 16, 128], strides = [1, 1, 1]} : vector<16x24x128xf32> to vector<16x16x128xf32>
    %45 = vector.shape_cast %44 : vector<16x16x128xf32> to vector<256x128xf32>
    %46 = arith.truncf %45 : vector<256x128xf32> to vector<256x128xbf16>
    %c1_46 = arith.constant 1 : index
    %c0_47 = arith.constant 0 : index
    %c0_48 = arith.constant 0 : index
    %c0_49 = arith.constant 0 : index
    %47 = vector.load %arg4[%c1_46, %c0_47, %c0_48, %c0_49] : memref<3x3x128x128xbf16, #tpu.memory_space<vmem>>, vector<1x1x128x128xbf16>
    %48 = vector.shape_cast %47 : vector<1x1x128x128xbf16> to vector<128x128xbf16>
    %cst_50 = arith.constant dense<0.000000e+00> : vector<256x128xf32>
    %49 = tpu.matmul %46, %48, %cst_50 {dimension_numbers = #tpu.dot_dimension_numbers<[1], [0], [0], [1], [0, 0, 1, 1], [], []>} : vector<256x128xbf16>, vector<128x128xbf16>, vector<256x128xf32> -> vector<256x128xf32>
    %50 = arith.addf %42, %49 : vector<256x128xf32>
    %51 = vector.extract_strided_slice %43 {offsets = [0, 1, 0], sizes = [16, 16, 128], strides = [1, 1, 1]} : vector<16x24x128xf32> to vector<16x16x128xf32>
    %52 = vector.shape_cast %51 : vector<16x16x128xf32> to vector<256x128xf32>
    %53 = arith.truncf %52 : vector<256x128xf32> to vector<256x128xbf16>
    %c1_51 = arith.constant 1 : index
    %c1_52 = arith.constant 1 : index
    %c0_53 = arith.constant 0 : index
    %c0_54 = arith.constant 0 : index
    %54 = vector.load %arg4[%c1_51, %c1_52, %c0_53, %c0_54] : memref<3x3x128x128xbf16, #tpu.memory_space<vmem>>, vector<1x1x128x128xbf16>
    %55 = vector.shape_cast %54 : vector<1x1x128x128xbf16> to vector<128x128xbf16>
    %cst_55 = arith.constant dense<0.000000e+00> : vector<256x128xf32>
    %56 = tpu.matmul %53, %55, %cst_55 {dimension_numbers = #tpu.dot_dimension_numbers<[1], [0], [0], [1], [0, 0, 1, 1], [], []>} : vector<256x128xbf16>, vector<128x128xbf16>, vector<256x128xf32> -> vector<256x128xf32>
    %57 = arith.addf %50, %56 : vector<256x128xf32>
    %58 = vector.extract_strided_slice %43 {offsets = [0, 2, 0], sizes = [16, 16, 128], strides = [1, 1, 1]} : vector<16x24x128xf32> to vector<16x16x128xf32>
    %59 = vector.shape_cast %58 : vector<16x16x128xf32> to vector<256x128xf32>
    %60 = arith.truncf %59 : vector<256x128xf32> to vector<256x128xbf16>
    %c1_56 = arith.constant 1 : index
    %c2_57 = arith.constant 2 : index
    %c0_58 = arith.constant 0 : index
    %c0_59 = arith.constant 0 : index
    %61 = vector.load %arg4[%c1_56, %c2_57, %c0_58, %c0_59] : memref<3x3x128x128xbf16, #tpu.memory_space<vmem>>, vector<1x1x128x128xbf16>
    %62 = vector.shape_cast %61 : vector<1x1x128x128xbf16> to vector<128x128xbf16>
    %cst_60 = arith.constant dense<0.000000e+00> : vector<256x128xf32>
    %63 = tpu.matmul %60, %62, %cst_60 {dimension_numbers = #tpu.dot_dimension_numbers<[1], [0], [0], [1], [0, 0, 1, 1], [], []>} : vector<256x128xbf16>, vector<128x128xbf16>, vector<256x128xf32> -> vector<256x128xf32>
    %64 = arith.addf %57, %63 : vector<256x128xf32>
    %c2_61 = arith.constant 2 : index
    %c0_62 = arith.constant 0 : index
    %c0_63 = arith.constant 0 : index
    %65 = vector.load %arg9[%c2_61, %c0_62, %c0_63] : memref<18x24x128xf32, #tpu.memory_space<vmem>>, vector<16x24x128xf32>
    %66 = vector.extract_strided_slice %65 {offsets = [0, 0, 0], sizes = [16, 16, 128], strides = [1, 1, 1]} : vector<16x24x128xf32> to vector<16x16x128xf32>
    %67 = vector.shape_cast %66 : vector<16x16x128xf32> to vector<256x128xf32>
    %68 = arith.truncf %67 : vector<256x128xf32> to vector<256x128xbf16>
    %c2_64 = arith.constant 2 : index
    %c0_65 = arith.constant 0 : index
    %c0_66 = arith.constant 0 : index
    %c0_67 = arith.constant 0 : index
    %69 = vector.load %arg4[%c2_64, %c0_65, %c0_66, %c0_67] : memref<3x3x128x128xbf16, #tpu.memory_space<vmem>>, vector<1x1x128x128xbf16>
    %70 = vector.shape_cast %69 : vector<1x1x128x128xbf16> to vector<128x128xbf16>
    %cst_68 = arith.constant dense<0.000000e+00> : vector<256x128xf32>
    %71 = tpu.matmul %68, %70, %cst_68 {dimension_numbers = #tpu.dot_dimension_numbers<[1], [0], [0], [1], [0, 0, 1, 1], [], []>} : vector<256x128xbf16>, vector<128x128xbf16>, vector<256x128xf32> -> vector<256x128xf32>
    %72 = arith.addf %64, %71 : vector<256x128xf32>
    %73 = vector.extract_strided_slice %65 {offsets = [0, 1, 0], sizes = [16, 16, 128], strides = [1, 1, 1]} : vector<16x24x128xf32> to vector<16x16x128xf32>
    %74 = vector.shape_cast %73 : vector<16x16x128xf32> to vector<256x128xf32>
    %75 = arith.truncf %74 : vector<256x128xf32> to vector<256x128xbf16>
    %c2_69 = arith.constant 2 : index
    %c1_70 = arith.constant 1 : index
    %c0_71 = arith.constant 0 : index
    %c0_72 = arith.constant 0 : index
    %76 = vector.load %arg4[%c2_69, %c1_70, %c0_71, %c0_72] : memref<3x3x128x128xbf16, #tpu.memory_space<vmem>>, vector<1x1x128x128xbf16>
    %77 = vector.shape_cast %76 : vector<1x1x128x128xbf16> to vector<128x128xbf16>
    %cst_73 = arith.constant dense<0.000000e+00> : vector<256x128xf32>
    %78 = tpu.matmul %75, %77, %cst_73 {dimension_numbers = #tpu.dot_dimension_numbers<[1], [0], [0], [1], [0, 0, 1, 1], [], []>} : vector<256x128xbf16>, vector<128x128xbf16>, vector<256x128xf32> -> vector<256x128xf32>
    %79 = arith.addf %72, %78 : vector<256x128xf32>
    %80 = vector.extract_strided_slice %65 {offsets = [0, 2, 0], sizes = [16, 16, 128], strides = [1, 1, 1]} : vector<16x24x128xf32> to vector<16x16x128xf32>
    %81 = vector.shape_cast %80 : vector<16x16x128xf32> to vector<256x128xf32>
    %82 = arith.truncf %81 : vector<256x128xf32> to vector<256x128xbf16>
    %c2_74 = arith.constant 2 : index
    %c2_75 = arith.constant 2 : index
    %c0_76 = arith.constant 0 : index
    %c0_77 = arith.constant 0 : index
    %83 = vector.load %arg4[%c2_74, %c2_75, %c0_76, %c0_77] : memref<3x3x128x128xbf16, #tpu.memory_space<vmem>>, vector<1x1x128x128xbf16>
    %84 = vector.shape_cast %83 : vector<1x1x128x128xbf16> to vector<128x128xbf16>
    %cst_78 = arith.constant dense<0.000000e+00> : vector<256x128xf32>
    %85 = tpu.matmul %82, %84, %cst_78 {dimension_numbers = #tpu.dot_dimension_numbers<[1], [0], [0], [1], [0, 0, 1, 1], [], []>} : vector<256x128xbf16>, vector<128x128xbf16>, vector<256x128xf32> -> vector<256x128xf32>
    %86 = arith.addf %79, %85 : vector<256x128xf32>
    %c0_79 = arith.constant 0 : index
    %c0_80 = arith.constant 0 : index
    %87 = vector.load %arg5[%c0_79, %c0_80] : memref<1x128xf32, #tpu.memory_space<vmem>>, vector<1x128xf32>
    %88 = vector.broadcast %87 : vector<1x128xf32> to vector<256x128xf32>
    %89 = arith.addf %86, %88 : vector<256x128xf32>
    %cst_81 = arith.constant 0.000000e+00 : f32
    %90 = vector.broadcast %cst_81 : f32 to vector<256x128xf32>
    %91 = arith.maximumf %89, %90 : vector<256x128xf32>
    %92 = arith.truncf %91 : vector<256x128xf32> to vector<256x128xbf16>
    %c0_82 = arith.constant 0 : index
    %c0_83 = arith.constant 0 : index
    %93 = vector.load %arg6[%c0_82, %c0_83] : memref<128x128xbf16, #tpu.memory_space<vmem>>, vector<128x128xbf16>
    %cst_84 = arith.constant dense<0.000000e+00> : vector<256x128xf32>
    %94 = tpu.matmul %92, %93, %cst_84 {dimension_numbers = #tpu.dot_dimension_numbers<[1], [0], [0], [1], [0, 0, 1, 1], [], []>} : vector<256x128xbf16>, vector<128x128xbf16>, vector<256x128xf32> -> vector<256x128xf32>
    %c0_85 = arith.constant 0 : index
    %c0_86 = arith.constant 0 : index
    %95 = vector.load %arg7[%c0_85, %c0_86] : memref<1x128xf32, #tpu.memory_space<vmem>>, vector<1x128xf32>
    %96 = vector.broadcast %95 : vector<1x128xf32> to vector<256x128xf32>
    %97 = arith.addf %94, %96 : vector<256x128xf32>
    %98 = arith.extf %10 : vector<256x128xbf16> to vector<256x128xf32>
    %99 = arith.addf %97, %98 : vector<256x128xf32>
    %cst_87 = arith.constant 0.000000e+00 : f32
    %100 = vector.broadcast %cst_87 : f32 to vector<256x128xf32>
    %101 = arith.maximumf %99, %100 : vector<256x128xf32>
    %cst_88 = arith.constant dense<0xFF800000> : vector<128xf32>
    %102 = vector.multi_reduction <maximumf>, %101, %cst_88 [0] : vector<256x128xf32> to vector<128xf32>
    %103 = vector.shape_cast %102 : vector<128xf32> to vector<1x128xf32>
    %cst_89 = arith.constant 5.500000e-01 : f32
    %104 = vector.broadcast %cst_89 : f32 to vector<1x128xf32>
    %105 = arith.mulf %103, %104 : vector<1x128xf32>
    %106 = vector.broadcast %105 : vector<1x128xf32> to vector<256x128xf32>
    %107 = arith.minimumf %101, %106 : vector<256x128xf32>
    %108 = vector.shape_cast %107 : vector<256x128xf32> to vector<16x16x128xf32>
    %c0_90 = arith.constant 0 : index
    %c0_91 = arith.constant 0 : index
    %c0_92 = arith.constant 0 : index
    %c0_93 = arith.constant 0 : index
    %109 = vector.load %arg8[%c0_90, %c0_91, %c0_92, %c0_93] : memref<1x16x16x128xf32, #tpu.memory_space<vmem>>, vector<1x16x16x128xf32>
    %110 = vector.shape_cast %109 : vector<1x16x16x128xf32> to vector<16x16x128xf32>
    %111 = vector.shape_cast %108 : vector<16x16x128xf32> to vector<1x16x16x128xf32>
    tpu.vector_store %arg8[%c0_90, %c0_91, %c0_92, %c0_93], %111 {strides = array<i32>} : memref<1x16x16x128xf32, #tpu.memory_space<vmem>>, vector<1x16x16x128xf32>,
    return
  }
  func.func @transform_0(%arg0: i32) -> (i32, i32, i32, i32) {
    %c0_i32 = arith.constant 0 : i32
    %c0_i32_0 = arith.constant 0 : i32
    %c0_i32_1 = arith.constant 0 : i32
    %c0_i32_2 = arith.constant 0 : i32
    return %arg0, %c0_i32, %c0_i32_0, %c0_i32_1 : i32, i32, i32, i32
  }
  func.func @transform_1(%arg0: i32) -> (i32, i32) {
    %c0_i32 = arith.constant 0 : i32
    %c0_i32_0 = arith.constant 0 : i32
    %c0_i32_1 = arith.constant 0 : i32
    return %c0_i32, %c0_i32_0 : i32, i32
  }
  func.func @transform_2(%arg0: i32) -> (i32, i32) {
    %c0_i32 = arith.constant 0 : i32
    %c0_i32_0 = arith.constant 0 : i32
    %c0_i32_1 = arith.constant 0 : i32
    return %c0_i32, %c0_i32_0 : i32, i32
  }
  func.func @transform_3(%arg0: i32) -> (i32, i32, i32, i32) {
    %c0_i32 = arith.constant 0 : i32
    %c0_i32_0 = arith.constant 0 : i32
    %c0_i32_1 = arith.constant 0 : i32
    %c0_i32_2 = arith.constant 0 : i32
    %c0_i32_3 = arith.constant 0 : i32
    return %c0_i32, %c0_i32_0, %c0_i32_1, %c0_i32_2 : i32, i32, i32, i32
  }
  func.func @transform_4(%arg0: i32) -> (i32, i32) {
    %c0_i32 = arith.constant 0 : i32
    %c0_i32_0 = arith.constant 0 : i32
    %c0_i32_1 = arith.constant 0 : i32
    return %c0_i32, %c0_i32_0 : i32, i32
  }
  func.func @transform_5(%arg0: i32) -> (i32, i32) {
    %c0_i32 = arith.constant 0 : i32
    %c0_i32_0 = arith.constant 0 : i32
    %c0_i32_1 = arith.constant 0 : i32
    return %c0_i32, %c0_i32_0 : i32, i32
  }
  func.func @transform_6(%arg0: i32) -> (i32, i32) {
    %c0_i32 = arith.constant 0 : i32
    %c0_i32_0 = arith.constant 0 : i32
    %c0_i32_1 = arith.constant 0 : i32
    return %c0_i32, %c0_i32_0 : i32, i32
  }
  func.func @transform_7(%arg0: i32) -> (i32, i32, i32, i32) {
    %c0_i32 = arith.constant 0 : i32
    %c0_i32_0 = arith.constant 0 : i32
    %c0_i32_1 = arith.constant 0 : i32
    %c0_i32_2 = arith.constant 0 : i32
    return %arg0, %c0_i32, %c0_i32_0, %c0_i32_1 : i32, i32, i32, i32
  }
}

</mosaic_0001>

<llo_original>
// kernel: tpu_custom_call.1
$region0: #{tpu_custom_call.1}
  #allocation0 [shape = 'u32[]', space=smem, size = 0x4, offset = 0x4, fixed_abs, tag = 'smem constant byte address 0x4 - core index']
  #allocation1 [shape = 'u32[144,128]{1,0:T(1,128)}', space=vmem, size = 0x12000, scoped, tag = 'internal scratch']
  #allocation2 [shape = 'f32[18,24,128]{2,1,0:T(8,128)}', space=vmem, size = 0x36000, scoped, tag = 'scratch operand']
  %s0 = inlined_call_operand.hbm [shape: bf16[2,16,16,128], index: 0, kind: input, shape index: {}]
  %s1 = inlined_call_operand.hbm [shape: bf16[128,128], index: 1, kind: input, shape index: {}]
  %s2 = inlined_call_operand.vmem [shape: f32[1,128], index: 2, kind: input, shape index: {}]
  %s3 = inlined_call_operand.hbm [shape: bf16[3,3,128,128], index: 3, kind: input, shape index: {}]
  %s4 = inlined_call_operand.vmem [shape: f32[1,128], index: 4, kind: input, shape index: {}]
  %s5 = inlined_call_operand.hbm [shape: bf16[128,128], index: 5, kind: input, shape index: {}]
  %s6 = inlined_call_operand.vmem [shape: f32[1,128], index: 6, kind: input, shape index: {}]
  %s7 = inlined_call_operand.hbm [shape: f32[2,16,16,128], index: 7, kind: output, shape index: {}]
  %s8 = sld [smem:[#allocation0]]
  $region77: #{tpu_custom_call.1} parent=0
    _
  %s10 = ssub.s32 1, %s8
  %s11 = scalar_select 0, %s10, %s8
  $region1: #{tpu_custom_call.1} parent=0
    #allocation3 [shape = 'u8[131072]{0}', space=vmem, size = 0x20000, scoped, tag = 'input window, operand 0']
    #allocation4 [shape = 's32[2]{0}', space=sflag, size = 0x8, scoped, tag = 'scoped memory for tpu_custom_call.1']
    #allocation5 [shape = 's32[2]{0}', space=sflag, size = 0x8, scoped, tag = 'scoped memory for tpu_custom_call.1']
    #allocation6 [shape = 'u8[32768]{0}', space=vmem, size = 0x8000, scoped, tag = 'input window, operand 1, single buffered']
    #allocation7 [shape = 's32[1]{0}', space=sflag, size = 0x4, scoped, tag = 'scoped memory for tpu_custom_call.1']
    #allocation8 [shape = 'u8[294912]{0}', space=vmem, size = 0x48000, scoped, tag = 'input window, operand 3, single buffered']
    #allocation9 [shape = 'u8[32768]{0}', space=vmem, size = 0x8000, scoped, tag = 'input window, operand 5, single buffered']
    #allocation10 [shape = 's32[1]{0}', space=sflag, size = 0x4, scoped, tag = 'scoped memory for tpu_custom_call.1']
    #allocation11 [shape = 'u8[262144]{0}', space=vmem, size = 0x40000, scoped, tag = 'output window, operand 0']
    %12 = vsyncpa [#allocation4], 0
    %s13 = scalar_lea.sflag [#allocation4], 1
    %14 = vsyncpa %s13, 0
    %15 = vsyncpa [#allocation7], 0
    %16 = vsyncpa [#allocation10], 0
    %17 = vsyncpa [#allocation5], 0
    %s18 = scalar_lea.sflag [#allocation5], 1
    %19 = vsyncpa %s18, 0
    loop: start=0, step=1, limit=4
    $region2: #{tpu_custom_call.1} parent=1 // loop_pre_header
      _
    $region3: #{tpu_custom_call.1} parent=1 // loop_header
      %s21 = sphi 0, %s25
      %p22 = scmp.ge.s32.totalorder %s21, 4
      %s31 = sphi 0, %s33
      %s34 = sphi 0, %s31
      %s35 = sphi 0, %s34
      %s51 = sphi 0, %s35
      %s55 = sphi 0, %s55
      %s57 = sphi 0, %s55
      %s58 = sphi 0, %s57
      %s72 = sphi 0, %s58
      %s76 = sphi 0, %s76
      %s78 = sphi 0, %s76
      %s79 = sphi 0, %s78
      %s93 = sphi 0, %s79
      %s97 = sphi 0, %s97
      %s99 = sphi 0, %s97
      %s100 = sphi 0, %s99
      %s114 = sphi 0, %s100
      %s118 = sphi 0, %s118
      %s120 = sphi 0, %s118
      %s121 = sphi 0, %s120
      %s135 = sphi 0, %s121
      %s139 = sphi 0, %s139
      %s141 = sphi 0, %s139
      %s142 = sphi 0, %s141
      %s156 = sphi 0, %s142
      %s160 = sphi 0, %s160
      %s162 = sphi 0, %s160
      %s163 = sphi 0, %s162
      %s177 = sphi 0, %s163
      %s183 = sphi 0, %s185
      %s186 = sphi 0, %s183
      %s187 = sphi 0, %s186
      %s203 = sphi 0, %s187
    $region4: #{tpu_custom_call.1} parent=1 // loop_header_branch
      %24 = sbr.rel (%p22) target = $region8
    $region5: #{tpu_custom_call.1} parent=1 // loop_body
      %s26 = ssub.s32 %s21, 1
      %s27 = ssub.s32 %s21, 2
      %s28 = sadd.s32 %s21, 1
      %s29 = ssub.s32 %s21, %s28
      %p30 = scmp.eq.s32.totalorder %s29, 0
      %s32 = sadd.s32 %s31, 1
      %s33 = scalar_select %p30, %s31, %s32
      %p36 = pneg %p30
      %p37 = scmp.eq.s32.totalorder %s21, 1
      %p38 = por %p36, %p37
      %p39 = scmp.ne.s32.totalorder %s31, %s34
      %p40 = scmp.eq.s32.totalorder %s21, 0
      %p41 = por %p39, %p40
      %p42 = scmp.ne.s32.totalorder %s31, %s34
      %p43 = scmp.eq.s32.totalorder %s26, 1
      %p44 = por %p42, %p43
      %p45 = scmp.ne.s32.totalorder %s34, %s35
      %p46 = scmp.eq.s32.totalorder %s26, 0
      %p47 = por %p45, %p46
      %p48 = scmp.ne.s32.totalorder %s34, %s35
      %p49 = scmp.eq.s32.totalorder %s27, 1
      %p50 = por %p48, %p49
      %p52 = scmp.ne.s32.totalorder %s35, %s51
      %p53 = scmp.eq.s32.totalorder %s27, 0
      %p54 = por %p52, %p53
      %s56 = sadd.s32 %s55, 1
      %p59 = scmp.eq.s32.totalorder %s21, 1
      %p60 = scmp.ne.s32.totalorder %s55, %s57
      %p61 = scmp.eq.s32.totalorder %s21, 0
      %p62 = por %p60, %p61
      %p63 = scmp.ne.s32.totalorder %s55, %s57
      %p64 = scmp.eq.s32.totalorder %s26, 1
      %p65 = por %p63, %p64
      %p66 = scmp.ne.s32.totalorder %s57, %s58
      %p67 = scmp.eq.s32.totalorder %s26, 0
      %p68 = por %p66, %p67
      %p69 = scmp.ne.s32.totalorder %s57, %s58
      %p70 = scmp.eq.s32.totalorder %s27, 1
      %p71 = por %p69, %p70
      %p73 = scmp.ne.s32.totalorder %s58, %s72
      %p74 = scmp.eq.s32.totalorder %s27, 0
      %p75 = por %p73, %p74
      %s77 = sadd.s32 %s76, 1
      %p80 = scmp.eq.s32.totalorder %s21, 1
      %p81 = scmp.ne.s32.totalorder %s76, %s78
      %p82 = scmp.eq.s32.totalorder %s21, 0
      %p83 = por %p81, %p82
      %p84 = scmp.ne.s32.totalorder %s76, %s78
      %p85 = scmp.eq.s32.totalorder %s26, 1
      %p86 = por %p84, %p85
      %p87 = scmp.ne.s32.totalorder %s78, %s79
      %p88 = scmp.eq.s32.totalorder %s26, 0
      %p89 = por %p87, %p88
      %p90 = scmp.ne.s32.totalorder %s78, %s79
      %p91 = scmp.eq.s32.totalorder %s27, 1
      %p92 = por %p90, %p91
      %p94 = scmp.ne.s32.totalorder %s79, %s93
      %p95 = scmp.eq.s32.totalorder %s27, 0
      %p96 = por %p94, %p95
      %s98 = sadd.s32 %s97, 1
      %p101 = scmp.eq.s32.totalorder %s21, 1
      %p102 = scmp.ne.s32.totalorder %s97, %s99
      %p103 = scmp.eq.s32.totalorder %s21, 0
      %p104 = por %p102, %p103
      %p105 = scmp.ne.s32.totalorder %s97, %s99
      %p106 = scmp.eq.s32.totalorder %s26, 1
      %p107 = por %p105, %p106
      %p108 = scmp.ne.s32.totalorder %s99, %s100
      %p109 = scmp.eq.s32.totalorder %s26, 0
      %p110 = por %p108, %p109
      %p111 = scmp.ne.s32.totalorder %s99, %s100
      %p112 = scmp.eq.s32.totalorder %s27, 1
      %p113 = por %p111, %p112
      %p115 = scmp.ne.s32.totalorder %s100, %s114
      %p116 = scmp.eq.s32.totalorder %s27, 0
      %p117 = por %p115, %p116
      %s119 = sadd.s32 %s118, 1
      %p122 = scmp.eq.s32.totalorder %s21, 1
      %p123 = scmp.ne.s32.totalorder %s118, %s120
      %p124 = scmp.eq.s32.totalorder %s21, 0
      %p125 = por %p123, %p124
      %p126 = scmp.ne.s32.totalorder %s118, %s120
      %p127 = scmp.eq.s32.totalorder %s26, 1
      %p128 = por %p126, %p127
      %p129 = scmp.ne.s32.totalorder %s120, %s121
      %p130 = scmp.eq.s32.totalorder %s26, 0
      %p131 = por %p129, %p130
      %p132 = scmp.ne.s32.totalorder %s120, %s121
      %p133 = scmp.eq.s32.totalorder %s27, 1
      %p134 = por %p132, %p133
      %p136 = scmp.ne.s32.totalorder %s121, %s135
      %p137 = scmp.eq.s32.totalorder %s27, 0
      %p138 = por %p136, %p137
      %s140 = sadd.s32 %s139, 1
      %p143 = scmp.eq.s32.totalorder %s21, 1
      %p144 = scmp.ne.s32.totalorder %s139, %s141
      %p145 = scmp.eq.s32.totalorder %s21, 0
      %p146 = por %p144, %p145
      %p147 = scmp.ne.s32.totalorder %s139, %s141
      %p148 = scmp.eq.s32.totalorder %s26, 1
      %p149 = por %p147, %p148
      %p150 = scmp.ne.s32.totalorder %s141, %s142
      %p151 = scmp.eq.s32.totalorder %s26, 0
      %p152 = por %p150, %p151
      %p153 = scmp.ne.s32.totalorder %s141, %s142
      %p154 = scmp.eq.s32.totalorder %s27, 1
      %p155 = por %p153, %p154
      %p157 = scmp.ne.s32.totalorder %s142, %s156
      %p158 = scmp.eq.s32.totalorder %s27, 0
      %p159 = por %p157, %p158
      %s161 = sadd.s32 %s160, 1
      %p164 = scmp.eq.s32.totalorder %s21, 1
      %p165 = scmp.ne.s32.totalorder %s160, %s162
      %p166 = scmp.eq.s32.totalorder %s21, 0
      %p167 = por %p165, %p166
      %p168 = scmp.ne.s32.totalorder %s160, %s162
      %p169 = scmp.eq.s32.totalorder %s26, 1
      %p170 = por %p168, %p169
      %p171 = scmp.ne.s32.totalorder %s162, %s163
      %p172 = scmp.eq.s32.totalorder %s26, 0
      %p173 = por %p171, %p172
      %p174 = scmp.ne.s32.totalorder %s162, %s163
      %p175 = scmp.eq.s32.totalorder %s27, 1
      %p176 = por %p174, %p175
      %p178 = scmp.ne.s32.totalorder %s163, %s177
      %p179 = scmp.eq.s32.totalorder %s27, 0
      %p180 = por %p178, %p179
      %s181 = ssub.s32 %s21, %s28
      %p182 = scmp.eq.s32.totalorder %s181, 0
      %s184 = sadd.s32 %s183, 1
      %s185 = scalar_select %p182, %s183, %s184
      %p188 = pneg %p182
      %p189 = scmp.eq.s32.totalorder %s21, 1
      %p190 = por %p188, %p189
      %p191 = scmp.ne.s32.totalorder %s183, %s186
      %p192 = scmp.eq.s32.totalorder %s21, 0
      %p193 = por %p191, %p192
      %p194 = scmp.ne.s32.totalorder %s183, %s186
      %p195 = scmp.eq.s32.totalorder %s26, 1
      %p196 = por %p194, %p195
      %p197 = scmp.ne.s32.totalorder %s186, %s187
      %p198 = scmp.eq.s32.totalorder %s26, 0
      %p199 = por %p197, %p198
      %p200 = scmp.ne.s32.totalorder %s186, %s187
      %p201 = scmp.eq.s32.totalorder %s27, 1
      %p202 = por %p200, %p201
      %p204 = scmp.ne.s32.totalorder %s187, %s203
      %p205 = scmp.eq.s32.totalorder %s27, 0
      %p206 = por %p204, %p205
      %p207 = scmp.le.s32.totalorder 1, %s21
      %p208 = scmp.lt.s32.totalorder %s21, 3
      %p209 = pnand %p207, %p208
      %p210 = pneg %p209
      // Predicated region
      $region9: #{tpu_custom_call.1} parent=5 // pred_check
        _
      $region10: #{tpu_custom_call.1} parent=5 // pred_check_branch
        %212 = sbr.rel (%p209) target = $region12
      $region11: #{tpu_custom_call.1} parent=5 // pred_region
        %s213 = ssub.s32 %s21, 1
        // Predicated region
        $region13: #{tpu_custom_call.1} parent=11 // pred_check
          %p214 = pneg %p68
        $region14: #{tpu_custom_call.1} parent=11 // pred_check_branch
          %216 = sbr.rel (%p214) target = $region16
        $region15: #{tpu_custom_call.1} parent=11 // pred_region
          %s218 = ssub.s32 1024, 1024
          %219 = vsyncadd [#allocation7], %s218
          %s220 = sshll.u32 [#allocation6], 4
          %s221 = int_to_ptr.vmem [resolvable:$true] %s220
          %226 = dma.hbm_to_vmem [thread:$0]  %s1, 1024, %s221, [#allocation7], 64, 64, 4
        $region16: #{tpu_custom_call.1} parent=11 // pred_fallthru
          _
        // Predicated region
        $region17: #{tpu_custom_call.1} parent=11 // pred_check
          %p227 = pneg %p89
        $region18: #{tpu_custom_call.1} parent=11 // pred_check_branch
          %229 = sbr.rel (%p227) target = $region20
        $region19: #{tpu_custom_call.1} parent=11 // pred_region
          _
        $region20: #{tpu_custom_call.1} parent=11 // pred_fallthru
          _
        // Predicated region
        $region21: #{tpu_custom_call.1} parent=11 // pred_check
          %p230 = pneg %p110
        $region22: #{tpu_custom_call.1} parent=11 // pred_check_branch
          %232 = sbr.rel (%p230) target = $region24
        $region23: #{tpu_custom_call.1} parent=11 // pred_region
          %s234 = ssub.s32 9216, 9216
          %235 = vsyncadd [#allocation7], %s234
          %s236 = sshll.u32 [#allocation8], 4
          %s237 = int_to_ptr.vmem [resolvable:$true] %s236
          %242 = dma.hbm_to_vmem [thread:$0]  %s3, 9216, %s237, [#allocation7], 64, 64, 4
        $region24: #{tpu_custom_call.1} parent=11 // pred_fallthru
          _
        // Predicated region
        $region25: #{tpu_custom_call.1} parent=11 // pred_check
          %p243 = pneg %p131
        $region26: #{tpu_custom_call.1} parent=11 // pred_check_branch
          %245 = sbr.rel (%p243) target = $region28
        $region27: #{tpu_custom_call.1} parent=11 // pred_region
          _
        $region28: #{tpu_custom_call.1} parent=11 // pred_fallthru
          _
        // Predicated region
        $region29: #{tpu_custom_call.1} parent=11 // pred_check
          %p246 = pneg %p152
        $region30: #{tpu_custom_call.1} parent=11 // pred_check_branch
          %248 = sbr.rel (%p246) target = $region32
        $region31: #{tpu_custom_call.1} parent=11 // pred_region
          %s250 = ssub.s32 1024, 1024
          %251 = vsyncadd [#allocation10], %s250
          %s252 = sshll.u32 [#allocation9], 4
          %s253 = int_to_ptr.vmem [resolvable:$true] %s252
          %258 = dma.hbm_to_vmem [thread:$0]  %s5, 1024, %s253, [#allocation10], 64, 64, 4
        $region32: #{tpu_custom_call.1} parent=11 // pred_fallthru
          _
        // Predicated region
        $region33: #{tpu_custom_call.1} parent=11 // pred_check
          %p259 = pneg %p173
        $region34: #{tpu_custom_call.1} parent=11 // pred_check_branch
          %261 = sbr.rel (%p259) target = $region36
        $region35: #{tpu_custom_call.1} parent=11 // pred_region
          _
        $region36: #{tpu_custom_call.1} parent=11 // pred_fallthru
          _
      $region12: #{tpu_custom_call.1} parent=5 // pred_fallthru
        _
      %p262 = scmp.lt.s32.totalorder %s21, 2
      // Predicated region
      $region37: #{tpu_custom_call.1} parent=5 // pred_check
        %p263 = pneg %p262
      $region38: #{tpu_custom_call.1} parent=5 // pred_check_branch
        %265 = sbr.rel (%p263) target = $region40
      $region39: #{tpu_custom_call.1} parent=5 // pred_region
        // Predicated region
        $region41: #{tpu_custom_call.1} parent=39 // pred_check
          %p266 = pneg %p41
        $region42: #{tpu_custom_call.1} parent=39 // pred_check_branch
          %268 = sbr.rel (%p266) target = $region44
        $region43: #{tpu_custom_call.1} parent=39 // pred_region
          %s269 = sand.u32 %s31, 1
          %s270 = scalar_lea.sflag [#allocation4], %s269
          %s271 = sand.u32 %s31, 1
          %s272 = smul.addr %s271, 128
          %s273 = scalar_lea.vmem [#allocation3], %s272
          %s275 = ssub.s32 2048, 2048
          %276 = vsyncadd %s270, %s275
          %s277 = smul.addr %s21, 32
          %s278 = smul.addr %s277, 64
          %s279 = scalar_lea.hbm %s0, %s278
          %s280 = sshll.u32 %s273, 4
          %s281 = int_to_ptr.vmem [resolvable:$true] %s280
          %286 = dma.hbm_to_vmem [thread:$0]  %s279, 2048, %s281, %s270, 64, 64, 4
        $region44: #{tpu_custom_call.1} parent=39 // pred_fallthru
          _
      $region40: #{tpu_custom_call.1} parent=5 // pred_fallthru
        _
      %p287 = scmp.le.s32.totalorder 1, %s21
      %p288 = scmp.lt.s32.totalorder %s21, 3
      %p289 = pnand %p287, %p288
      %p290 = pneg %p289
      // Predicated region
      $region45: #{tpu_custom_call.1} parent=5 // pred_check
        _
      $region46: #{tpu_custom_call.1} parent=5 // pred_check_branch
        %292 = sbr.rel (%p289) target = $region48
      $region47: #{tpu_custom_call.1} parent=5 // pred_region
        %s293 = ssub.s32 %s21, 1
        %s294 = sand.u32 %s34, 1
        %s295 = scalar_lea.sflag [#allocation4], %s294
        %s296 = sand.u32 %s34, 1
        %s297 = smul.addr %s296, 128
        %s298 = scalar_lea.vmem [#allocation3], %s297
        // Predicated region
        $region49: #{tpu_custom_call.1} parent=47 // pred_check
          %p299 = pneg %p47
        $region50: #{tpu_custom_call.1} parent=47 // pred_check_branch
          %301 = sbr.rel (%p299) target = $region52
        $region51: #{tpu_custom_call.1} parent=47 // pred_region
          %302 = dma.done %s295, 2048
        $region52: #{tpu_custom_call.1} parent=47 // pred_fallthru
          _
        // Predicated region
        $region53: #{tpu_custom_call.1} parent=47 // pred_check
          %p303 = pneg %p68
        $region54: #{tpu_custom_call.1} parent=47 // pred_check_branch
          %305 = sbr.rel (%p303) target = $region56
        $region55: #{tpu_custom_call.1} parent=47 // pred_region
          %306 = dma.done [#allocation7], 1024
        $region56: #{tpu_custom_call.1} parent=47 // pred_fallthru
          _
        // Predicated region
        $region57: #{tpu_custom_call.1} parent=47 // pred_check
          %p307 = pneg %p110
        $region58: #{tpu_custom_call.1} parent=47 // pred_check_branch
          %309 = sbr.rel (%p307) target = $region60
        $region59: #{tpu_custom_call.1} parent=47 // pred_region
          %310 = dma.done [#allocation7], 9216
        $region60: #{tpu_custom_call.1} parent=47 // pred_fallthru
          _
        // Predicated region
        $region61: #{tpu_custom_call.1} parent=47 // pred_check
          %p311 = pneg %p152
        $region62: #{tpu_custom_call.1} parent=47 // pred_check_branch
          %313 = sbr.rel (%p311) target = $region64
        $region63: #{tpu_custom_call.1} parent=47 // pred_region
          %314 = dma.done [#allocation10], 1024
        $region64: #{tpu_custom_call.1} parent=47 // pred_fallthru
          _
        %s315 = sand.u32 %s34, 1
        %s316 = scalar_lea.sflag [#allocation4], %s315
        %s317 = sand.u32 %s34, 1
        %s318 = smul.addr %s317, 128
        %s319 = scalar_lea.vmem [#allocation3], %s318
        %p320 = pneg %p47
        %p321 = pneg %p44
        %p322 = pneg %p68
        %p323 = pneg %p65
        %p324 = pneg %p89
        %p325 = pneg %p86
        %p326 = pneg %p110
        %p327 = pneg %p107
        %p328 = pneg %p131
        %p329 = pneg %p128
        %p330 = pneg %p152
        %p331 = pneg %p149
        %p332 = pneg %p173
        %p333 = pneg %p170
        %p334 = pneg %p199
        %p335 = pneg %p196
        %s336 = sand.u32 %s186, 1
        %s337 = scalar_lea.sflag [#allocation5], %s336
        %s338 = sand.u32 %s186, 1
        %s339 = smul.addr %s338, 256
        %s340 = scalar_lea.vmem [#allocation11], %s339
        %342 = vst [vmem:[#allocation2] sm:$0xff] 0.0
        %343 = vst [vmem:[#allocation2 + $0x8] sm:$0xff] 0.0
        %344 = vst [vmem:[#allocation2 + $0x10] sm:$0xff] 0.0
        %s345 = scalar_lea.vmem [#allocation2], 408
        %346 = vst [vmem:[%s345] sm:$0xff] 0.0
        %347 = vst [vmem:[%s345 + $0x8] sm:$0xff] 0.0
        %348 = vst [vmem:[%s345 + $0x10] sm:$0xff] 0.0
        %s349 = scalar_lea.vmem [#allocation2], 24
        %350 = vst [vmem:[%s349] sm:$0x1] 0.0
        %351 = vst [vmem:[%s349 + $0x18] sm:$0x1] 0.0
        %352 = vst [vmem:[%s349 + $0x30] sm:$0x1] 0.0
        %353 = vst [vmem:[%s349 + $0x48] sm:$0x1] 0.0
        %354 = vst [vmem:[%s349 + $0x60] sm:$0x1] 0.0
        %355 = vst [vmem:[%s349 + $0x78] sm:$0x1] 0.0
        %356 = vst [vmem:[%s349 + $0x90] sm:$0x1] 0.0
        %357 = vst [vmem:[%s349 + $0xa8] sm:$0x1] 0.0
        %358 = vst [vmem:[%s349 + $0xc0] sm:$0x1] 0.0
        %359 = vst [vmem:[%s349 + $0xd8] sm:$0x1] 0.0
        %360 = vst [vmem:[%s349 + $0xf0] sm:$0x1] 0.0
        %361 = vst [vmem:[%s349 + $0x108] sm:$0x1] 0.0
        %362 = vst [vmem:[%s349 + $0x120] sm:$0x1] 0.0
        %363 = vst [vmem:[%s349 + $0x138] sm:$0x1] 0.0
        %364 = vst [vmem:[%s349 + $0x150] sm:$0x1] 0.0
        %365 = vst [vmem:[%s349 + $0x168] sm:$0x1] 0.0
        %366 = vst [vmem:[%s349 + $0x11] sm:$0x7f] 0.0
        %367 = vst [vmem:[%s349 + $0x29] sm:$0x7f] 0.0
        %368 = vst [vmem:[%s349 + $0x41] sm:$0x7f] 0.0
        %369 = vst [vmem:[%s349 + $0x59] sm:$0x7f] 0.0
        %370 = vst [vmem:[%s349 + $0x71] sm:$0x7f] 0.0
        %371 = vst [vmem:[%s349 + $0x89] sm:$0x7f] 0.0
        %372 = vst [vmem:[%s349 + $0xa1] sm:$0x7f] 0.0
        %373 = vst [vmem:[%s349 + $0xb9] sm:$0x7f] 0.0
        %374 = vst [vmem:[%s349 + $0xd1] sm:$0x7f] 0.0
        %375 = vst [vmem:[%s349 + $0xe9] sm:$0x7f] 0.0
        %376 = vst [vmem:[%s349 + $0x101] sm:$0x7f] 0.0
        %377 = vst [vmem:[%s349 + $0x119] sm:$0x7f] 0.0
        %378 = vst [vmem:[%s349 + $0x131] sm:$0x7f] 0.0
        %379 = vst [vmem:[%s349 + $0x149] sm:$0x7f] 0.0
        %380 = vst [vmem:[%s349 + $0x161] sm:$0x7f] 0.0
        %381 = vst [vmem:[%s349 + $0x179] sm:$0x7f] 0.0
        %v382 = vld [vmem:[%s298] sm:$0xf]
        %v383 = vld [vmem:[%s298 + $0x4] sm:$0xf]
        %v384 = vld [vmem:[%s298 + $0x8] sm:$0xf]
        %v385 = vld [vmem:[%s298 + $0xc] sm:$0xf]
        %v386 = vld [vmem:[%s298 + $0x10] sm:$0xf]
        %v387 = vld [vmem:[%s298 + $0x14] sm:$0xf]
        %v388 = vld [vmem:[%s298 + $0x18] sm:$0xf]
        %v389 = vld [vmem:[%s298 + $0x1c] sm:$0xf]
        %v390 = vld [vmem:[%s298 + $0x20] sm:$0xf]
        %v391 = vld [vmem:[%s298 + $0x24] sm:$0xf]
        %v392 = vld [vmem:[%s298 + $0x28] sm:$0xf]
        %v393 = vld [vmem:[%s298 + $0x2c] sm:$0xf]
        %v394 = vld [vmem:[%s298 + $0x30] sm:$0xf]
        %v395 = vld [vmem:[%s298 + $0x34] sm:$0xf]
        %v396 = vld [vmem:[%s298 + $0x38] sm:$0xf]
        %v397 = vld [vmem:[%s298 + $0x3c] sm:$0xf]
        %v398 = vld [vmem:[%s298 + $0x40] sm:$0xf]
        %v399 = vld [vmem:[%s298 + $0x44] sm:$0xf]
        %v400 = vld [vmem:[%s298 + $0x48] sm:$0xf]
        %v401 = vld [vmem:[%s298 + $0x4c] sm:$0xf]
        %v402 = vld [vmem:[%s298 + $0x50] sm:$0xf]
        %v403 = vld [vmem:[%s298 + $0x54] sm:$0xf]
        %v404 = vld [vmem:[%s298 + $0x58] sm:$0xf]
        %v405 = vld [vmem:[%s298 + $0x5c] sm:$0xf]
        %v406 = vld [vmem:[%s298 + $0x60] sm:$0xf]
        %v407 = vld [vmem:[%s298 + $0x64] sm:$0xf]
        %v408 = vld [vmem:[%s298 + $0x68] sm:$0xf]
        %v409 = vld [vmem:[%s298 + $0x6c] sm:$0xf]
        %v410 = vld [vmem:[%s298 + $0x70] sm:$0xf]
        %v411 = vld [vmem:[%s298 + $0x74] sm:$0xf]
        %v412 = vld [vmem:[%s298 + $0x78] sm:$0xf]
        %v413 = vld [vmem:[%s298 + $0x7c] sm:$0xf]
        %v414 = vld [vmem:[#allocation6] sm:$0xf]
        %v415 = vld [vmem:[#allocation6 + $0x4] sm:$0xf]
        %v416 = vld [vmem:[#allocation6 + $0x8] sm:$0xf]
        %v417 = vld [vmem:[#allocation6 + $0xc] sm:$0xf]
        %v418 = vld [vmem:[#allocation6 + $0x10] sm:$0xf]
        %v419 = vld [vmem:[#allocation6 + $0x14] sm:$0xf]
        %v420 = vld [vmem:[#allocation6 + $0x18] sm:$0xf]
        %v421 = vld [vmem:[#allocation6 + $0x1c] sm:$0xf]
        %v422 = vld [vmem:[#allocation6 + $0x20] sm:$0xf]
        %v423 = vld [vmem:[#allocation6 + $0x24] sm:$0xf]
        %v424 = vld [vmem:[#allocation6 + $0x28] sm:$0xf]
        %v425 = vld [vmem:[#allocation6 + $0x2c] sm:$0xf]
        %v426 = vld [vmem:[#allocation6 + $0x30] sm:$0xf]
        %v427 = vld [vmem:[#allocation6 + $0x34] sm:$0xf]
        %v428 = vld [vmem:[#allocation6 + $0x38] sm:$0xf]
        %v429 = vld [vmem:[#allocation6 + $0x3c] sm:$0xf]
        %v430 = vld [vmem:[%s2] sm:$0x1]
        %v432 = vlaneseq
        %v433 = vshrl.u32 %v432, 7
        %v434 = vsub.s32 0, %v433
        %v435 = vrot.slane %v430, %v434
        %v469 = vunpack.c.l.b16 %v382
        %v470 = vunpack.c.l.b16 %v383
        %v471 = vunpack.c.l.b16 %v384
        %v472 = vunpack.c.l.b16 %v385
        %v473 = vunpack.c.l.b16 %v386
        %v474 = vunpack.c.l.b16 %v387
        %v475 = vunpack.c.l.b16 %v388
        %v476 = vunpack.c.l.b16 %v389
        %v477 = vunpack.c.l.b16 %v390
        %v478 = vunpack.c.l.b16 %v391
        %v479 = vunpack.c.l.b16 %v392
        %v480 = vunpack.c.l.b16 %v393
        %v481 = vunpack.c.l.b16 %v394
        %v482 = vunpack.c.l.b16 %v395
        %v483 = vunpack.c.l.b16 %v396
        %v484 = vunpack.c.l.b16 %v397
        %v485 = vunpack.c.l.b16 %v398
        %v486 = vunpack.c.l.b16 %v399
        %v487 = vunpack.c.l.b16 %v400
        %v488 = vunpack.c.l.b16 %v401
        %v489 = vunpack.c.l.b16 %v402
        %v490 = vunpack.c.l.b16 %v403
        %v491 = vunpack.c.l.b16 %v404
        %v492 = vunpack.c.l.b16 %v405
        %v493 = vunpack.c.l.b16 %v406
        %v494 = vunpack.c.l.b16 %v407
        %v495 = vunpack.c.l.b16 %v408
        %v496 = vunpack.c.l.b16 %v409
        %v497 = vunpack.c.l.b16 %v410
        %v498 = vunpack.c.l.b16 %v411
        %v499 = vunpack.c.l.b16 %v412
        %v500 = vunpack.c.l.b16 %v413
        %v501 = vpack.c.b16 %v470, %v469
        %v502 = vpack.c.b16 %v472, %v471
        %v503 = vpack.c.b16 %v474, %v473
        %v504 = vpack.c.b16 %v476, %v475
        %v505 = vpack.c.b16 %v478, %v477
        %v506 = vpack.c.b16 %v480, %v479
        %v507 = vpack.c.b16 %v482, %v481
        %v508 = vpack.c.b16 %v484, %v483
        %v509 = vpack.c.b16 %v486, %v485
        %v510 = vpack.c.b16 %v488, %v487
        %v511 = vpack.c.b16 %v490, %v489
        %v512 = vpack.c.b16 %v492, %v491
        %v513 = vpack.c.b16 %v494, %v493
        %v514 = vpack.c.b16 %v496, %v495
        %v515 = vpack.c.b16 %v498, %v497
        %v516 = vpack.c.b16 %v500, %v499
        %v549 = vunpack.c.l.b16 %v414
        %v550 = vunpack.c.l.b16 %v415
        %v551 = vunpack.c.l.b16 %v416
        %v552 = vunpack.c.l.b16 %v417
        %v553 = vunpack.c.l.b16 %v418
        %v554 = vunpack.c.l.b16 %v419
        %v555 = vunpack.c.l.b16 %v420
        %v556 = vunpack.c.l.b16 %v421
        %v557 = vunpack.c.l.b16 %v422
        %v558 = vunpack.c.l.b16 %v423
        %v559 = vunpack.c.l.b16 %v424
        %v560 = vunpack.c.l.b16 %v425
        %v561 = vunpack.c.l.b16 %v426
        %v562 = vunpack.c.l.b16 %v427
        %v563 = vunpack.c.l.b16 %v428
        %v564 = vunpack.c.l.b16 %v429
        %v565 = vpack.c.b16 %v550, %v549
        %v566 = vpack.c.b16 %v552, %v551
        %v567 = vpack.c.b16 %v554, %v553
        %v568 = vpack.c.b16 %v556, %v555
        %v569 = vpack.c.b16 %v558, %v557
        %v570 = vpack.c.b16 %v560, %v559
        %v571 = vpack.c.b16 %v562, %v561
        %v572 = vpack.c.b16 %v564, %v563
        %581 = vmatprep.subr.bf16.mxu0 0
        %582 = vmatpush1.bf16.msra.mxu0 %v565
        %583 = vmatprep.subr.bf16.mxu0 0
        %584 = vmatpush1.bf16.msra.mxu0 %v566
        %585 = vmatprep.subr.bf16.mxu0 0
        %586 = vmatpush1.bf16.msra.mxu0 %v567
        %587 = vmatprep.subr.bf16.mxu0 0
        %588 = vmatpush1.bf16.msra.mxu0 %v568
        %589 = vmatprep.subr.bf16.mxu0 0
        %590 = vmatpush1.bf16.msra.mxu0 %v569
        %591 = vmatprep.subr.bf16.mxu0 0
        %592 = vmatpush1.bf16.msra.mxu0 %v570
        %593 = vmatprep.subr.bf16.mxu0 0
        %594 = vmatpush1.bf16.msra.mxu0 %v571
        %595 = vmatprep.subr.bf16.mxu0 0
        %596 = vmatpush1.bf16.msra.mxu0 %v572
        %597 = vmatprep.subr.bf16.mxu0 0
        %598 = vmatpush1.bf16.msra.mxu0 0
        %599 = vmatprep.subr.bf16.mxu0 0
        %600 = vmatpush1.bf16.msra.mxu0 0
        %601 = vmatprep.subr.bf16.mxu0 0
        %602 = vmatpush1.bf16.msra.mxu0 0
        %603 = vmatprep.subr.bf16.mxu0 0
        %604 = vmatpush1.bf16.msra.mxu0 0
        %605 = vmatprep.subr.bf16.mxu0 0
        %606 = vmatpush1.bf16.msra.mxu0 0
        %607 = vmatprep.subr.bf16.mxu0 0
        %608 = vmatpush1.bf16.msra.mxu0 0
        %609 = vmatprep.subr.bf16.mxu0 0
        %610 = vmatpush1.bf16.msra.mxu0 0
        %611 = vmatprep.subr.bf16.mxu0 0
        %612 = vmatpush1.bf16.msra.mxu0 0
        %613 = vmatprep.mubr.bf16.mxu0 0
        %614 = vmatmul.mubr.bf16.gmra.mrb[0].mxu0 %v501
        %v615 = vpop.f32.mrb[0].mxu0
        %v616 = vadd.f32 %v435, %v615
        %v617 = vpop.f32.mrb[0].mxu0
        %v618 = vpop.f32.mrb[0].mxu0
        %v619 = vadd.f32 %v435, %v618
        %v620 = vpop.f32.mrb[0].mxu0
        %621 = vmatprep.mubr.bf16.mxu0 0
        %622 = vmatmul.mubr.bf16.gmra.mrb[0].mxu0 %v502
        %v623 = vpop.f32.mrb[0].mxu0
        %v624 = vadd.f32 %v435, %v623
        %v625 = vpop.f32.mrb[0].mxu0
        %v626 = vpop.f32.mrb[0].mxu0
        %v627 = vadd.f32 %v435, %v626
        %v628 = vpop.f32.mrb[0].mxu0
        %629 = vmatprep.mubr.bf16.mxu0 0
        %630 = vmatmul.mubr.bf16.gmra.mrb[0].mxu0 %v503
        %v631 = vpop.f32.mrb[0].mxu0
        %v632 = vadd.f32 %v435, %v631
        %v633 = vpop.f32.mrb[0].mxu0
        %v634 = vpop.f32.mrb[0].mxu0
        %v635 = vadd.f32 %v435, %v634
        %v636 = vpop.f32.mrb[0].mxu0
        %637 = vmatprep.mubr.bf16.mxu0 0
        %638 = vmatmul.mubr.bf16.gmra.mrb[0].mxu0 %v504
        %v639 = vpop.f32.mrb[0].mxu0
        %v640 = vadd.f32 %v435, %v639
        %v641 = vpop.f32.mrb[0].mxu0
        %v642 = vpop.f32.mrb[0].mxu0
        %v643 = vadd.f32 %v435, %v642
        %v644 = vpop.f32.mrb[0].mxu0
        %645 = vmatprep.mubr.bf16.mxu0 0
        %646 = vmatmul.mubr.bf16.gmra.mrb[0].mxu0 %v505
        %v647 = vpop.f32.mrb[0].mxu0
        %v648 = vadd.f32 %v435, %v647
        %v649 = vpop.f32.mrb[0].mxu0
        %v650 = vpop.f32.mrb[0].mxu0
        %v651 = vadd.f32 %v435, %v650
        %v652 = vpop.f32.mrb[0].mxu0
        %653 = vmatprep.mubr.bf16.mxu0 0
        %654 = vmatmul.mubr.bf16.gmra.mrb[0].mxu0 %v506
        %v655 = vpop.f32.mrb[0].mxu0
        %v656 = vadd.f32 %v435, %v655
        %v657 = vpop.f32.mrb[0].mxu0
        %v658 = vpop.f32.mrb[0].mxu0
        %v659 = vadd.f32 %v435, %v658
        %v660 = vpop.f32.mrb[0].mxu0
        %661 = vmatprep.mubr.bf16.mxu0 0
        %662 = vmatmul.mubr.bf16.gmra.mrb[0].mxu0 %v507
        %v663 = vpop.f32.mrb[0].mxu0
        %v664 = vadd.f32 %v435, %v663
        %v665 = vpop.f32.mrb[0].mxu0
        %v666 = vpop.f32.mrb[0].mxu0
        %v667 = vadd.f32 %v435, %v666
        %v668 = vpop.f32.mrb[0].mxu0
        %669 = vmatprep.mubr.bf16.mxu0 0
        %670 = vmatmul.mubr.bf16.gmra.mrb[0].mxu0 %v508
        %v671 = vpop.f32.mrb[0].mxu0
        %v672 = vadd.f32 %v435, %v671
        %v673 = vpop.f32.mrb[0].mxu0
        %v674 = vpop.f32.mrb[0].mxu0
        %v675 = vadd.f32 %v435, %v674
        %v676 = vpop.f32.mrb[0].mxu0
        %677 = vmatprep.mubr.bf16.mxu0 0
        %678 = vmatmul.mubr.bf16.gmra.mrb[0].mxu0 %v509
        %v679 = vpop.f32.mrb[0].mxu0
        %v680 = vadd.f32 %v435, %v679
        %v681 = vpop.f32.mrb[0].mxu0
        %v682 = vpop.f32.mrb[0].mxu0
        %v683 = vadd.f32 %v435, %v682
        %v684 = vpop.f32.mrb[0].mxu0
        %685 = vmatprep.mubr.bf16.mxu0 0
        %686 = vmatmul.mubr.bf16.gmra.mrb[0].mxu0 %v510
        %v687 = vpop.f32.mrb[0].mxu0
        %v688 = vadd.f32 %v435, %v687
        %v689 = vpop.f32.mrb[0].mxu0
        %v690 = vpop.f32.mrb[0].mxu0
        %v691 = vadd.f32 %v435, %v690
        %v692 = vpop.f32.mrb[0].mxu0
        %693 = vmatprep.mubr.bf16.mxu0 0
        %694 = vmatmul.mubr.bf16.gmra.mrb[0].mxu0 %v511
        %v695 = vpop.f32.mrb[0].mxu0
        %v696 = vadd.f32 %v435, %v695
        %v697 = vpop.f32.mrb[0].mxu0
        %v698 = vpop.f32.mrb[0].mxu0
        %v699 = vadd.f32 %v435, %v698
        %v700 = vpop.f32.mrb[0].mxu0
        %701 = vmatprep.mubr.bf16.mxu0 0
        %702 = vmatmul.mubr.bf16.gmra.mrb[0].mxu0 %v512
        %v703 = vpop.f32.mrb[0].mxu0
        %v704 = vadd.f32 %v435, %v703
        %v705 = vpop.f32.mrb[0].mxu0
        %v706 = vpop.f32.mrb[0].mxu0
        %v707 = vadd.f32 %v435, %v706
        %v708 = vpop.f32.mrb[0].mxu0
        %709 = vmatprep.mubr.bf16.mxu0 0
        %710 = vmatmul.mubr.bf16.gmra.mrb[0].mxu0 %v513
        %v711 = vpop.f32.mrb[0].mxu0
        %v712 = vadd.f32 %v435, %v711
        %v713 = vpop.f32.mrb[0].mxu0
        %v714 = vpop.f32.mrb[0].mxu0
        %v715 = vadd.f32 %v435, %v714
        %v716 = vpop.f32.mrb[0].mxu0
        %717 = vmatprep.mubr.bf16.mxu0 0
        %718 = vmatmul.mubr.bf16.gmra.mrb[0].mxu0 %v514
        %v719 = vpop.f32.mrb[0].mxu0
        %v720 = vadd.f32 %v435, %v719
        %v721 = vpop.f32.mrb[0].mxu0
        %v722 = vpop.f32.mrb[0].mxu0
        %v723 = vadd.f32 %v435, %v722
        %v724 = vpop.f32.mrb[0].mxu0
        %725 = vmatprep.mubr.bf16.mxu0 0
        %726 = vmatmul.mubr.bf16.gmra.mrb[0].mxu0 %v515
        %v727 = vpop.f32.mrb[0].mxu0
        %v728 = vadd.f32 %v435, %v727
        %v729 = vpop.f32.mrb[0].mxu0
        %v730 = vpop.f32.mrb[0].mxu0
        %v731 = vadd.f32 %v435, %v730
        %v732 = vpop.f32.mrb[0].mxu0
        %733 = vmatprep.mubr.bf16.mxu0 0
        %734 = vmatmul.mubr.bf16.gmra.mrb[0].mxu0 %v516
        %v735 = vpop.f32.mrb[0].mxu0
        %v736 = vadd.f32 %v435, %v735
        %v737 = vpop.f32.mrb[0].mxu0
        %v738 = vpop.f32.mrb[0].mxu0
        %v739 = vadd.f32 %v435, %v738
        %v740 = vpop.f32.mrb[0].mxu0
        %741 = vdwg.mxu0
        %v742 = vmax.f32 %v616, 0.0
        %v743 = vmax.f32 %v619, 0.0
        %v744 = vmax.f32 %v624, 0.0
        %v745 = vmax.f32 %v627, 0.0
        %v746 = vmax.f32 %v632, 0.0
        %v747 = vmax.f32 %v635, 0.0
        %v748 = vmax.f32 %v640, 0.0
        %v749 = vmax.f32 %v643, 0.0
        %v750 = vmax.f32 %v648, 0.0
        %v751 = vmax.f32 %v651, 0.0
        %v752 = vmax.f32 %v656, 0.0
        %v753 = vmax.f32 %v659, 0.0
        %v754 = vmax.f32 %v664, 0.0
        %v755 = vmax.f32 %v667, 0.0
        %v756 = vmax.f32 %v672, 0.0
        %v757 = vmax.f32 %v675, 0.0
        %v758 = vmax.f32 %v680, 0.0
        %v759 = vmax.f32 %v683, 0.0
        %v760 = vmax.f32 %v688, 0.0
        %v761 = vmax.f32 %v691, 0.0
        %v762 = vmax.f32 %v696, 0.0
        %v763 = vmax.f32 %v699, 0.0
        %v764 = vmax.f32 %v704, 0.0
        %v765 = vmax.f32 %v707, 0.0
        %v766 = vmax.f32 %v712, 0.0
        %v767 = vmax.f32 %v715, 0.0
        %v768 = vmax.f32 %v720, 0.0
        %v769 = vmax.f32 %v723, 0.0
        %v770 = vmax.f32 %v728, 0.0
        %v771 = vmax.f32 %v731, 0.0
        %v772 = vmax.f32 %v736, 0.0
        %v773 = vmax.f32 %v739, 0.0
        %774 = vst [vmem:[%s349 + $0x1] sm:$0xff] %v742
        %775 = vst [vmem:[%s349 + $0x9] sm:$0xff] %v743
        %776 = vst [vmem:[%s349 + $0x19] sm:$0xff] %v744
        %777 = vst [vmem:[%s349 + $0x21] sm:$0xff] %v745
        %778 = vst [vmem:[%s349 + $0x31] sm:$0xff] %v746
        %779 = vst [vmem:[%s349 + $0x39] sm:$0xff] %v747
        %780 = vst [vmem:[%s349 + $0x49] sm:$0xff] %v748
        %781 = vst [vmem:[%s349 + $0x51] sm:$0xff] %v749
        %782 = vst [vmem:[%s349 + $0x61] sm:$0xff] %v750
        %783 = vst [vmem:[%s349 + $0x69] sm:$0xff] %v751
        %784 = vst [vmem:[%s349 + $0x79] sm:$0xff] %v752
        %785 = vst [vmem:[%s349 + $0x81] sm:$0xff] %v753
        %786 = vst [vmem:[%s349 + $0x91] sm:$0xff] %v754
        %787 = vst [vmem:[%s349 + $0x99] sm:$0xff] %v755
        %788 = vst [vmem:[%s349 + $0xa9] sm:$0xff] %v756
        %789 = vst [vmem:[%s349 + $0xb1] sm:$0xff] %v757
        %790 = vst [vmem:[%s349 + $0xc1] sm:$0xff] %v758
        %791 = vst [vmem:[%s349 + $0xc9] sm:$0xff] %v759
        %792 = vst [vmem:[%s349 + $0xd9] sm:$0xff] %v760
        %793 = vst [vmem:[%s349 + $0xe1] sm:$0xff] %v761
        %794 = vst [vmem:[%s349 + $0xf1] sm:$0xff] %v762
        %795 = vst [vmem:[%s349 + $0xf9] sm:$0xff] %v763
        %796 = vst [vmem:[%s349 + $0x109] sm:$0xff] %v764
        %797 = vst [vmem:[%s349 + $0x111] sm:$0xff] %v765
        %798 = vst [vmem:[%s349 + $0x121] sm:$0xff] %v766
        %799 = vst [vmem:[%s349 + $0x129] sm:$0xff] %v767
        %800 = vst [vmem:[%s349 + $0x139] sm:$0xff] %v768
        %801 = vst [vmem:[%s349 + $0x141] sm:$0xff] %v769
        %802 = vst [vmem:[%s349 + $0x151] sm:$0xff] %v770
        %803 = vst [vmem:[%s349 + $0x159] sm:$0xff] %v771
        %804 = vst [vmem:[%s349 + $0x169] sm:$0xff] %v772
        %805 = vst [vmem:[%s349 + $0x171] sm:$0xff] %v773
        %v806 = vld [vmem:[#allocation2] sm:$0xff]
        %v807 = vld [vmem:[#allocation2 + $0x8] sm:$0xff]
        %v808 = vld [vmem:[#allocation2 + $0x10] sm:$0xff]
        %v809 = vld [vmem:[#allocation2 + $0x18] sm:$0xff]
        %v810 = vld [vmem:[#allocation2 + $0x20] sm:$0xff]
        %v811 = vld [vmem:[#allocation2 + $0x28] sm:$0xff]
        %v812 = vld [vmem:[#allocation2 + $0x30] sm:$0xff]
        %v813 = vld [vmem:[#allocation2 + $0x38] sm:$0xff]
        %v814 = vld [vmem:[#allocation2 + $0x40] sm:$0xff]
        %v815 = vld [vmem:[#allocation2 + $0x48] sm:$0xff]
        %v816 = vld [vmem:[#allocation2 + $0x50] sm:$0xff]
        %v817 = vld [vmem:[#allocation2 + $0x58] sm:$0xff]
        %v818 = vld [vmem:[#allocation2 + $0x60] sm:$0xff]
        %v819 = vld [vmem:[#allocation2 + $0x68] sm:$0xff]
        %v820 = vld [vmem:[#allocation2 + $0x70] sm:$0xff]
        %v821 = vld [vmem:[#allocation2 + $0x78] sm:$0xff]
        %v822 = vld [vmem:[#allocation2 + $0x80] sm:$0xff]
        %v823 = vld [vmem:[#allocation2 + $0x88] sm:$0xff]
        %v824 = vld [vmem:[#allocation2 + $0x90] sm:$0xff]
        %v825 = vld [vmem:[#allocation2 + $0x98] sm:$0xff]
        %v826 = vld [vmem:[#allocation2 + $0xa0] sm:$0xff]
        %v827 = vld [vmem:[#allocation2 + $0xa8] sm:$0xff]
        %v828 = vld [vmem:[#allocation2 + $0xb0] sm:$0xff]
        %v829 = vld [vmem:[#allocation2 + $0xb8] sm:$0xff]
        %v830 = vld [vmem:[#allocation2 + $0xc0] sm:$0xff]
        %v831 = vld [vmem:[#allocation2 + $0xc8] sm:$0xff]
        %v832 = vld [vmem:[#allocation2 + $0xd0] sm:$0xff]
        %v833 = vld [vmem:[#allocation2 + $0xd8] sm:$0xff]
        %v834 = vld [vmem:[#allocation2 + $0xe0] sm:$0xff]
        %v835 = vld [vmem:[#allocation2 + $0xe8] sm:$0xff]
        %v836 = vld [vmem:[#allocation2 + $0xf0] sm:$0xff]
        %v837 = vld [vmem:[#allocation2 + $0xf8] sm:$0xff]
        %v838 = vld [vmem:[#allocation2 + $0x100] sm:$0xff]
        %v839 = vld [vmem:[#allocation2 + $0x108] sm:$0xff]
        %v840 = vld [vmem:[#allocation2 + $0x110] sm:$0xff]
        %v841 = vld [vmem:[#allocation2 + $0x118] sm:$0xff]
        %v842 = vld [vmem:[#allocation2 + $0x120] sm:$0xff]
        %v843 = vld [vmem:[#allocation2 + $0x128] sm:$0xff]
        %v844 = vld [vmem:[#allocation2 + $0x130] sm:$0xff]
        %v845 = vld [vmem:[#allocation2 + $0x138] sm:$0xff]
        %v846 = vld [vmem:[#allocation2 + $0x140] sm:$0xff]
        %v847 = vld [vmem:[#allocation2 + $0x148] sm:$0xff]
        %v848 = vld [vmem:[#allocation2 + $0x150] sm:$0xff]
        %v849 = vld [vmem:[#allocation2 + $0x158] sm:$0xff]
        %v850 = vld [vmem:[#allocation2 + $0x160] sm:$0xff]
        %v851 = vld [vmem:[#allocation2 + $0x168] sm:$0xff]
        %v852 = vld [vmem:[#allocation2 + $0x170] sm:$0xff]
        %v853 = vld [vmem:[#allocation2 + $0x178] sm:$0xff]
        %v854 = vpack.c.bf16 %v807, %v806
        %v855 = vpack.c.bf16 %v810, %v809
        %v856 = vpack.c.bf16 %v813, %v812
        %v857 = vpack.c.bf16 %v816, %v815
        %v858 = vpack.c.bf16 %v819, %v818
        %v859 = vpack.c.bf16 %v822, %v821
        %v860 = vpack.c.bf16 %v825, %v824
        %v861 = vpack.c.bf16 %v828, %v827
        %v862 = vpack.c.bf16 %v831, %v830
        %v863 = vpack.c.bf16 %v834, %v833
        %v864 = vpack.c.bf16 %v837, %v836
        %v865 = vpack.c.bf16 %v840, %v839
        %v866 = vpack.c.bf16 %v843, %v842
        %v867 = vpack.c.bf16 %v846, %v845
        %v868 = vpack.c.bf16 %v849, %v848
        %v869 = vpack.c.bf16 %v852, %v851
        %v870 = vld [vmem:[#allocation8] sm:$0xf]
        %v871 = vld [vmem:[#allocation8 + $0x4] sm:$0xf]
        %v872 = vld [vmem:[#allocation8 + $0x8] sm:$0xf]
        %v873 = vld [vmem:[#allocation8 + $0xc] sm:$0xf]
        %v874 = vld [vmem:[#allocation8 + $0x10] sm:$0xf]
        %v875 = vld [vmem:[#allocation8 + $0x14] sm:$0xf]
        %v876 = vld [vmem:[#allocation8 + $0x18] sm:$0xf]
        %v877 = vld [vmem:[#allocation8 + $0x1c] sm:$0xf]
        %v878 = vld [vmem:[#allocation8 + $0x20] sm:$0xf]
        %v879 = vld [vmem:[#allocation8 + $0x24] sm:$0xf]
        %v880 = vld [vmem:[#allocation8 + $0x28] sm:$0xf]
        %v881 = vld [vmem:[#allocation8 + $0x2c] sm:$0xf]
        %v882 = vld [vmem:[#allocation8 + $0x30] sm:$0xf]
        %v883 = vld [vmem:[#allocation8 + $0x34] sm:$0xf]
        %v884 = vld [vmem:[#allocation8 + $0x38] sm:$0xf]
        %v885 = vld [vmem:[#allocation8 + $0x3c] sm:$0xf]
        %vm934 = vcmask 1046528
        %v935 = vrot.slane %v806, 1
        %v936 = vrot.slane %v807, 1
        %v937 = vsel %vm934, %v935, %v936
        %v938 = vrot.slane %v808, 1
        %v939 = vsel %vm934, %v936, %v938
        %v940 = vrot.slane %v809, 1
        %v941 = vrot.slane %v810, 1
        %v942 = vsel %vm934, %v940, %v941
        %v943 = vrot.slane %v811, 1
        %v944 = vsel %vm934, %v941, %v943
        %v945 = vrot.slane %v812, 1
        %v946 = vrot.slane %v813, 1
        %v947 = vsel %vm934, %v945, %v946
        %v948 = vrot.slane %v814, 1
        %v949 = vsel %vm934, %v946, %v948
        %v950 = vrot.slane %v815, 1
        %v951 = vrot.slane %v816, 1
        %v952 = vsel %vm934, %v950, %v951
        %v953 = vrot.slane %v817, 1
        %v954 = vsel %vm934, %v951, %v953
        %v955 = vrot.slane %v818, 1
        %v956 = vrot.slane %v819, 1
        %v957 = vsel %vm934, %v955, %v956
        %v958 = vrot.slane %v820, 1
        %v959 = vsel %vm934, %v956, %v958
        %v960 = vrot.slane %v821, 1
        %v961 = vrot.slane %v822, 1
        %v962 = vsel %vm934, %v960, %v961
        %v963 = vrot.slane %v823, 1
        %v964 = vsel %vm934, %v961, %v963
        %v965 = vrot.slane %v824, 1
        %v966 = vrot.slane %v825, 1
        %v967 = vsel %vm934, %v965, %v966
        %v968 = vrot.slane %v826, 1
        %v969 = vsel %vm934, %v966, %v968
        %v970 = vrot.slane %v827, 1
        %v971 = vrot.slane %v828, 1
        %v972 = vsel %vm934, %v970, %v971
        %v973 = vrot.slane %v829, 1
        %v974 = vsel %vm934, %v971, %v973
        %v975 = vrot.slane %v830, 1
        %v976 = vrot.slane %v831, 1
        %v977 = vsel %vm934, %v975, %v976
        %v978 = vrot.slane %v832, 1
        %v979 = vsel %vm934, %v976, %v978
        %v980 = vrot.slane %v833, 1
        %v981 = vrot.slane %v834, 1
        %v982 = vsel %vm934, %v980, %v981
        %v983 = vrot.slane %v835, 1
        %v984 = vsel %vm934, %v981, %v983
        %v985 = vrot.slane %v836, 1
        %v986 = vrot.slane %v837, 1
        %v987 = vsel %vm934, %v985, %v986
        %v988 = vrot.slane %v838, 1
        %v989 = vsel %vm934, %v986, %v988
        %v990 = vrot.slane %v839, 1
        %v991 = vrot.slane %v840, 1
        %v992 = vsel %vm934, %v990, %v991
        %v993 = vrot.slane %v841, 1
        %v994 = vsel %vm934, %v991, %v993
        %v995 = vrot.slane %v842, 1
        %v996 = vrot.slane %v843, 1
        %v997 = vsel %vm934, %v995, %v996
        %v998 = vrot.slane %v844, 1
        %v999 = vsel %vm934, %v996, %v998
        %v1000 = vrot.slane %v845, 1
        %v1001 = vrot.slane %v846, 1
        %v1002 = vsel %vm934, %v1000, %v1001
        %v1003 = vrot.slane %v847, 1
        %v1004 = vsel %vm934, %v1001, %v1003
        %v1005 = vrot.slane %v848, 1
        %v1006 = vrot.slane %v849, 1
        %v1007 = vsel %vm934, %v1005, %v1006
        %v1008 = vrot.slane %v850, 1
        %v1009 = vsel %vm934, %v1006, %v1008
        %v1010 = vrot.slane %v851, 1
        %v1011 = vrot.slane %v852, 1
        %v1012 = vsel %vm934, %v1010, %v1011
        %v1013 = vrot.slane %v853, 1
        %v1014 = vsel %vm934, %v1011, %v1013
        %v1047 = vpack.c.bf16 %v939, %v937
        %v1048 = vpack.c.bf16 %v944, %v942
        %v1049 = vpack.c.bf16 %v949, %v947
        %v1050 = vpack.c.bf16 %v954, %v952
        %v1051 = vpack.c.bf16 %v959, %v957
        %v1052 = vpack.c.bf16 %v964, %v962
        %v1053 = vpack.c.bf16 %v969, %v967
        %v1054 = vpack.c.bf16 %v974, %v972
        %v1055 = vpack.c.bf16 %v979, %v977
        %v1056 = vpack.c.bf16 %v984, %v982
        %v1057 = vpack.c.bf16 %v989, %v987
        %v1058 = vpack.c.bf16 %v994, %v992
        %v1059 = vpack.c.bf16 %v999, %v997
        %v1060 = vpack.c.bf16 %v1004, %v1002
        %v1061 = vpack.c.bf16 %v1009, %v1007
        %v1062 = vpack.c.bf16 %v1014, %v1012
        %s1063 = scalar_lea.vmem [#allocation8], 64
        %v1064 = vld [vmem:[%s1063] sm:$0xf]
        %v1065 = vld [vmem:[%s1063 + $0x4] sm:$0xf]
        %v1066 = vld [vmem:[%s1063 + $0x8] sm:$0xf]
        %v1067 = vld [vmem:[%s1063 + $0xc] sm:$0xf]
        %v1068 = vld [vmem:[%s1063 + $0x10] sm:$0xf]
        %v1069 = vld [vmem:[%s1063 + $0x14] sm:$0xf]
        %v1070 = vld [vmem:[%s1063 + $0x18] sm:$0xf]
        %v1071 = vld [vmem:[%s1063 + $0x1c] sm:$0xf]
        %v1072 = vld [vmem:[%s1063 + $0x20] sm:$0xf]
        %v1073 = vld [vmem:[%s1063 + $0x24] sm:$0xf]
        %v1074 = vld [vmem:[%s1063 + $0x28] sm:$0xf]
        %v1075 = vld [vmem:[%s1063 + $0x2c] sm:$0xf]
        %v1076 = vld [vmem:[%s1063 + $0x30] sm:$0xf]
        %v1077 = vld [vmem:[%s1063 + $0x34] sm:$0xf]
        %v1078 = vld [vmem:[%s1063 + $0x38] sm:$0xf]
        %v1079 = vld [vmem:[%s1063 + $0x3c] sm:$0xf]
        %v1096 = vunpack.c.l.b16 %v1064
        %v1097 = vunpack.c.l.b16 %v1065
        %v1098 = vunpack.c.l.b16 %v1066
        %v1099 = vunpack.c.l.b16 %v1067
        %v1100 = vunpack.c.l.b16 %v1068
        %v1101 = vunpack.c.l.b16 %v1069
        %v1102 = vunpack.c.l.b16 %v1070
        %v1103 = vunpack.c.l.b16 %v1071
        %v1104 = vunpack.c.l.b16 %v1072
        %v1105 = vunpack.c.l.b16 %v1073
        %v1106 = vunpack.c.l.b16 %v1074
        %v1107 = vunpack.c.l.b16 %v1075
        %v1108 = vunpack.c.l.b16 %v1076
        %v1109 = vunpack.c.l.b16 %v1077
        %v1110 = vunpack.c.l.b16 %v1078
        %v1111 = vunpack.c.l.b16 %v1079
        %v1112 = vpack.c.b16 %v1097, %v1096
        %v1113 = vpack.c.b16 %v1099, %v1098
        %v1114 = vpack.c.b16 %v1101, %v1100
        %v1115 = vpack.c.b16 %v1103, %v1102
        %v1116 = vpack.c.b16 %v1105, %v1104
        %v1117 = vpack.c.b16 %v1107, %v1106
        %v1118 = vpack.c.b16 %v1109, %v1108
        %v1119 = vpack.c.b16 %v1111, %v1110
        %1128 = vmatprep.subr.bf16.mxu0 0
        %1129 = vmatpush1.bf16.msra.mxu0 %v1112
        %1130 = vmatprep.subr.bf16.mxu0 0
        %1131 = vmatpush1.bf16.msra.mxu0 %v1113
        %1132 = vmatprep.subr.bf16.mxu0 0
        %1133 = vmatpush1.bf16.msra.mxu0 %v1114
        %1134 = vmatprep.subr.bf16.mxu0 0
        %1135 = vmatpush1.bf16.msra.mxu0 %v1115
        %1136 = vmatprep.subr.bf16.mxu0 0
        %1137 = vmatpush1.bf16.msra.mxu0 %v1116
        %1138 = vmatprep.subr.bf16.mxu0 0
        %1139 = vmatpush1.bf16.msra.mxu0 %v1117
        %1140 = vmatprep.subr.bf16.mxu0 0
        %1141 = vmatpush1.bf16.msra.mxu0 %v1118
        %1142 = vmatprep.subr.bf16.mxu0 0
        %1143 = vmatpush1.bf16.msra.mxu0 %v1119
        %1144 = vmatprep.subr.bf16.mxu0 0
        %1145 = vmatpush1.bf16.msra.mxu0 0
        %1146 = vmatprep.subr.bf16.mxu0 0
        %1147 = vmatpush1.bf16.msra.mxu0 0
        %1148 = vmatprep.subr.bf16.mxu0 0
        %1149 = vmatpush1.bf16.msra.mxu0 0
        %1150 = vmatprep.subr.bf16.mxu0 0
        %1151 = vmatpush1.bf16.msra.mxu0 0
        %1152 = vmatprep.subr.bf16.mxu0 0
        %1153 = vmatpush1.bf16.msra.mxu0 0
        %1154 = vmatprep.subr.bf16.mxu0 0
        %1155 = vmatpush1.bf16.msra.mxu0 0
        %1156 = vmatprep.subr.bf16.mxu0 0
        %1157 = vmatpush1.bf16.msra.mxu0 0
        %1158 = vmatprep.subr.bf16.mxu0 0
        %1159 = vmatpush1.bf16.msra.mxu0 0
        %1160 = vmatprep.mubr.bf16.mxu0 0
        %1161 = vmatmul.mubr.bf16.gmra.mrb[0].mxu0 %v1047
        %v1162 = vpop.f32.mrb[0].mxu0
        %v1163 = vadd.f32 0.0, %v1162
        %v1164 = vpop.f32.mrb[0].mxu0
        %v1165 = vpop.f32.mrb[0].mxu0
        %v1166 = vadd.f32 0.0, %v1165
        %v1167 = vpop.f32.mrb[0].mxu0
        %1168 = vmatprep.mubr.bf16.mxu0 0
        %1169 = vmatmul.mubr.bf16.gmra.mrb[0].mxu0 %v1048
        %v1170 = vpop.f32.mrb[0].mxu0
        %v1171 = vadd.f32 0.0, %v1170
        %v1172 = vpop.f32.mrb[0].mxu0
        %v1173 = vpop.f32.mrb[0].mxu0
        %v1174 = vadd.f32 0.0, %v1173
        %v1175 = vpop.f32.mrb[0].mxu0
        %1176 = vmatprep.mubr.bf16.mxu0 0
        %1177 = vmatmul.mubr.bf16.gmra.mrb[0].mxu0 %v1049
        %v1178 = vpop.f32.mrb[0].mxu0
        %v1179 = vadd.f32 0.0, %v1178
        %v1180 = vpop.f32.mrb[0].mxu0
        %v1181 = vpop.f32.mrb[0].mxu0
        %v1182 = vadd.f32 0.0, %v1181
        %v1183 = vpop.f32.mrb[0].mxu0
        %1184 = vmatprep.mubr.bf16.mxu0 0
        %1185 = vmatmul.mubr.bf16.gmra.mrb[0].mxu0 %v1050
        %v1186 = vpop.f32.mrb[0].mxu0
        %v1187 = vadd.f32 0.0, %v1186
        %v1188 = vpop.f32.mrb[0].mxu0
        %v1189 = vpop.f32.mrb[0].mxu0
        %v1190 = vadd.f32 0.0, %v1189
        %v1191 = vpop.f32.mrb[0].mxu0
        %1192 = vmatprep.mubr.bf16.mxu0 0
        %1193 = vmatmul.mubr.bf16.gmra.mrb[0].mxu0 %v1051
        %v1194 = vpop.f32.mrb[0].mxu0
        %v1195 = vadd.f32 0.0, %v1194
        %v1196 = vpop.f32.mrb[0].mxu0
        %v1197 = vpop.f32.mrb[0].mxu0
        %v1198 = vadd.f32 0.0, %v1197
        %v1199 = vpop.f32.mrb[0].mxu0
        %1200 = vmatprep.mubr.bf16.mxu0 0
        %1201 = vmatmul.mubr.bf16.gmra.mrb[0].mxu0 %v1052
        %v1202 = vpop.f32.mrb[0].mxu0
        %v1203 = vadd.f32 0.0, %v1202
        %v1204 = vpop.f32.mrb[0].mxu0
        %v1205 = vpop.f32.mrb[0].mxu0
        %v1206 = vadd.f32 0.0, %v1205
        %v1207 = vpop.f32.mrb[0].mxu0
        %1208 = vmatprep.mubr.bf16.mxu0 0
        %1209 = vmatmul.mubr.bf16.gmra.mrb[0].mxu0 %v1053
        %v1210 = vpop.f32.mrb[0].mxu0
        %v1211 = vadd.f32 0.0, %v1210
        %v1212 = vpop.f32.mrb[0].mxu0
        %v1213 = vpop.f32.mrb[0].mxu0
        %v1214 = vadd.f32 0.0, %v1213
        %v1215 = vpop.f32.mrb[0].mxu0
        %1216 = vmatprep.mubr.bf16.mxu0 0
        %1217 = vmatmul.mubr.bf16.gmra.mrb[0].mxu0 %v1054
        %v1218 = vpop.f32.mrb[0].mxu0
        %v1219 = vadd.f32 0.0, %v1218
        %v1220 = vpop.f32.mrb[0].mxu0
        %v1221 = vpop.f32.mrb[0].mxu0
        %v1222 = vadd.f32 0.0, %v1221
        %v1223 = vpop.f32.mrb[0].mxu0
        %1224 = vmatprep.mubr.bf16.mxu0 0
        %1225 = vmatmul.mubr.bf16.gmra.mrb[0].mxu0 %v1055
        %v1226 = vpop.f32.mrb[0].mxu0
        %v1227 = vadd.f32 0.0, %v1226
        %v1228 = vpop.f32.mrb[0].mxu0
        %v1229 = vpop.f32.mrb[0].mxu0
        %v1230 = vadd.f32 0.0, %v1229
        %v1231 = vpop.f32.mrb[0].mxu0
        %1232 = vmatprep.mubr.bf16.mxu0 0
        %1233 = vmatmul.mubr.bf16.gmra.mrb[0].mxu0 %v1056
        %v1234 = vpop.f32.mrb[0].mxu0
        %v1235 = vadd.f32 0.0, %v1234
        %v1236 = vpop.f32.mrb[0].mxu0
        %v1237 = vpop.f32.mrb[0].mxu0
        %v1238 = vadd.f32 0.0, %v1237
        %v1239 = vpop.f32.mrb[0].mxu0
        %1240 = vmatprep.mubr.bf16.mxu0 0
        %1241 = vmatmul.mubr.bf16.gmra.mrb[0].mxu0 %v1057
        %v1242 = vpop.f32.mrb[0].mxu0
        %v1243 = vadd.f32 0.0, %v1242
        %v1244 = vpop.f32.mrb[0].mxu0
        %v1245 = vpop.f32.mrb[0].mxu0
        %v1246 = vadd.f32 0.0, %v1245
        %v1247 = vpop.f32.mrb[0].mxu0
        %1248 = vmatprep.mubr.bf16.mxu0 0
        %1249 = vmatmul.mubr.bf16.gmra.mrb[0].mxu0 %v1058
        %v1250 = vpop.f32.mrb[0].mxu0
        %v1251 = vadd.f32 0.0, %v1250
        %v1252 = vpop.f32.mrb[0].mxu0
        %v1253 = vpop.f32.mrb[0].mxu0
        %v1254 = vadd.f32 0.0, %v1253
        %v1255 = vpop.f32.mrb[0].mxu0
        %1256 = vmatprep.mubr.bf16.mxu0 0
        %1257 = vmatmul.mubr.bf16.gmra.mrb[0].mxu0 %v1059
        %v1258 = vpop.f32.mrb[0].mxu0
        %v1259 = vadd.f32 0.0, %v1258
        %v1260 = vpop.f32.mrb[0].mxu0
        %v1261 = vpop.f32.mrb[0].mxu0
        %v1262 = vadd.f32 0.0, %v1261
        %v1263 = vpop.f32.mrb[0].mxu0
        %1264 = vmatprep.mubr.bf16.mxu0 0
        %1265 = vmatmul.mubr.bf16.gmra.mrb[0].mxu0 %v1060
        %v1266 = vpop.f32.mrb[0].mxu0
        %v1267 = vadd.f32 0.0, %v1266
        %v1268 = vpop.f32.mrb[0].mxu0
        %v1269 = vpop.f32.mrb[0].mxu0
        %v1270 = vadd.f32 0.0, %v1269
        %v1271 = vpop.f32.mrb[0].mxu0
        %1272 = vmatprep.mubr.bf16.mxu0 0
        %1273 = vmatmul.mubr.bf16.gmra.mrb[0].mxu0 %v1061
        %v1274 = vpop.f32.mrb[0].mxu0
        %v1275 = vadd.f32 0.0, %v1274
        %v1276 = vpop.f32.mrb[0].mxu0
        %v1277 = vpop.f32.mrb[0].mxu0
        %v1278 = vadd.f32 0.0, %v1277
        %v1279 = vpop.f32.mrb[0].mxu0
        %1280 = vmatprep.mubr.bf16.mxu0 0
        %1281 = vmatmul.mubr.bf16.gmra.mrb[0].mxu0 %v1062
        %v1282 = vpop.f32.mrb[0].mxu0
        %v1283 = vadd.f32 0.0, %v1282
        %v1284 = vpop.f32.mrb[0].mxu0
        %v1285 = vpop.f32.mrb[0].mxu0
        %v1286 = vadd.f32 0.0, %v1285
        %v1287 = vpop.f32.mrb[0].mxu0
        %1288 = vdwg.mxu0
        %v1305 = vunpack.c.l.b16 %v870
        %v1306 = vunpack.c.l.b16 %v871
        %v1307 = vunpack.c.l.b16 %v872
        %v1308 = vunpack.c.l.b16 %v873
        %v1309 = vunpack.c.l.b16 %v874
        %v1310 = vunpack.c.l.b16 %v875
        %v1311 = vunpack.c.l.b16 %v876
        %v1312 = vunpack.c.l.b16 %v877
        %v1313 = vunpack.c.l.b16 %v878
        %v1314 = vunpack.c.l.b16 %v879
        %v1315 = vunpack.c.l.b16 %v880
        %v1316 = vunpack.c.l.b16 %v881
        %v1317 = vunpack.c.l.b16 %v882
        %v1318 = vunpack.c.l.b16 %v883
        %v1319 = vunpack.c.l.b16 %v884
        %v1320 = vunpack.c.l.b16 %v885
        %v1321 = vpack.c.b16 %v1306, %v1305
        %v1322 = vpack.c.b16 %v1308, %v1307
        %v1323 = vpack.c.b16 %v1310, %v1309
        %v1324 = vpack.c.b16 %v1312, %v1311
        %v1325 = vpack.c.b16 %v1314, %v1313
        %v1326 = vpack.c.b16 %v1316, %v1315
        %v1327 = vpack.c.b16 %v1318, %v1317
        %v1328 = vpack.c.b16 %v1320, %v1319
        %1337 = vmatprep.subr.bf16.mxu0 0
        %1338 = vmatpush1.bf16.msra.mxu0 %v1321
        %1339 = vmatprep.subr.bf16.mxu0 0
        %1340 = vmatpush1.bf16.msra.mxu0 %v1322
        %1341 = vmatprep.subr.bf16.mxu0 0
        %1342 = vmatpush1.bf16.msra.mxu0 %v1323
        %1343 = vmatprep.subr.bf16.mxu0 0
        %1344 = vmatpush1.bf16.msra.mxu0 %v1324
        %1345 = vmatprep.subr.bf16.mxu0 0
        %1346 = vmatpush1.bf16.msra.mxu0 %v1325
        %1347 = vmatprep.subr.bf16.mxu0 0
        %1348 = vmatpush1.bf16.msra.mxu0 %v1326
        %1349 = vmatprep.subr.bf16.mxu0 0
        %1350 = vmatpush1.bf16.msra.mxu0 %v1327
        %1351 = vmatprep.subr.bf16.mxu0 0
        %1352 = vmatpush1.bf16.msra.mxu0 %v1328
        %1353 = vmatprep.subr.bf16.mxu0 0
        %1354 = vmatpush1.bf16.msra.mxu0 0
        %1355 = vmatprep.subr.bf16.mxu0 0
        %1356 = vmatpush1.bf16.msra.mxu0 0
        %1357 = vmatprep.subr.bf16.mxu0 0
        %1358 = vmatpush1.bf16.msra.mxu0 0
        %1359 = vmatprep.subr.bf16.mxu0 0
        %1360 = vmatpush1.bf16.msra.mxu0 0
        %1361 = vmatprep.subr.bf16.mxu0 0
        %1362 = vmatpush1.bf16.msra.mxu0 0
        %1363 = vmatprep.subr.bf16.mxu0 0
        %1364 = vmatpush1.bf16.msra.mxu0 0
        %1365 = vmatprep.subr.bf16.mxu0 0
        %1366 = vmatpush1.bf16.msra.mxu0 0
        %1367 = vmatprep.subr.bf16.mxu0 0
        %1368 = vmatpush1.bf16.msra.mxu0 0
        %1369 = vmatprep.mubr.bf16.mxu0 0
        %1370 = vmatmul.mubr.bf16.gmra.mrb[0].mxu0 %v854
        %v1371 = vpop.f32.mrb[0].mxu0
        %v1372 = vadd.f32 %v1163, %v1371
        %v1373 = vpop.f32.mrb[0].mxu0
        %v1374 = vpop.f32.mrb[0].mxu0
        %v1375 = vadd.f32 %v1166, %v1374
        %v1376 = vpop.f32.mrb[0].mxu0
        %1377 = vmatprep.mubr.bf16.mxu0 0
        %1378 = vmatmul.mubr.bf16.gmra.mrb[0].mxu0 %v855
        %v1379 = vpop.f32.mrb[0].mxu0
        %v1380 = vadd.f32 %v1171, %v1379
        %v1381 = vpop.f32.mrb[0].mxu0
        %v1382 = vpop.f32.mrb[0].mxu0
        %v1383 = vadd.f32 %v1174, %v1382
        %v1384 = vpop.f32.mrb[0].mxu0
        %1385 = vmatprep.mubr.bf16.mxu0 0
        %1386 = vmatmul.mubr.bf16.gmra.mrb[0].mxu0 %v856
        %v1387 = vpop.f32.mrb[0].mxu0
        %v1388 = vadd.f32 %v1179, %v1387
        %v1389 = vpop.f32.mrb[0].mxu0
        %v1390 = vpop.f32.mrb[0].mxu0
        %v1391 = vadd.f32 %v1182, %v1390
        %v1392 = vpop.f32.mrb[0].mxu0
        %1393 = vmatprep.mubr.bf16.mxu0 0
        %1394 = vmatmul.mubr.bf16.gmra.mrb[0].mxu0 %v857
        %v1395 = vpop.f32.mrb[0].mxu0
        %v1396 = vadd.f32 %v1187, %v1395
        %v1397 = vpop.f32.mrb[0].mxu0
        %v1398 = vpop.f32.mrb[0].mxu0
        %v1399 = vadd.f32 %v1190, %v1398
        %v1400 = vpop.f32.mrb[0].mxu0
        %1401 = vmatprep.mubr.bf16.mxu0 0
        %1402 = vmatmul.mubr.bf16.gmra.mrb[0].mxu0 %v858
        %v1403 = vpop.f32.mrb[0].mxu0
        %v1404 = vadd.f32 %v1195, %v1403
        %v1405 = vpop.f32.mrb[0].mxu0
        %v1406 = vpop.f32.mrb[0].mxu0
        %v1407 = vadd.f32 %v1198, %v1406
        %v1408 = vpop.f32.mrb[0].mxu0
        %1409 = vmatprep.mubr.bf16.mxu0 0
        %1410 = vmatmul.mubr.bf16.gmra.mrb[0].mxu0 %v859
        %v1411 = vpop.f32.mrb[0].mxu0
        %v1412 = vadd.f32 %v1203, %v1411
        %v1413 = vpop.f32.mrb[0].mxu0
        %v1414 = vpop.f32.mrb[0].mxu0
        %v1415 = vadd.f32 %v1206, %v1414
        %v1416 = vpop.f32.mrb[0].mxu0
        %1417 = vmatprep.mubr.bf16.mxu0 0
        %1418 = vmatmul.mubr.bf16.gmra.mrb[0].mxu0 %v860
        %v1419 = vpop.f32.mrb[0].mxu0
        %v1420 = vadd.f32 %v1211, %v1419
        %v1421 = vpop.f32.mrb[0].mxu0
        %v1422 = vpop.f32.mrb[0].mxu0
        %v1423 = vadd.f32 %v1214, %v1422
        %v1424 = vpop.f32.mrb[0].mxu0
        %1425 = vmatprep.mubr.bf16.mxu0 0
        %1426 = vmatmul.mubr.bf16.gmra.mrb[0].mxu0 %v861
        %v1427 = vpop.f32.mrb[0].mxu0
        %v1428 = vadd.f32 %v1219, %v1427
        %v1429 = vpop.f32.mrb[0].mxu0
        %v1430 = vpop.f32.mrb[0].mxu0
        %v1431 = vadd.f32 %v1222, %v1430
        %v1432 = vpop.f32.mrb[0].mxu0
        %1433 = vmatprep.mubr.bf16.mxu0 0
        %1434 = vmatmul.mubr.bf16.gmra.mrb[0].mxu0 %v862
        %v1435 = vpop.f32.mrb[0].mxu0
        %v1436 = vadd.f32 %v1227, %v1435
        %v1437 = vpop.f32.mrb[0].mxu0
        %v1438 = vpop.f32.mrb[0].mxu0
        %v1439 = vadd.f32 %v1230, %v1438
        %v1440 = vpop.f32.mrb[0].mxu0
        %1441 = vmatprep.mubr.bf16.mxu0 0
        %1442 = vmatmul.mubr.bf16.gmra.mrb[0].mxu0 %v863
        %v1443 = vpop.f32.mrb[0].mxu0
        %v1444 = vadd.f32 %v1235, %v1443
        %v1445 = vpop.f32.mrb[0].mxu0
        %v1446 = vpop.f32.mrb[0].mxu0
        %v1447 = vadd.f32 %v1238, %v1446
        %v1448 = vpop.f32.mrb[0].mxu0
        %1449 = vmatprep.mubr.bf16.mxu0 0
        %1450 = vmatmul.mubr.bf16.gmra.mrb[0].mxu0 %v864
        %v1451 = vpop.f32.mrb[0].mxu0
        %v1452 = vadd.f32 %v1243, %v1451
        %v1453 = vpop.f32.mrb[0].mxu0
        %v1454 = vpop.f32.mrb[0].mxu0
        %v1455 = vadd.f32 %v1246, %v1454
        %v1456 = vpop.f32.mrb[0].mxu0
        %1457 = vmatprep.mubr.bf16.mxu0 0
        %1458 = vmatmul.mubr.bf16.gmra.mrb[0].mxu0 %v865
        %v1459 = vpop.f32.mrb[0].mxu0
        %v1460 = vadd.f32 %v1251, %v1459
        %v1461 = vpop.f32.mrb[0].mxu0
        %v1462 = vpop.f32.mrb[0].mxu0
        %v1463 = vadd.f32 %v1254, %v1462
        %v1464 = vpop.f32.mrb[0].mxu0
        %1465 = vmatprep.mubr.bf16.mxu0 0
        %1466 = vmatmul.mubr.bf16.gmra.mrb[0].mxu0 %v866
        %v1467 = vpop.f32.mrb[0].mxu0
        %v1468 = vadd.f32 %v1259, %v1467
        %v1469 = vpop.f32.mrb[0].mxu0
        %v1470 = vpop.f32.mrb[0].mxu0
        %v1471 = vadd.f32 %v1262, %v1470
        %v1472 = vpop.f32.mrb[0].mxu0
        %1473 = vmatprep.mubr.bf16.mxu0 0
        %1474 = vmatmul.mubr.bf16.gmra.mrb[0].mxu0 %v867
        %v1475 = vpop.f32.mrb[0].mxu0
        %v1476 = vadd.f32 %v1267, %v1475
        %v1477 = vpop.f32.mrb[0].mxu0
        %v1478 = vpop.f32.mrb[0].mxu0
        %v1479 = vadd.f32 %v1270, %v1478
        %v1480 = vpop.f32.mrb[0].mxu0
        %1481 = vmatprep.mubr.bf16.mxu0 0
        %1482 = vmatmul.mubr.bf16.gmra.mrb[0].mxu0 %v868
        %v1483 = vpop.f32.mrb[0].mxu0
        %v1484 = vadd.f32 %v1275, %v1483
        %v1485 = vpop.f32.mrb[0].mxu0
        %v1486 = vpop.f32.mrb[0].mxu0
        %v1487 = vadd.f32 %v1278, %v1486
        %v1488 = vpop.f32.mrb[0].mxu0
        %1489 = vmatprep.mubr.bf16.mxu0 0
        %1490 = vmatmul.mubr.bf16.gmra.mrb[0].mxu0 %v869
        %v1491 = vpop.f32.mrb[0].mxu0
        %v1492 = vadd.f32 %v1283, %v1491
        %v1493 = vpop.f32.mrb[0].mxu0
        %v1494 = vpop.f32.mrb[0].mxu0
        %v1495 = vadd.f32 %v1286, %v1494
        %v1496 = vpop.f32.mrb[0].mxu0
        %1497 = vdwg.mxu0
        %vm1498 = vcmask 1045504
        %v1499 = vrot.slane %v806, 2
        %v1500 = vrot.slane %v807, 2
        %v1501 = vsel %vm1498, %v1499, %v1500
        %v1502 = vrot.slane %v808, 2
        %v1503 = vsel %vm1498, %v1500, %v1502
        %v1504 = vrot.slane %v809, 2
        %v1505 = vrot.slane %v810, 2
        %v1506 = vsel %vm1498, %v1504, %v1505
        %v1507 = vrot.slane %v811, 2
        %v1508 = vsel %vm1498, %v1505, %v1507
        %v1509 = vrot.slane %v812, 2
        %v1510 = vrot.slane %v813, 2
        %v1511 = vsel %vm1498, %v1509, %v1510
        %v1512 = vrot.slane %v814, 2
        %v1513 = vsel %vm1498, %v1510, %v1512
        %v1514 = vrot.slane %v815, 2
        %v1515 = vrot.slane %v816, 2
        %v1516 = vsel %vm1498, %v1514, %v1515
        %v1517 = vrot.slane %v817, 2
        %v1518 = vsel %vm1498, %v1515, %v1517
        %v1519 = vrot.slane %v818, 2
        %v1520 = vrot.slane %v819, 2
        %v1521 = vsel %vm1498, %v1519, %v1520
        %v1522 = vrot.slane %v820, 2
        %v1523 = vsel %vm1498, %v1520, %v1522
        %v1524 = vrot.slane %v821, 2
        %v1525 = vrot.slane %v822, 2
        %v1526 = vsel %vm1498, %v1524, %v1525
        %v1527 = vrot.slane %v823, 2
        %v1528 = vsel %vm1498, %v1525, %v1527
        %v1529 = vrot.slane %v824, 2
        %v1530 = vrot.slane %v825, 2
        %v1531 = vsel %vm1498, %v1529, %v1530
        %v1532 = vrot.slane %v826, 2
        %v1533 = vsel %vm1498, %v1530, %v1532
        %v1534 = vrot.slane %v827, 2
        %v1535 = vrot.slane %v828, 2
        %v1536 = vsel %vm1498, %v1534, %v1535
        %v1537 = vrot.slane %v829, 2
        %v1538 = vsel %vm1498, %v1535, %v1537
        %v1539 = vrot.slane %v830, 2
        %v1540 = vrot.slane %v831, 2
        %v1541 = vsel %vm1498, %v1539, %v1540
        %v1542 = vrot.slane %v832, 2
        %v1543 = vsel %vm1498, %v1540, %v1542
        %v1544 = vrot.slane %v833, 2
        %v1545 = vrot.slane %v834, 2
        %v1546 = vsel %vm1498, %v1544, %v1545
        %v1547 = vrot.slane %v835, 2
        %v1548 = vsel %vm1498, %v1545, %v1547
        %v1549 = vrot.slane %v836, 2
        %v1550 = vrot.slane %v837, 2
        %v1551 = vsel %vm1498, %v1549, %v1550
        %v1552 = vrot.slane %v838, 2
        %v1553 = vsel %vm1498, %v1550, %v1552
        %v1554 = vrot.slane %v839, 2
        %v1555 = vrot.slane %v840, 2
        %v1556 = vsel %vm1498, %v1554, %v1555
        %v1557 = vrot.slane %v841, 2
        %v1558 = vsel %vm1498, %v1555, %v1557
        %v1559 = vrot.slane %v842, 2
        %v1560 = vrot.slane %v843, 2
        %v1561 = vsel %vm1498, %v1559, %v1560
        %v1562 = vrot.slane %v844, 2
        %v1563 = vsel %vm1498, %v1560, %v1562
        %v1564 = vrot.slane %v845, 2
        %v1565 = vrot.slane %v846, 2
        %v1566 = vsel %vm1498, %v1564, %v1565
        %v1567 = vrot.slane %v847, 2
        %v1568 = vsel %vm1498, %v1565, %v1567
        %v1569 = vrot.slane %v848, 2
        %v1570 = vrot.slane %v849, 2
        %v1571 = vsel %vm1498, %v1569, %v1570
        %v1572 = vrot.slane %v850, 2
        %v1573 = vsel %vm1498, %v1570, %v1572
        %v1574 = vrot.slane %v851, 2
        %v1575 = vrot.slane %v852, 2
        %v1576 = vsel %vm1498, %v1574, %v1575
        %v1577 = vrot.slane %v853, 2
        %v1578 = vsel %vm1498, %v1575, %v1577
        %v1611 = vpack.c.bf16 %v1503, %v1501
        %v1612 = vpack.c.bf16 %v1508, %v1506
        %v1613 = vpack.c.bf16 %v1513, %v1511
        %v1614 = vpack.c.bf16 %v1518, %v1516
        %v1615 = vpack.c.bf16 %v1523, %v1521
        %v1616 = vpack.c.bf16 %v1528, %v1526
        %v1617 = vpack.c.bf16 %v1533, %v1531
        %v1618 = vpack.c.bf16 %v1538, %v1536
        %v1619 = vpack.c.bf16 %v1543, %v1541
        %v1620 = vpack.c.bf16 %v1548, %v1546
        %v1621 = vpack.c.bf16 %v1553, %v1551
        %v1622 = vpack.c.bf16 %v1558, %v1556
        %v1623 = vpack.c.bf16 %v1563, %v1561
        %v1624 = vpack.c.bf16 %v1568, %v1566
        %v1625 = vpack.c.bf16 %v1573, %v1571
        %v1626 = vpack.c.bf16 %v1578, %v1576
        %s1627 = scalar_lea.vmem [#allocation8], 128
        %v1628 = vld [vmem:[%s1627] sm:$0xf]
        %v1629 = vld [vmem:[%s1627 + $0x4] sm:$0xf]
        %v1630 = vld [vmem:[%s1627 + $0x8] sm:$0xf]
        %v1631 = vld [vmem:[%s1627 + $0xc] sm:$0xf]
        %v1632 = vld [vmem:[%s1627 + $0x10] sm:$0xf]
        %v1633 = vld [vmem:[%s1627 + $0x14] sm:$0xf]
        %v1634 = vld [vmem:[%s1627 + $0x18] sm:$0xf]
        %v1635 = vld [vmem:[%s1627 + $0x1c] sm:$0xf]
        %v1636 = vld [vmem:[%s1627 + $0x20] sm:$0xf]
        %v1637 = vld [vmem:[%s1627 + $0x24] sm:$0xf]
        %v1638 = vld [vmem:[%s1627 + $0x28] sm:$0xf]
        %v1639 = vld [vmem:[%s1627 + $0x2c] sm:$0xf]
        %v1640 = vld [vmem:[%s1627 + $0x30] sm:$0xf]
        %v1641 = vld [vmem:[%s1627 + $0x34] sm:$0xf]
        %v1642 = vld [vmem:[%s1627 + $0x38] sm:$0xf]
        %v1643 = vld [vmem:[%s1627 + $0x3c] sm:$0xf]
        %v1660 = vunpack.c.l.b16 %v1628
        %v1661 = vunpack.c.l.b16 %v1629
        %v1662 = vunpack.c.l.b16 %v1630
        %v1663 = vunpack.c.l.b16 %v1631
        %v1664 = vunpack.c.l.b16 %v1632
        %v1665 = vunpack.c.l.b16 %v1633
        %v1666 = vunpack.c.l.b16 %v1634
        %v1667 = vunpack.c.l.b16 %v1635
        %v1668 = vunpack.c.l.b16 %v1636
        %v1669 = vunpack.c.l.b16 %v1637
        %v1670 = vunpack.c.l.b16 %v1638
        %v1671 = vunpack.c.l.b16 %v1639
        %v1672 = vunpack.c.l.b16 %v1640
        %v1673 = vunpack.c.l.b16 %v1641
        %v1674 = vunpack.c.l.b16 %v1642
        %v1675 = vunpack.c.l.b16 %v1643
        %v1676 = vpack.c.b16 %v1661, %v1660
        %v1677 = vpack.c.b16 %v1663, %v1662
        %v1678 = vpack.c.b16 %v1665, %v1664
        %v1679 = vpack.c.b16 %v1667, %v1666
        %v1680 = vpack.c.b16 %v1669, %v1668
        %v1681 = vpack.c.b16 %v1671, %v1670
        %v1682 = vpack.c.b16 %v1673, %v1672
        %v1683 = vpack.c.b16 %v1675, %v1674
        %1692 = vmatprep.subr.bf16.mxu0 0
        %1693 = vmatpush1.bf16.msra.mxu0 %v1676
        %1694 = vmatprep.subr.bf16.mxu0 0
        %1695 = vmatpush1.bf16.msra.mxu0 %v1677
        %1696 = vmatprep.subr.bf16.mxu0 0
        %1697 = vmatpush1.bf16.msra.mxu0 %v1678
        %1698 = vmatprep.subr.bf16.mxu0 0
        %1699 = vmatpush1.bf16.msra.mxu0 %v1679
        %1700 = vmatprep.subr.bf16.mxu0 0
        %1701 = vmatpush1.bf16.msra.mxu0 %v1680
        %1702 = vmatprep.subr.bf16.mxu0 0
        %1703 = vmatpush1.bf16.msra.mxu0 %v1681
        %1704 = vmatprep.subr.bf16.mxu0 0
        %1705 = vmatpush1.bf16.msra.mxu0 %v1682
        %1706 = vmatprep.subr.bf16.mxu0 0
        %1707 = vmatpush1.bf16.msra.mxu0 %v1683
        %1708 = vmatprep.subr.bf16.mxu0 0
        %1709 = vmatpush1.bf16.msra.mxu0 0
        %1710 = vmatprep.subr.bf16.mxu0 0
        %1711 = vmatpush1.bf16.msra.mxu0 0
        %1712 = vmatprep.subr.bf16.mxu0 0
        %1713 = vmatpush1.bf16.msra.mxu0 0
        %1714 = vmatprep.subr.bf16.mxu0 0
        %1715 = vmatpush1.bf16.msra.mxu0 0
        %1716 = vmatprep.subr.bf16.mxu0 0
        %1717 = vmatpush1.bf16.msra.mxu0 0
        %1718 = vmatprep.subr.bf16.mxu0 0
        %1719 = vmatpush1.bf16.msra.mxu0 0
        %1720 = vmatprep.subr.bf16.mxu0 0
        %1721 = vmatpush1.bf16.msra.mxu0 0
        %1722 = vmatprep.subr.bf16.mxu0 0
        %1723 = vmatpush1.bf16.msra.mxu0 0
        %1724 = vmatprep.mubr.bf16.mxu0 0
        %1725 = vmatmul.mubr.bf16.gmra.mrb[0].mxu0 %v1611
        %v1726 = vpop.f32.mrb[0].mxu0
        %v1727 = vadd.f32 0.0, %v1726
        %v1728 = vpop.f32.mrb[0].mxu0
        %v1729 = vpop.f32.mrb[0].mxu0
        %v1730 = vadd.f32 0.0, %v1729
        %v1731 = vpop.f32.mrb[0].mxu0
        %1732 = vmatprep.mubr.bf16.mxu0 0
        %1733 = vmatmul.mubr.bf16.gmra.mrb[0].mxu0 %v1612
        %v1734 = vpop.f32.mrb[0].mxu0
        %v1735 = vadd.f32 0.0, %v1734
        %v1736 = vpop.f32.mrb[0].mxu0
        %v1737 = vpop.f32.mrb[0].mxu0
        %v1738 = vadd.f32 0.0, %v1737
        %v1739 = vpop.f32.mrb[0].mxu0
        %1740 = vmatprep.mubr.bf16.mxu0 0
        %1741 = vmatmul.mubr.bf16.gmra.mrb[0].mxu0 %v1613
        %v1742 = vpop.f32.mrb[0].mxu0
        %v1743 = vadd.f32 0.0, %v1742
        %v1744 = vpop.f32.mrb[0].mxu0
        %v1745 = vpop.f32.mrb[0].mxu0
        %v1746 = vadd.f32 0.0, %v1745
        %v1747 = vpop.f32.mrb[0].mxu0
        %1748 = vmatprep.mubr.bf16.mxu0 0
        %1749 = vmatmul.mubr.bf16.gmra.mrb[0].mxu0 %v1614
        %v1750 = vpop.f32.mrb[0].mxu0
        %v1751 = vadd.f32 0.0, %v1750
        %v1752 = vpop.f32.mrb[0].mxu0
        %v1753 = vpop.f32.mrb[0].mxu0
        %v1754 = vadd.f32 0.0, %v1753
        %v1755 = vpop.f32.mrb[0].mxu0
        %1756 = vmatprep.mubr.bf16.mxu0 0
        %1757 = vmatmul.mubr.bf16.gmra.mrb[0].mxu0 %v1615
        %v1758 = vpop.f32.mrb[0].mxu0
        %v1759 = vadd.f32 0.0, %v1758
        %v1760 = vpop.f32.mrb[0].mxu0
        %v1761 = vpop.f32.mrb[0].mxu0
        %v1762 = vadd.f32 0.0, %v1761
        %v1763 = vpop.f32.mrb[0].mxu0
        %1764 = vmatprep.mubr.bf16.mxu0 0
        %1765 = vmatmul.mubr.bf16.gmra.mrb[0].mxu0 %v1616
        %v1766 = vpop.f32.mrb[0].mxu0
        %v1767 = vadd.f32 0.0, %v1766
        %v1768 = vpop.f32.mrb[0].mxu0
        %v1769 = vpop.f32.mrb[0].mxu0
        %v1770 = vadd.f32 0.0, %v1769
        %v1771 = vpop.f32.mrb[0].mxu0
        %1772 = vmatprep.mubr.bf16.mxu0 0
        %1773 = vmatmul.mubr.bf16.gmra.mrb[0].mxu0 %v1617
        %v1774 = vpop.f32.mrb[0].mxu0
        %v1775 = vadd.f32 0.0, %v1774
        %v1776 = vpop.f32.mrb[0].mxu0
        %v1777 = vpop.f32.mrb[0].mxu0
        %v1778 = vadd.f32 0.0, %v1777
        %v1779 = vpop.f32.mrb[0].mxu0
        %1780 = vmatprep.mubr.bf16.mxu0 0
        %1781 = vmatmul.mubr.bf16.gmra.mrb[0].mxu0 %v1618
        %v1782 = vpop.f32.mrb[0].mxu0
        %v1783 = vadd.f32 0.0, %v1782
        %v1784 = vpop.f32.mrb[0].mxu0
        %v1785 = vpop.f32.mrb[0].mxu0
        %v1786 = vadd.f32 0.0, %v1785
        %v1787 = vpop.f32.mrb[0].mxu0
        %1788 = vmatprep.mubr.bf16.mxu0 0
        %1789 = vmatmul.mubr.bf16.gmra.mrb[0].mxu0 %v1619
        %v1790 = vpop.f32.mrb[0].mxu0
        %v1791 = vadd.f32 0.0, %v1790
        %v1792 = vpop.f32.mrb[0].mxu0
        %v1793 = vpop.f32.mrb[0].mxu0
        %v1794 = vadd.f32 0.0, %v1793
        %v1795 = vpop.f32.mrb[0].mxu0
        %1796 = vmatprep.mubr.bf16.mxu0 0
        %1797 = vmatmul.mubr.bf16.gmra.mrb[0].mxu0 %v1620
        %v1798 = vpop.f32.mrb[0].mxu0
        %v1799 = vadd.f32 0.0, %v1798
        %v1800 = vpop.f32.mrb[0].mxu0
        %v1801 = vpop.f32.mrb[0].mxu0
        %v1802 = vadd.f32 0.0, %v1801
        %v1803 = vpop.f32.mrb[0].mxu0
        %1804 = vmatprep.mubr.bf16.mxu0 0
        %1805 = vmatmul.mubr.bf16.gmra.mrb[0].mxu0 %v1621
        %v1806 = vpop.f32.mrb[0].mxu0
        %v1807 = vadd.f32 0.0, %v1806
        %v1808 = vpop.f32.mrb[0].mxu0
        %v1809 = vpop.f32.mrb[0].mxu0
        %v1810 = vadd.f32 0.0, %v1809
        %v1811 = vpop.f32.mrb[0].mxu0
        %1812 = vmatprep.mubr.bf16.mxu0 0
        %1813 = vmatmul.mubr.bf16.gmra.mrb[0].mxu0 %v1622
        %v1814 = vpop.f32.mrb[0].mxu0
        %v1815 = vadd.f32 0.0, %v1814
        %v1816 = vpop.f32.mrb[0].mxu0
        %v1817 = vpop.f32.mrb[0].mxu0
        %v1818 = vadd.f32 0.0, %v1817
        %v1819 = vpop.f32.mrb[0].mxu0
        %1820 = vmatprep.mubr.bf16.mxu0 0
        %1821 = vmatmul.mubr.bf16.gmra.mrb[0].mxu0 %v1623
        %v1822 = vpop.f32.mrb[0].mxu0
        %v1823 = vadd.f32 0.0, %v1822
        %v1824 = vpop.f32.mrb[0].mxu0
        %v1825 = vpop.f32.mrb[0].mxu0
        %v1826 = vadd.f32 0.0, %v1825
        %v1827 = vpop.f32.mrb[0].mxu0
        %1828 = vmatprep.mubr.bf16.mxu0 0
        %1829 = vmatmul.mubr.bf16.gmra.mrb[0].mxu0 %v1624
        %v1830 = vpop.f32.mrb[0].mxu0
        %v1831 = vadd.f32 0.0, %v1830
        %v1832 = vpop.f32.mrb[0].mxu0
        %v1833 = vpop.f32.mrb[0].mxu0
        %v1834 = vadd.f32 0.0, %v1833
        %v1835 = vpop.f32.mrb[0].mxu0
        %1836 = vmatprep.mubr.bf16.mxu0 0
        %1837 = vmatmul.mubr.bf16.gmra.mrb[0].mxu0 %v1625
        %v1838 = vpop.f32.mrb[0].mxu0
        %v1839 = vadd.f32 0.0, %v1838
        %v1840 = vpop.f32.mrb[0].mxu0
        %v1841 = vpop.f32.mrb[0].mxu0
        %v1842 = vadd.f32 0.0, %v1841
        %v1843 = vpop.f32.mrb[0].mxu0
        %1844 = vmatprep.mubr.bf16.mxu0 0
        %1845 = vmatmul.mubr.bf16.gmra.mrb[0].mxu0 %v1626
        %v1846 = vpop.f32.mrb[0].mxu0
        %v1847 = vadd.f32 0.0, %v1846
        %v1848 = vpop.f32.mrb[0].mxu0
        %v1849 = vpop.f32.mrb[0].mxu0
        %v1850 = vadd.f32 0.0, %v1849
        %v1851 = vpop.f32.mrb[0].mxu0
        %1852 = vdwg.mxu0
        %v1853 = vadd.f32 %v1372, %v1727
        %v1854 = vadd.f32 %v1375, %v1730
        %v1855 = vadd.f32 %v1380, %v1735
        %v1856 = vadd.f32 %v1383, %v1738
        %v1857 = vadd.f32 %v1388, %v1743
        %v1858 = vadd.f32 %v1391, %v1746
        %v1859 = vadd.f32 %v1396, %v1751
        %v1860 = vadd.f32 %v1399, %v1754
        %v1861 = vadd.f32 %v1404, %v1759
        %v1862 = vadd.f32 %v1407, %v1762
        %v1863 = vadd.f32 %v1412, %v1767
        %v1864 = vadd.f32 %v1415, %v1770
        %v1865 = vadd.f32 %v1420, %v1775
        %v1866 = vadd.f32 %v1423, %v1778
        %v1867 = vadd.f32 %v1428, %v1783
        %v1868 = vadd.f32 %v1431, %v1786
        %v1869 = vadd.f32 %v1436, %v1791
        %v1870 = vadd.f32 %v1439, %v1794
        %v1871 = vadd.f32 %v1444, %v1799
        %v1872 = vadd.f32 %v1447, %v1802
        %v1873 = vadd.f32 %v1452, %v1807
        %v1874 = vadd.f32 %v1455, %v1810
        %v1875 = vadd.f32 %v1460, %v1815
        %v1876 = vadd.f32 %v1463, %v1818
        %v1877 = vadd.f32 %v1468, %v1823
        %v1878 = vadd.f32 %v1471, %v1826
        %v1879 = vadd.f32 %v1476, %v1831
        %v1880 = vadd.f32 %v1479, %v1834
        %v1881 = vadd.f32 %v1484, %v1839
        %v1882 = vadd.f32 %v1487, %v1842
        %v1883 = vadd.f32 %v1492, %v1847
        %v1884 = vadd.f32 %v1495, %v1850
        %v1885 = vld [vmem:[%s349] sm:$0xff]
        %v1886 = vld [vmem:[%s349 + $0x8] sm:$0xff]
        %v1887 = vld [vmem:[%s349 + $0x10] sm:$0xff]
        %v1888 = vld [vmem:[%s349 + $0x18] sm:$0xff]
        %v1889 = vld [vmem:[%s349 + $0x20] sm:$0xff]
        %v1890 = vld [vmem:[%s349 + $0x28] sm:$0xff]
        %v1891 = vld [vmem:[%s349 + $0x30] sm:$0xff]
        %v1892 = vld [vmem:[%s349 + $0x38] sm:$0xff]
        %v1893 = vld [vmem:[%s349 + $0x40] sm:$0xff]
        %v1894 = vld [vmem:[%s349 + $0x48] sm:$0xff]
        %v1895 = vld [vmem:[%s349 + $0x50] sm:$0xff]
        %v1896 = vld [vmem:[%s349 + $0x58] sm:$0xff]
        %v1897 = vld [vmem:[%s349 + $0x60] sm:$0xff]
        %v1898 = vld [vmem:[%s349 + $0x68] sm:$0xff]
        %v1899 = vld [vmem:[%s349 + $0x70] sm:$0xff]
        %v1900 = vld [vmem:[%s349 + $0x78] sm:$0xff]
        %v1901 = vld [vmem:[%s349 + $0x80] sm:$0xff]
        %v1902 = vld [vmem:[%s349 + $0x88] sm:$0xff]
        %v1903 = vld [vmem:[%s349 + $0x90] sm:$0xff]
        %v1904 = vld [vmem:[%s349 + $0x98] sm:$0xff]
        %v1905 = vld [vmem:[%s349 + $0xa0] sm:$0xff]
        %v1906 = vld [vmem:[%s349 + $0xa8] sm:$0xff]
        %v1907 = vld [vmem:[%s349 + $0xb0] sm:$0xff]
        %v1908 = vld [vmem:[%s349 + $0xb8] sm:$0xff]
        %v1909 = vld [vmem:[%s349 + $0xc0] sm:$0xff]
        %v1910 = vld [vmem:[%s349 + $0xc8] sm:$0xff]
        %v1911 = vld [vmem:[%s349 + $0xd0] sm:$0xff]
        %v1912 = vld [vmem:[%s349 + $0xd8] sm:$0xff]
        %v1913 = vld [vmem:[%s349 + $0xe0] sm:$0xff]
        %v1914 = vld [vmem:[%s349 + $0xe8] sm:$0xff]
        %v1915 = vld [vmem:[%s349 + $0xf0] sm:$0xff]
        %v1916 = vld [vmem:[%s349 + $0xf8] sm:$0xff]
        %v1917 = vld [vmem:[%s349 + $0x100] sm:$0xff]
        %v1918 = vld [vmem:[%s349 + $0x108] sm:$0xff]
        %v1919 = vld [vmem:[%s349 + $0x110] sm:$0xff]
        %v1920 = vld [vmem:[%s349 + $0x118] sm:$0xff]
        %v1921 = vld [vmem:[%s349 + $0x120] sm:$0xff]
        %v1922 = vld [vmem:[%s349 + $0x128] sm:$0xff]
        %v1923 = vld [vmem:[%s349 + $0x130] sm:$0xff]
        %v1924 = vld [vmem:[%s349 + $0x138] sm:$0xff]
        %v1925 = vld [vmem:[%s349 + $0x140] sm:$0xff]
        %v1926 = vld [vmem:[%s349 + $0x148] sm:$0xff]
        %v1927 = vld [vmem:[%s349 + $0x150] sm:$0xff]
        %v1928 = vld [vmem:[%s349 + $0x158] sm:$0xff]
        %v1929 = vld [vmem:[%s349 + $0x160] sm:$0xff]
        %v1930 = vld [vmem:[%s349 + $0x168] sm:$0xff]
        %v1931 = vld [vmem:[%s349 + $0x170] sm:$0xff]
        %v1932 = vld [vmem:[%s349 + $0x178] sm:$0xff]
        %v1933 = vpack.c.bf16 %v1886, %v1885
        %v1934 = vpack.c.bf16 %v1889, %v1888
        %v1935 = vpack.c.bf16 %v1892, %v1891
        %v1936 = vpack.c.bf16 %v1895, %v1894
        %v1937 = vpack.c.bf16 %v1898, %v1897
        %v1938 = vpack.c.bf16 %v1901, %v1900
        %v1939 = vpack.c.bf16 %v1904, %v1903
        %v1940 = vpack.c.bf16 %v1907, %v1906
        %v1941 = vpack.c.bf16 %v1910, %v1909
        %v1942 = vpack.c.bf16 %v1913, %v1912
        %v1943 = vpack.c.bf16 %v1916, %v1915
        %v1944 = vpack.c.bf16 %v1919, %v1918
        %v1945 = vpack.c.bf16 %v1922, %v1921
        %v1946 = vpack.c.bf16 %v1925, %v1924
        %v1947 = vpack.c.bf16 %v1928, %v1927
        %v1948 = vpack.c.bf16 %v1931, %v1930
        %s1949 = scalar_lea.vmem [#allocation8], 192
        %v1950 = vld [vmem:[%s1949] sm:$0xf]
        %v1951 = vld [vmem:[%s1949 + $0x4] sm:$0xf]
        %v1952 = vld [vmem:[%s1949 + $0x8] sm:$0xf]
        %v1953 = vld [vmem:[%s1949 + $0xc] sm:$0xf]
        %v1954 = vld [vmem:[%s1949 + $0x10] sm:$0xf]
        %v1955 = vld [vmem:[%s1949 + $0x14] sm:$0xf]
        %v1956 = vld [vmem:[%s1949 + $0x18] sm:$0xf]
        %v1957 = vld [vmem:[%s1949 + $0x1c] sm:$0xf]
        %v1958 = vld [vmem:[%s1949 + $0x20] sm:$0xf]
        %v1959 = vld [vmem:[%s1949 + $0x24] sm:$0xf]
        %v1960 = vld [vmem:[%s1949 + $0x28] sm:$0xf]
        %v1961 = vld [vmem:[%s1949 + $0x2c] sm:$0xf]
        %v1962 = vld [vmem:[%s1949 + $0x30] sm:$0xf]
        %v1963 = vld [vmem:[%s1949 + $0x34] sm:$0xf]
        %v1964 = vld [vmem:[%s1949 + $0x38] sm:$0xf]
        %v1965 = vld [vmem:[%s1949 + $0x3c] sm:$0xf]
        %v1982 = vunpack.c.l.b16 %v1950
        %v1983 = vunpack.c.l.b16 %v1951
        %v1984 = vunpack.c.l.b16 %v1952
        %v1985 = vunpack.c.l.b16 %v1953
        %v1986 = vunpack.c.l.b16 %v1954
        %v1987 = vunpack.c.l.b16 %v1955
        %v1988 = vunpack.c.l.b16 %v1956
        %v1989 = vunpack.c.l.b16 %v1957
        %v1990 = vunpack.c.l.b16 %v1958
        %v1991 = vunpack.c.l.b16 %v1959
        %v1992 = vunpack.c.l.b16 %v1960
        %v1993 = vunpack.c.l.b16 %v1961
        %v1994 = vunpack.c.l.b16 %v1962
        %v1995 = vunpack.c.l.b16 %v1963
        %v1996 = vunpack.c.l.b16 %v1964
        %v1997 = vunpack.c.l.b16 %v1965
        %v1998 = vpack.c.b16 %v1983, %v1982
        %v1999 = vpack.c.b16 %v1985, %v1984
        %v2000 = vpack.c.b16 %v1987, %v1986
        %v2001 = vpack.c.b16 %v1989, %v1988
        %v2002 = vpack.c.b16 %v1991, %v1990
        %v2003 = vpack.c.b16 %v1993, %v1992
        %v2004 = vpack.c.b16 %v1995, %v1994
        %v2005 = vpack.c.b16 %v1997, %v1996
        %2014 = vmatprep.subr.bf16.mxu0 0
        %2015 = vmatpush1.bf16.msra.mxu0 %v1998
        %2016 = vmatprep.subr.bf16.mxu0 0
        %2017 = vmatpush1.bf16.msra.mxu0 %v1999
        %2018 = vmatprep.subr.bf16.mxu0 0
        %2019 = vmatpush1.bf16.msra.mxu0 %v2000
        %2020 = vmatprep.subr.bf16.mxu0 0
        %2021 = vmatpush1.bf16.msra.mxu0 %v2001
        %2022 = vmatprep.subr.bf16.mxu0 0
        %2023 = vmatpush1.bf16.msra.mxu0 %v2002
        %2024 = vmatprep.subr.bf16.mxu0 0
        %2025 = vmatpush1.bf16.msra.mxu0 %v2003
        %2026 = vmatprep.subr.bf16.mxu0 0
        %2027 = vmatpush1.bf16.msra.mxu0 %v2004
        %2028 = vmatprep.subr.bf16.mxu0 0
        %2029 = vmatpush1.bf16.msra.mxu0 %v2005
        %2030 = vmatprep.subr.bf16.mxu0 0
        %2031 = vmatpush1.bf16.msra.mxu0 0
        %2032 = vmatprep.subr.bf16.mxu0 0
        %2033 = vmatpush1.bf16.msra.mxu0 0
        %2034 = vmatprep.subr.bf16.mxu0 0
        %2035 = vmatpush1.bf16.msra.mxu0 0
        %2036 = vmatprep.subr.bf16.mxu0 0
        %2037 = vmatpush1.bf16.msra.mxu0 0
        %2038 = vmatprep.subr.bf16.mxu0 0
        %2039 = vmatpush1.bf16.msra.mxu0 0
        %2040 = vmatprep.subr.bf16.mxu0 0
        %2041 = vmatpush1.bf16.msra.mxu0 0
        %2042 = vmatprep.subr.bf16.mxu0 0
        %2043 = vmatpush1.bf16.msra.mxu0 0
        %2044 = vmatprep.subr.bf16.mxu0 0
        %2045 = vmatpush1.bf16.msra.mxu0 0
        %2046 = vmatprep.mubr.bf16.mxu0 0
        %2047 = vmatmul.mubr.bf16.gmra.mrb[0].mxu0 %v1933
        %v2048 = vpop.f32.mrb[0].mxu0
        %v2049 = vadd.f32 0.0, %v2048
        %v2050 = vpop.f32.mrb[0].mxu0
        %v2051 = vpop.f32.mrb[0].mxu0
        %v2052 = vadd.f32 0.0, %v2051
        %v2053 = vpop.f32.mrb[0].mxu0
        %2054 = vmatprep.mubr.bf16.mxu0 0
        %2055 = vmatmul.mubr.bf16.gmra.mrb[0].mxu0 %v1934
        %v2056 = vpop.f32.mrb[0].mxu0
        %v2057 = vadd.f32 0.0, %v2056
        %v2058 = vpop.f32.mrb[0].mxu0
        %v2059 = vpop.f32.mrb[0].mxu0
        %v2060 = vadd.f32 0.0, %v2059
        %v2061 = vpop.f32.mrb[0].mxu0
        %2062 = vmatprep.mubr.bf16.mxu0 0
        %2063 = vmatmul.mubr.bf16.gmra.mrb[0].mxu0 %v1935
        %v2064 = vpop.f32.mrb[0].mxu0
        %v2065 = vadd.f32 0.0, %v2064
        %v2066 = vpop.f32.mrb[0].mxu0
        %v2067 = vpop.f32.mrb[0].mxu0
        %v2068 = vadd.f32 0.0, %v2067
        %v2069 = vpop.f32.mrb[0].mxu0
        %2070 = vmatprep.mubr.bf16.mxu0 0
        %2071 = vmatmul.mubr.bf16.gmra.mrb[0].mxu0 %v1936
        %v2072 = vpop.f32.mrb[0].mxu0
        %v2073 = vadd.f32 0.0, %v2072
        %v2074 = vpop.f32.mrb[0].mxu0
        %v2075 = vpop.f32.mrb[0].mxu0
        %v2076 = vadd.f32 0.0, %v2075
        %v2077 = vpop.f32.mrb[0].mxu0
        %2078 = vmatprep.mubr.bf16.mxu0 0
        %2079 = vmatmul.mubr.bf16.gmra.mrb[0].mxu0 %v1937
        %v2080 = vpop.f32.mrb[0].mxu0
        %v2081 = vadd.f32 0.0, %v2080
        %v2082 = vpop.f32.mrb[0].mxu0
        %v2083 = vpop.f32.mrb[0].mxu0
        %v2084 = vadd.f32 0.0, %v2083
        %v2085 = vpop.f32.mrb[0].mxu0
        %2086 = vmatprep.mubr.bf16.mxu0 0
        %2087 = vmatmul.mubr.bf16.gmra.mrb[0].mxu0 %v1938
        %v2088 = vpop.f32.mrb[0].mxu0
        %v2089 = vadd.f32 0.0, %v2088
        %v2090 = vpop.f32.mrb[0].mxu0
        %v2091 = vpop.f32.mrb[0].mxu0
        %v2092 = vadd.f32 0.0, %v2091
        %v2093 = vpop.f32.mrb[0].mxu0
        %2094 = vmatprep.mubr.bf16.mxu0 0
        %2095 = vmatmul.mubr.bf16.gmra.mrb[0].mxu0 %v1939
        %v2096 = vpop.f32.mrb[0].mxu0
        %v2097 = vadd.f32 0.0, %v2096
        %v2098 = vpop.f32.mrb[0].mxu0
        %v2099 = vpop.f32.mrb[0].mxu0
        %v2100 = vadd.f32 0.0, %v2099
        %v2101 = vpop.f32.mrb[0].mxu0
        %2102 = vmatprep.mubr.bf16.mxu0 0
        %2103 = vmatmul.mubr.bf16.gmra.mrb[0].mxu0 %v1940
        %v2104 = vpop.f32.mrb[0].mxu0
        %v2105 = vadd.f32 0.0, %v2104
        %v2106 = vpop.f32.mrb[0].mxu0
        %v2107 = vpop.f32.mrb[0].mxu0
        %v2108 = vadd.f32 0.0, %v2107
        %v2109 = vpop.f32.mrb[0].mxu0
        %2110 = vmatprep.mubr.bf16.mxu0 0
        %2111 = vmatmul.mubr.bf16.gmra.mrb[0].mxu0 %v1941
        %v2112 = vpop.f32.mrb[0].mxu0
        %v2113 = vadd.f32 0.0, %v2112
        %v2114 = vpop.f32.mrb[0].mxu0
        %v2115 = vpop.f32.mrb[0].mxu0
        %v2116 = vadd.f32 0.0, %v2115
        %v2117 = vpop.f32.mrb[0].mxu0
        %2118 = vmatprep.mubr.bf16.mxu0 0
        %2119 = vmatmul.mubr.bf16.gmra.mrb[0].mxu0 %v1942
        %v2120 = vpop.f32.mrb[0].mxu0
        %v2121 = vadd.f32 0.0, %v2120
        %v2122 = vpop.f32.mrb[0].mxu0
        %v2123 = vpop.f32.mrb[0].mxu0
        %v2124 = vadd.f32 0.0, %v2123
        %v2125 = vpop.f32.mrb[0].mxu0
        %2126 = vmatprep.mubr.bf16.mxu0 0
        %2127 = vmatmul.mubr.bf16.gmra.mrb[0].mxu0 %v1943
        %v2128 = vpop.f32.mrb[0].mxu0
        %v2129 = vadd.f32 0.0, %v2128
        %v2130 = vpop.f32.mrb[0].mxu0
        %v2131 = vpop.f32.mrb[0].mxu0
        %v2132 = vadd.f32 0.0, %v2131
        %v2133 = vpop.f32.mrb[0].mxu0
        %2134 = vmatprep.mubr.bf16.mxu0 0
        %2135 = vmatmul.mubr.bf16.gmra.mrb[0].mxu0 %v1944
        %v2136 = vpop.f32.mrb[0].mxu0
        %v2137 = vadd.f32 0.0, %v2136
        %v2138 = vpop.f32.mrb[0].mxu0
        %v2139 = vpop.f32.mrb[0].mxu0
        %v2140 = vadd.f32 0.0, %v2139
        %v2141 = vpop.f32.mrb[0].mxu0
        %2142 = vmatprep.mubr.bf16.mxu0 0
        %2143 = vmatmul.mubr.bf16.gmra.mrb[0].mxu0 %v1945
        %v2144 = vpop.f32.mrb[0].mxu0
        %v2145 = vadd.f32 0.0, %v2144
        %v2146 = vpop.f32.mrb[0].mxu0
        %v2147 = vpop.f32.mrb[0].mxu0
        %v2148 = vadd.f32 0.0, %v2147
        %v2149 = vpop.f32.mrb[0].mxu0
        %2150 = vmatprep.mubr.bf16.mxu0 0
        %2151 = vmatmul.mubr.bf16.gmra.mrb[0].mxu0 %v1946
        %v2152 = vpop.f32.mrb[0].mxu0
        %v2153 = vadd.f32 0.0, %v2152
        %v2154 = vpop.f32.mrb[0].mxu0
        %v2155 = vpop.f32.mrb[0].mxu0
        %v2156 = vadd.f32 0.0, %v2155
        %v2157 = vpop.f32.mrb[0].mxu0
        %2158 = vmatprep.mubr.bf16.mxu0 0
        %2159 = vmatmul.mubr.bf16.gmra.mrb[0].mxu0 %v1947
        %v2160 = vpop.f32.mrb[0].mxu0
        %v2161 = vadd.f32 0.0, %v2160
        %v2162 = vpop.f32.mrb[0].mxu0
        %v2163 = vpop.f32.mrb[0].mxu0
        %v2164 = vadd.f32 0.0, %v2163
        %v2165 = vpop.f32.mrb[0].mxu0
        %2166 = vmatprep.mubr.bf16.mxu0 0
        %2167 = vmatmul.mubr.bf16.gmra.mrb[0].mxu0 %v1948
        %v2168 = vpop.f32.mrb[0].mxu0
        %v2169 = vadd.f32 0.0, %v2168
        %v2170 = vpop.f32.mrb[0].mxu0
        %v2171 = vpop.f32.mrb[0].mxu0
        %v2172 = vadd.f32 0.0, %v2171
        %v2173 = vpop.f32.mrb[0].mxu0
        %2174 = vdwg.mxu0
        %v2175 = vadd.f32 %v1853, %v2049
        %v2176 = vadd.f32 %v1854, %v2052
        %v2177 = vadd.f32 %v1855, %v2057
        %v2178 = vadd.f32 %v1856, %v2060
        %v2179 = vadd.f32 %v1857, %v2065
        %v2180 = vadd.f32 %v1858, %v2068
        %v2181 = vadd.f32 %v1859, %v2073
        %v2182 = vadd.f32 %v1860, %v2076
        %v2183 = vadd.f32 %v1861, %v2081
        %v2184 = vadd.f32 %v1862, %v2084
        %v2185 = vadd.f32 %v1863, %v2089
        %v2186 = vadd.f32 %v1864, %v2092
        %v2187 = vadd.f32 %v1865, %v2097
        %v2188 = vadd.f32 %v1866, %v2100
        %v2189 = vadd.f32 %v1867, %v2105
        %v2190 = vadd.f32 %v1868, %v2108
        %v2191 = vadd.f32 %v1869, %v2113
        %v2192 = vadd.f32 %v1870, %v2116
        %v2193 = vadd.f32 %v1871, %v2121
        %v2194 = vadd.f32 %v1872, %v2124
        %v2195 = vadd.f32 %v1873, %v2129
        %v2196 = vadd.f32 %v1874, %v2132
        %v2197 = vadd.f32 %v1875, %v2137
        %v2198 = vadd.f32 %v1876, %v2140
        %v2199 = vadd.f32 %v1877, %v2145
        %v2200 = vadd.f32 %v1878, %v2148
        %v2201 = vadd.f32 %v1879, %v2153
        %v2202 = vadd.f32 %v1880, %v2156
        %v2203 = vadd.f32 %v1881, %v2161
        %v2204 = vadd.f32 %v1882, %v2164
        %v2205 = vadd.f32 %v1883, %v2169
        %v2206 = vadd.f32 %v1884, %v2172
        %v2255 = vrot.slane %v1885, 1
        %v2256 = vrot.slane %v1886, 1
        %v2257 = vsel %vm934, %v2255, %v2256
        %v2258 = vrot.slane %v1887, 1
        %v2259 = vsel %vm934, %v2256, %v2258
        %v2260 = vrot.slane %v1888, 1
        %v2261 = vrot.slane %v1889, 1
        %v2262 = vsel %vm934, %v2260, %v2261
        %v2263 = vrot.slane %v1890, 1
        %v2264 = vsel %vm934, %v2261, %v2263
        %v2265 = vrot.slane %v1891, 1
        %v2266 = vrot.slane %v1892, 1
        %v2267 = vsel %vm934, %v2265, %v2266
        %v2268 = vrot.slane %v1893, 1
        %v2269 = vsel %vm934, %v2266, %v2268
        %v2270 = vrot.slane %v1894, 1
        %v2271 = vrot.slane %v1895, 1
        %v2272 = vsel %vm934, %v2270, %v2271
        %v2273 = vrot.slane %v1896, 1
        %v2274 = vsel %vm934, %v2271, %v2273
        %v2275 = vrot.slane %v1897, 1
        %v2276 = vrot.slane %v1898, 1
        %v2277 = vsel %vm934, %v2275, %v2276
        %v2278 = vrot.slane %v1899, 1
        %v2279 = vsel %vm934, %v2276, %v2278
        %v2280 = vrot.slane %v1900, 1
        %v2281 = vrot.slane %v1901, 1
        %v2282 = vsel %vm934, %v2280, %v2281
        %v2283 = vrot.slane %v1902, 1
        %v2284 = vsel %vm934, %v2281, %v2283
        %v2285 = vrot.slane %v1903, 1
        %v2286 = vrot.slane %v1904, 1
        %v2287 = vsel %vm934, %v2285, %v2286
        %v2288 = vrot.slane %v1905, 1
        %v2289 = vsel %vm934, %v2286, %v2288
        %v2290 = vrot.slane %v1906, 1
        %v2291 = vrot.slane %v1907, 1
        %v2292 = vsel %vm934, %v2290, %v2291
        %v2293 = vrot.slane %v1908, 1
        %v2294 = vsel %vm934, %v2291, %v2293
        %v2295 = vrot.slane %v1909, 1
        %v2296 = vrot.slane %v1910, 1
        %v2297 = vsel %vm934, %v2295, %v2296
        %v2298 = vrot.slane %v1911, 1
        %v2299 = vsel %vm934, %v2296, %v2298
        %v2300 = vrot.slane %v1912, 1
        %v2301 = vrot.slane %v1913, 1
        %v2302 = vsel %vm934, %v2300, %v2301
        %v2303 = vrot.slane %v1914, 1
        %v2304 = vsel %vm934, %v2301, %v2303
        %v2305 = vrot.slane %v1915, 1
        %v2306 = vrot.slane %v1916, 1
        %v2307 = vsel %vm934, %v2305, %v2306
        %v2308 = vrot.slane %v1917, 1
        %v2309 = vsel %vm934, %v2306, %v2308
        %v2310 = vrot.slane %v1918, 1
        %v2311 = vrot.slane %v1919, 1
        %v2312 = vsel %vm934, %v2310, %v2311
        %v2313 = vrot.slane %v1920, 1
        %v2314 = vsel %vm934, %v2311, %v2313
        %v2315 = vrot.slane %v1921, 1
        %v2316 = vrot.slane %v1922, 1
        %v2317 = vsel %vm934, %v2315, %v2316
        %v2318 = vrot.slane %v1923, 1
        %v2319 = vsel %vm934, %v2316, %v2318
        %v2320 = vrot.slane %v1924, 1
        %v2321 = vrot.slane %v1925, 1
        %v2322 = vsel %vm934, %v2320, %v2321
        %v2323 = vrot.slane %v1926, 1
        %v2324 = vsel %vm934, %v2321, %v2323
        %v2325 = vrot.slane %v1927, 1
        %v2326 = vrot.slane %v1928, 1
        %v2327 = vsel %vm934, %v2325, %v2326
        %v2328 = vrot.slane %v1929, 1
        %v2329 = vsel %vm934, %v2326, %v2328
        %v2330 = vrot.slane %v1930, 1
        %v2331 = vrot.slane %v1931, 1
        %v2332 = vsel %vm934, %v2330, %v2331
        %v2333 = vrot.slane %v1932, 1
        %v2334 = vsel %vm934, %v2331, %v2333
        %v2367 = vpack.c.bf16 %v2259, %v2257
        %v2368 = vpack.c.bf16 %v2264, %v2262
        %v2369 = vpack.c.bf16 %v2269, %v2267
        %v2370 = vpack.c.bf16 %v2274, %v2272
        %v2371 = vpack.c.bf16 %v2279, %v2277
        %v2372 = vpack.c.bf16 %v2284, %v2282
        %v2373 = vpack.c.bf16 %v2289, %v2287
        %v2374 = vpack.c.bf16 %v2294, %v2292
        %v2375 = vpack.c.bf16 %v2299, %v2297
        %v2376 = vpack.c.bf16 %v2304, %v2302
        %v2377 = vpack.c.bf16 %v2309, %v2307
        %v2378 = vpack.c.bf16 %v2314, %v2312
        %v2379 = vpack.c.bf16 %v2319, %v2317
        %v2380 = vpack.c.bf16 %v2324, %v2322
        %v2381 = vpack.c.bf16 %v2329, %v2327
        %v2382 = vpack.c.bf16 %v2334, %v2332
        %s2383 = scalar_lea.vmem [#allocation8], 256
        %v2384 = vld [vmem:[%s2383] sm:$0xf]
        %v2385 = vld [vmem:[%s2383 + $0x4] sm:$0xf]
        %v2386 = vld [vmem:[%s2383 + $0x8] sm:$0xf]
        %v2387 = vld [vmem:[%s2383 + $0xc] sm:$0xf]
        %v2388 = vld [vmem:[%s2383 + $0x10] sm:$0xf]
        %v2389 = vld [vmem:[%s2383 + $0x14] sm:$0xf]
        %v2390 = vld [vmem:[%s2383 + $0x18] sm:$0xf]
        %v2391 = vld [vmem:[%s2383 + $0x1c] sm:$0xf]
        %v2392 = vld [vmem:[%s2383 + $0x20] sm:$0xf]
        %v2393 = vld [vmem:[%s2383 + $0x24] sm:$0xf]
        %v2394 = vld [vmem:[%s2383 + $0x28] sm:$0xf]
        %v2395 = vld [vmem:[%s2383 + $0x2c] sm:$0xf]
        %v2396 = vld [vmem:[%s2383 + $0x30] sm:$0xf]
        %v2397 = vld [vmem:[%s2383 + $0x34] sm:$0xf]
        %v2398 = vld [vmem:[%s2383 + $0x38] sm:$0xf]
        %v2399 = vld [vmem:[%s2383 + $0x3c] sm:$0xf]
        %v2416 = vunpack.c.l.b16 %v2384
        %v2417 = vunpack.c.l.b16 %v2385
        %v2418 = vunpack.c.l.b16 %v2386
        %v2419 = vunpack.c.l.b16 %v2387
        %v2420 = vunpack.c.l.b16 %v2388
        %v2421 = vunpack.c.l.b16 %v2389
        %v2422 = vunpack.c.l.b16 %v2390
        %v2423 = vunpack.c.l.b16 %v2391
        %v2424 = vunpack.c.l.b16 %v2392
        %v2425 = vunpack.c.l.b16 %v2393
        %v2426 = vunpack.c.l.b16 %v2394
        %v2427 = vunpack.c.l.b16 %v2395
        %v2428 = vunpack.c.l.b16 %v2396
        %v2429 = vunpack.c.l.b16 %v2397
        %v2430 = vunpack.c.l.b16 %v2398
        %v2431 = vunpack.c.l.b16 %v2399
        %v2432 = vpack.c.b16 %v2417, %v2416
        %v2433 = vpack.c.b16 %v2419, %v2418
        %v2434 = vpack.c.b16 %v2421, %v2420
        %v2435 = vpack.c.b16 %v2423, %v2422
        %v2436 = vpack.c.b16 %v2425, %v2424
        %v2437 = vpack.c.b16 %v2427, %v2426
        %v2438 = vpack.c.b16 %v2429, %v2428
        %v2439 = vpack.c.b16 %v2431, %v2430
        %2448 = vmatprep.subr.bf16.mxu0 0
        %2449 = vmatpush1.bf16.msra.mxu0 %v2432
        %2450 = vmatprep.subr.bf16.mxu0 0
        %2451 = vmatpush1.bf16.msra.mxu0 %v2433
        %2452 = vmatprep.subr.bf16.mxu0 0
        %2453 = vmatpush1.bf16.msra.mxu0 %v2434
        %2454 = vmatprep.subr.bf16.mxu0 0
        %2455 = vmatpush1.bf16.msra.mxu0 %v2435
        %2456 = vmatprep.subr.bf16.mxu0 0
        %2457 = vmatpush1.bf16.msra.mxu0 %v2436
        %2458 = vmatprep.subr.bf16.mxu0 0
        %2459 = vmatpush1.bf16.msra.mxu0 %v2437
        %2460 = vmatprep.subr.bf16.mxu0 0
        %2461 = vmatpush1.bf16.msra.mxu0 %v2438
        %2462 = vmatprep.subr.bf16.mxu0 0
        %2463 = vmatpush1.bf16.msra.mxu0 %v2439
        %2464 = vmatprep.subr.bf16.mxu0 0
        %2465 = vmatpush1.bf16.msra.mxu0 0
        %2466 = vmatprep.subr.bf16.mxu0 0
        %2467 = vmatpush1.bf16.msra.mxu0 0
        %2468 = vmatprep.subr.bf16.mxu0 0
        %2469 = vmatpush1.bf16.msra.mxu0 0
        %2470 = vmatprep.subr.bf16.mxu0 0
        %2471 = vmatpush1.bf16.msra.mxu0 0
        %2472 = vmatprep.subr.bf16.mxu0 0
        %2473 = vmatpush1.bf16.msra.mxu0 0
        %2474 = vmatprep.subr.bf16.mxu0 0
        %2475 = vmatpush1.bf16.msra.mxu0 0
        %2476 = vmatprep.subr.bf16.mxu0 0
        %2477 = vmatpush1.bf16.msra.mxu0 0
        %2478 = vmatprep.subr.bf16.mxu0 0
        %2479 = vmatpush1.bf16.msra.mxu0 0
        %2480 = vmatprep.mubr.bf16.mxu0 0
        %2481 = vmatmul.mubr.bf16.gmra.mrb[0].mxu0 %v2367
        %v2482 = vpop.f32.mrb[0].mxu0
        %v2483 = vadd.f32 0.0, %v2482
        %v2484 = vpop.f32.mrb[0].mxu0
        %v2485 = vpop.f32.mrb[0].mxu0
        %v2486 = vadd.f32 0.0, %v2485
        %v2487 = vpop.f32.mrb[0].mxu0
        %2488 = vmatprep.mubr.bf16.mxu0 0
        %2489 = vmatmul.mubr.bf16.gmra.mrb[0].mxu0 %v2368
        %v2490 = vpop.f32.mrb[0].mxu0
        %v2491 = vadd.f32 0.0, %v2490
        %v2492 = vpop.f32.mrb[0].mxu0
        %v2493 = vpop.f32.mrb[0].mxu0
        %v2494 = vadd.f32 0.0, %v2493
        %v2495 = vpop.f32.mrb[0].mxu0
        %2496 = vmatprep.mubr.bf16.mxu0 0
        %2497 = vmatmul.mubr.bf16.gmra.mrb[0].mxu0 %v2369
        %v2498 = vpop.f32.mrb[0].mxu0
        %v2499 = vadd.f32 0.0, %v2498
        %v2500 = vpop.f32.mrb[0].mxu0
        %v2501 = vpop.f32.mrb[0].mxu0
        %v2502 = vadd.f32 0.0, %v2501
        %v2503 = vpop.f32.mrb[0].mxu0
        %2504 = vmatprep.mubr.bf16.mxu0 0
        %2505 = vmatmul.mubr.bf16.gmra.mrb[0].mxu0 %v2370
        %v2506 = vpop.f32.mrb[0].mxu0
        %v2507 = vadd.f32 0.0, %v2506
        %v2508 = vpop.f32.mrb[0].mxu0
        %v2509 = vpop.f32.mrb[0].mxu0
        %v2510 = vadd.f32 0.0, %v2509
        %v2511 = vpop.f32.mrb[0].mxu0
        %2512 = vmatprep.mubr.bf16.mxu0 0
        %2513 = vmatmul.mubr.bf16.gmra.mrb[0].mxu0 %v2371
        %v2514 = vpop.f32.mrb[0].mxu0
        %v2515 = vadd.f32 0.0, %v2514
        %v2516 = vpop.f32.mrb[0].mxu0
        %v2517 = vpop.f32.mrb[0].mxu0
        %v2518 = vadd.f32 0.0, %v2517
        %v2519 = vpop.f32.mrb[0].mxu0
        %2520 = vmatprep.mubr.bf16.mxu0 0
        %2521 = vmatmul.mubr.bf16.gmra.mrb[0].mxu0 %v2372
        %v2522 = vpop.f32.mrb[0].mxu0
        %v2523 = vadd.f32 0.0, %v2522
        %v2524 = vpop.f32.mrb[0].mxu0
        %v2525 = vpop.f32.mrb[0].mxu0
        %v2526 = vadd.f32 0.0, %v2525
        %v2527 = vpop.f32.mrb[0].mxu0
        %2528 = vmatprep.mubr.bf16.mxu0 0
        %2529 = vmatmul.mubr.bf16.gmra.mrb[0].mxu0 %v2373
        %v2530 = vpop.f32.mrb[0].mxu0
        %v2531 = vadd.f32 0.0, %v2530
        %v2532 = vpop.f32.mrb[0].mxu0
        %v2533 = vpop.f32.mrb[0].mxu0
        %v2534 = vadd.f32 0.0, %v2533
        %v2535 = vpop.f32.mrb[0].mxu0
        %2536 = vmatprep.mubr.bf16.mxu0 0
        %2537 = vmatmul.mubr.bf16.gmra.mrb[0].mxu0 %v2374
        %v2538 = vpop.f32.mrb[0].mxu0
        %v2539 = vadd.f32 0.0, %v2538
        %v2540 = vpop.f32.mrb[0].mxu0
        %v2541 = vpop.f32.mrb[0].mxu0
        %v2542 = vadd.f32 0.0, %v2541
        %v2543 = vpop.f32.mrb[0].mxu0
        %2544 = vmatprep.mubr.bf16.mxu0 0
        %2545 = vmatmul.mubr.bf16.gmra.mrb[0].mxu0 %v2375
        %v2546 = vpop.f32.mrb[0].mxu0
        %v2547 = vadd.f32 0.0, %v2546
        %v2548 = vpop.f32.mrb[0].mxu0
        %v2549 = vpop.f32.mrb[0].mxu0
        %v2550 = vadd.f32 0.0, %v2549
        %v2551 = vpop.f32.mrb[0].mxu0
        %2552 = vmatprep.mubr.bf16.mxu0 0
        %2553 = vmatmul.mubr.bf16.gmra.mrb[0].mxu0 %v2376
        %v2554 = vpop.f32.mrb[0].mxu0
        %v2555 = vadd.f32 0.0, %v2554
        %v2556 = vpop.f32.mrb[0].mxu0
        %v2557 = vpop.f32.mrb[0].mxu0
        %v2558 = vadd.f32 0.0, %v2557
        %v2559 = vpop.f32.mrb[0].mxu0
        %2560 = vmatprep.mubr.bf16.mxu0 0
        %2561 = vmatmul.mubr.bf16.gmra.mrb[0].mxu0 %v2377
        %v2562 = vpop.f32.mrb[0].mxu0
        %v2563 = vadd.f32 0.0, %v2562
        %v2564 = vpop.f32.mrb[0].mxu0
        %v2565 = vpop.f32.mrb[0].mxu0
        %v2566 = vadd.f32 0.0, %v2565
        %v2567 = vpop.f32.mrb[0].mxu0
        %2568 = vmatprep.mubr.bf16.mxu0 0
        %2569 = vmatmul.mubr.bf16.gmra.mrb[0].mxu0 %v2378
        %v2570 = vpop.f32.mrb[0].mxu0
        %v2571 = vadd.f32 0.0, %v2570
        %v2572 = vpop.f32.mrb[0].mxu0
        %v2573 = vpop.f32.mrb[0].mxu0
        %v2574 = vadd.f32 0.0, %v2573
        %v2575 = vpop.f32.mrb[0].mxu0
        %2576 = vmatprep.mubr.bf16.mxu0 0
        %2577 = vmatmul.mubr.bf16.gmra.mrb[0].mxu0 %v2379
        %v2578 = vpop.f32.mrb[0].mxu0
        %v2579 = vadd.f32 0.0, %v2578
        %v2580 = vpop.f32.mrb[0].mxu0
        %v2581 = vpop.f32.mrb[0].mxu0
        %v2582 = vadd.f32 0.0, %v2581
        %v2583 = vpop.f32.mrb[0].mxu0
        %2584 = vmatprep.mubr.bf16.mxu0 0
        %2585 = vmatmul.mubr.bf16.gmra.mrb[0].mxu0 %v2380
        %v2586 = vpop.f32.mrb[0].mxu0
        %v2587 = vadd.f32 0.0, %v2586
        %v2588 = vpop.f32.mrb[0].mxu0
        %v2589 = vpop.f32.mrb[0].mxu0
        %v2590 = vadd.f32 0.0, %v2589
        %v2591 = vpop.f32.mrb[0].mxu0
        %2592 = vmatprep.mubr.bf16.mxu0 0
        %2593 = vmatmul.mubr.bf16.gmra.mrb[0].mxu0 %v2381
        %v2594 = vpop.f32.mrb[0].mxu0
        %v2595 = vadd.f32 0.0, %v2594
        %v2596 = vpop.f32.mrb[0].mxu0
        %v2597 = vpop.f32.mrb[0].mxu0
        %v2598 = vadd.f32 0.0, %v2597
        %v2599 = vpop.f32.mrb[0].mxu0
        %2600 = vmatprep.mubr.bf16.mxu0 0
        %2601 = vmatmul.mubr.bf16.gmra.mrb[0].mxu0 %v2382
        %v2602 = vpop.f32.mrb[0].mxu0
        %v2603 = vadd.f32 0.0, %v2602
        %v2604 = vpop.f32.mrb[0].mxu0
        %v2605 = vpop.f32.mrb[0].mxu0
        %v2606 = vadd.f32 0.0, %v2605
        %v2607 = vpop.f32.mrb[0].mxu0
        %2608 = vdwg.mxu0
        %v2609 = vadd.f32 %v2175, %v2483
        %v2610 = vadd.f32 %v2176, %v2486
        %v2611 = vadd.f32 %v2177, %v2491
        %v2612 = vadd.f32 %v2178, %v2494
        %v2613 = vadd.f32 %v2179, %v2499
        %v2614 = vadd.f32 %v2180, %v2502
        %v2615 = vadd.f32 %v2181, %v2507
        %v2616 = vadd.f32 %v2182, %v2510
        %v2617 = vadd.f32 %v2183, %v2515
        %v2618 = vadd.f32 %v2184, %v2518
        %v2619 = vadd.f32 %v2185, %v2523
        %v2620 = vadd.f32 %v2186, %v2526
        %v2621 = vadd.f32 %v2187, %v2531
        %v2622 = vadd.f32 %v2188, %v2534
        %v2623 = vadd.f32 %v2189, %v2539
        %v2624 = vadd.f32 %v2190, %v2542
        %v2625 = vadd.f32 %v2191, %v2547
        %v2626 = vadd.f32 %v2192, %v2550
        %v2627 = vadd.f32 %v2193, %v2555
        %v2628 = vadd.f32 %v2194, %v2558
        %v2629 = vadd.f32 %v2195, %v2563
        %v2630 = vadd.f32 %v2196, %v2566
        %v2631 = vadd.f32 %v2197, %v2571
        %v2632 = vadd.f32 %v2198, %v2574
        %v2633 = vadd.f32 %v2199, %v2579
        %v2634 = vadd.f32 %v2200, %v2582
        %v2635 = vadd.f32 %v2201, %v2587
        %v2636 = vadd.f32 %v2202, %v2590
        %v2637 = vadd.f32 %v2203, %v2595
        %v2638 = vadd.f32 %v2204, %v2598
        %v2639 = vadd.f32 %v2205, %v2603
        %v2640 = vadd.f32 %v2206, %v2606
        %v2641 = vrot.slane %v1885, 2
        %v2642 = vrot.slane %v1886, 2
        %v2643 = vsel %vm1498, %v2641, %v2642
        %v2644 = vrot.slane %v1887, 2
        %v2645 = vsel %vm1498, %v2642, %v2644
        %v2646 = vrot.slane %v1888, 2
        %v2647 = vrot.slane %v1889, 2
        %v2648 = vsel %vm1498, %v2646, %v2647
        %v2649 = vrot.slane %v1890, 2
        %v2650 = vsel %vm1498, %v2647, %v2649
        %v2651 = vrot.slane %v1891, 2
        %v2652 = vrot.slane %v1892, 2
        %v2653 = vsel %vm1498, %v2651, %v2652
        %v2654 = vrot.slane %v1893, 2
        %v2655 = vsel %vm1498, %v2652, %v2654
        %v2656 = vrot.slane %v1894, 2
        %v2657 = vrot.slane %v1895, 2
        %v2658 = vsel %vm1498, %v2656, %v2657
        %v2659 = vrot.slane %v1896, 2
        %v2660 = vsel %vm1498, %v2657, %v2659
        %v2661 = vrot.slane %v1897, 2
        %v2662 = vrot.slane %v1898, 2
        %v2663 = vsel %vm1498, %v2661, %v2662
        %v2664 = vrot.slane %v1899, 2
        %v2665 = vsel %vm1498, %v2662, %v2664
        %v2666 = vrot.slane %v1900, 2
        %v2667 = vrot.slane %v1901, 2
        %v2668 = vsel %vm1498, %v2666, %v2667
        %v2669 = vrot.slane %v1902, 2
        %v2670 = vsel %vm1498, %v2667, %v2669
        %v2671 = vrot.slane %v1903, 2
        %v2672 = vrot.slane %v1904, 2
        %v2673 = vsel %vm1498, %v2671, %v2672
        %v2674 = vrot.slane %v1905, 2
        %v2675 = vsel %vm1498, %v2672, %v2674
        %v2676 = vrot.slane %v1906, 2
        %v2677 = vrot.slane %v1907, 2
        %v2678 = vsel %vm1498, %v2676, %v2677
        %v2679 = vrot.slane %v1908, 2
        %v2680 = vsel %vm1498, %v2677, %v2679
        %v2681 = vrot.slane %v1909, 2
        %v2682 = vrot.slane %v1910, 2
        %v2683 = vsel %vm1498, %v2681, %v2682
        %v2684 = vrot.slane %v1911, 2
        %v2685 = vsel %vm1498, %v2682, %v2684
        %v2686 = vrot.slane %v1912, 2
        %v2687 = vrot.slane %v1913, 2
        %v2688 = vsel %vm1498, %v2686, %v2687
        %v2689 = vrot.slane %v1914, 2
        %v2690 = vsel %vm1498, %v2687, %v2689
        %v2691 = vrot.slane %v1915, 2
        %v2692 = vrot.slane %v1916, 2
        %v2693 = vsel %vm1498, %v2691, %v2692
        %v2694 = vrot.slane %v1917, 2
        %v2695 = vsel %vm1498, %v2692, %v2694
        %v2696 = vrot.slane %v1918, 2
        %v2697 = vrot.slane %v1919, 2
        %v2698 = vsel %vm1498, %v2696, %v2697
        %v2699 = vrot.slane %v1920, 2
        %v2700 = vsel %vm1498, %v2697, %v2699
        %v2701 = vrot.slane %v1921, 2
        %v2702 = vrot.slane %v1922, 2
        %v2703 = vsel %vm1498, %v2701, %v2702
        %v2704 = vrot.slane %v1923, 2
        %v2705 = vsel %vm1498, %v2702, %v2704
        %v2706 = vrot.slane %v1924, 2
        %v2707 = vrot.slane %v1925, 2
        %v2708 = vsel %vm1498, %v2706, %v2707
        %v2709 = vrot.slane %v1926, 2
        %v2710 = vsel %vm1498, %v2707, %v2709
        %v2711 = vrot.slane %v1927, 2
        %v2712 = vrot.slane %v1928, 2
        %v2713 = vsel %vm1498, %v2711, %v2712
        %v2714 = vrot.slane %v1929, 2
        %v2715 = vsel %vm1498, %v2712, %v2714
        %v2716 = vrot.slane %v1930, 2
        %v2717 = vrot.slane %v1931, 2
        %v2718 = vsel %vm1498, %v2716, %v2717
        %v2719 = vrot.slane %v1932, 2
        %v2720 = vsel %vm1498, %v2717, %v2719
        %v2753 = vpack.c.bf16 %v2645, %v2643
        %v2754 = vpack.c.bf16 %v2650, %v2648
        %v2755 = vpack.c.bf16 %v2655, %v2653
        %v2756 = vpack.c.bf16 %v2660, %v2658
        %v2757 = vpack.c.bf16 %v2665, %v2663
        %v2758 = vpack.c.bf16 %v2670, %v2668
        %v2759 = vpack.c.bf16 %v2675, %v2673
        %v2760 = vpack.c.bf16 %v2680, %v2678
        %v2761 = vpack.c.bf16 %v2685, %v2683
        %v2762 = vpack.c.bf16 %v2690, %v2688
        %v2763 = vpack.c.bf16 %v2695, %v2693
        %v2764 = vpack.c.bf16 %v2700, %v2698
        %v2765 = vpack.c.bf16 %v2705, %v2703
        %v2766 = vpack.c.bf16 %v2710, %v2708
        %v2767 = vpack.c.bf16 %v2715, %v2713
        %v2768 = vpack.c.bf16 %v2720, %v2718
        %s2769 = scalar_lea.vmem [#allocation8], 320
        %v2770 = vld [vmem:[%s2769] sm:$0xf]
        %v2771 = vld [vmem:[%s2769 + $0x4] sm:$0xf]
        %v2772 = vld [vmem:[%s2769 + $0x8] sm:$0xf]
        %v2773 = vld [vmem:[%s2769 + $0xc] sm:$0xf]
        %v2774 = vld [vmem:[%s2769 + $0x10] sm:$0xf]
        %v2775 = vld [vmem:[%s2769 + $0x14] sm:$0xf]
        %v2776 = vld [vmem:[%s2769 + $0x18] sm:$0xf]
        %v2777 = vld [vmem:[%s2769 + $0x1c] sm:$0xf]
        %v2778 = vld [vmem:[%s2769 + $0x20] sm:$0xf]
        %v2779 = vld [vmem:[%s2769 + $0x24] sm:$0xf]
        %v2780 = vld [vmem:[%s2769 + $0x28] sm:$0xf]
        %v2781 = vld [vmem:[%s2769 + $0x2c] sm:$0xf]
        %v2782 = vld [vmem:[%s2769 + $0x30] sm:$0xf]
        %v2783 = vld [vmem:[%s2769 + $0x34] sm:$0xf]
        %v2784 = vld [vmem:[%s2769 + $0x38] sm:$0xf]
        %v2785 = vld [vmem:[%s2769 + $0x3c] sm:$0xf]
        %v2802 = vunpack.c.l.b16 %v2770
        %v2803 = vunpack.c.l.b16 %v2771
        %v2804 = vunpack.c.l.b16 %v2772
        %v2805 = vunpack.c.l.b16 %v2773
        %v2806 = vunpack.c.l.b16 %v2774
        %v2807 = vunpack.c.l.b16 %v2775
        %v2808 = vunpack.c.l.b16 %v2776
        %v2809 = vunpack.c.l.b16 %v2777
        %v2810 = vunpack.c.l.b16 %v2778
        %v2811 = vunpack.c.l.b16 %v2779
        %v2812 = vunpack.c.l.b16 %v2780
        %v2813 = vunpack.c.l.b16 %v2781
        %v2814 = vunpack.c.l.b16 %v2782
        %v2815 = vunpack.c.l.b16 %v2783
        %v2816 = vunpack.c.l.b16 %v2784
        %v2817 = vunpack.c.l.b16 %v2785
        %v2818 = vpack.c.b16 %v2803, %v2802
        %v2819 = vpack.c.b16 %v2805, %v2804
        %v2820 = vpack.c.b16 %v2807, %v2806
        %v2821 = vpack.c.b16 %v2809, %v2808
        %v2822 = vpack.c.b16 %v2811, %v2810
        %v2823 = vpack.c.b16 %v2813, %v2812
        %v2824 = vpack.c.b16 %v2815, %v2814
        %v2825 = vpack.c.b16 %v2817, %v2816
        %2834 = vmatprep.subr.bf16.mxu0 0
        %2835 = vmatpush1.bf16.msra.mxu0 %v2818
        %2836 = vmatprep.subr.bf16.mxu0 0
        %2837 = vmatpush1.bf16.msra.mxu0 %v2819
        %2838 = vmatprep.subr.bf16.mxu0 0
        %2839 = vmatpush1.bf16.msra.mxu0 %v2820
        %2840 = vmatprep.subr.bf16.mxu0 0
        %2841 = vmatpush1.bf16.msra.mxu0 %v2821
        %2842 = vmatprep.subr.bf16.mxu0 0
        %2843 = vmatpush1.bf16.msra.mxu0 %v2822
        %2844 = vmatprep.subr.bf16.mxu0 0
        %2845 = vmatpush1.bf16.msra.mxu0 %v2823
        %2846 = vmatprep.subr.bf16.mxu0 0
        %2847 = vmatpush1.bf16.msra.mxu0 %v2824
        %2848 = vmatprep.subr.bf16.mxu0 0
        %2849 = vmatpush1.bf16.msra.mxu0 %v2825
        %2850 = vmatprep.subr.bf16.mxu0 0
        %2851 = vmatpush1.bf16.msra.mxu0 0
        %2852 = vmatprep.subr.bf16.mxu0 0
        %2853 = vmatpush1.bf16.msra.mxu0 0
        %2854 = vmatprep.subr.bf16.mxu0 0
        %2855 = vmatpush1.bf16.msra.mxu0 0
        %2856 = vmatprep.subr.bf16.mxu0 0
        %2857 = vmatpush1.bf16.msra.mxu0 0
        %2858 = vmatprep.subr.bf16.mxu0 0
        %2859 = vmatpush1.bf16.msra.mxu0 0
        %2860 = vmatprep.subr.bf16.mxu0 0
        %2861 = vmatpush1.bf16.msra.mxu0 0
        %2862 = vmatprep.subr.bf16.mxu0 0
        %2863 = vmatpush1.bf16.msra.mxu0 0
        %2864 = vmatprep.subr.bf16.mxu0 0
        %2865 = vmatpush1.bf16.msra.mxu0 0
        %2866 = vmatprep.mubr.bf16.mxu0 0
        %2867 = vmatmul.mubr.bf16.gmra.mrb[0].mxu0 %v2753
        %v2868 = vpop.f32.mrb[0].mxu0
        %v2869 = vadd.f32 0.0, %v2868
        %v2870 = vpop.f32.mrb[0].mxu0
        %v2871 = vpop.f32.mrb[0].mxu0
        %v2872 = vadd.f32 0.0, %v2871
        %v2873 = vpop.f32.mrb[0].mxu0
        %2874 = vmatprep.mubr.bf16.mxu0 0
        %2875 = vmatmul.mubr.bf16.gmra.mrb[0].mxu0 %v2754
        %v2876 = vpop.f32.mrb[0].mxu0
        %v2877 = vadd.f32 0.0, %v2876
        %v2878 = vpop.f32.mrb[0].mxu0
        %v2879 = vpop.f32.mrb[0].mxu0
        %v2880 = vadd.f32 0.0, %v2879
        %v2881 = vpop.f32.mrb[0].mxu0
        %2882 = vmatprep.mubr.bf16.mxu0 0
        %2883 = vmatmul.mubr.bf16.gmra.mrb[0].mxu0 %v2755
        %v2884 = vpop.f32.mrb[0].mxu0
        %v2885 = vadd.f32 0.0, %v2884
        %v2886 = vpop.f32.mrb[0].mxu0
        %v2887 = vpop.f32.mrb[0].mxu0
        %v2888 = vadd.f32 0.0, %v2887
        %v2889 = vpop.f32.mrb[0].mxu0
        %2890 = vmatprep.mubr.bf16.mxu0 0
        %2891 = vmatmul.mubr.bf16.gmra.mrb[0].mxu0 %v2756
        %v2892 = vpop.f32.mrb[0].mxu0
        %v2893 = vadd.f32 0.0, %v2892
        %v2894 = vpop.f32.mrb[0].mxu0
        %v2895 = vpop.f32.mrb[0].mxu0
        %v2896 = vadd.f32 0.0, %v2895
        %v2897 = vpop.f32.mrb[0].mxu0
        %2898 = vmatprep.mubr.bf16.mxu0 0
        %2899 = vmatmul.mubr.bf16.gmra.mrb[0].mxu0 %v2757
        %v2900 = vpop.f32.mrb[0].mxu0
        %v2901 = vadd.f32 0.0, %v2900
        %v2902 = vpop.f32.mrb[0].mxu0
        %v2903 = vpop.f32.mrb[0].mxu0
        %v2904 = vadd.f32 0.0, %v2903
        %v2905 = vpop.f32.mrb[0].mxu0
        %2906 = vmatprep.mubr.bf16.mxu0 0
        %2907 = vmatmul.mubr.bf16.gmra.mrb[0].mxu0 %v2758
        %v2908 = vpop.f32.mrb[0].mxu0
        %v2909 = vadd.f32 0.0, %v2908
        %v2910 = vpop.f32.mrb[0].mxu0
        %v2911 = vpop.f32.mrb[0].mxu0
        %v2912 = vadd.f32 0.0, %v2911
        %v2913 = vpop.f32.mrb[0].mxu0
        %2914 = vmatprep.mubr.bf16.mxu0 0
        %2915 = vmatmul.mubr.bf16.gmra.mrb[0].mxu0 %v2759
        %v2916 = vpop.f32.mrb[0].mxu0
        %v2917 = vadd.f32 0.0, %v2916
        %v2918 = vpop.f32.mrb[0].mxu0
        %v2919 = vpop.f32.mrb[0].mxu0
        %v2920 = vadd.f32 0.0, %v2919
        %v2921 = vpop.f32.mrb[0].mxu0
        %2922 = vmatprep.mubr.bf16.mxu0 0
        %2923 = vmatmul.mubr.bf16.gmra.mrb[0].mxu0 %v2760
        %v2924 = vpop.f32.mrb[0].mxu0
        %v2925 = vadd.f32 0.0, %v2924
        %v2926 = vpop.f32.mrb[0].mxu0
        %v2927 = vpop.f32.mrb[0].mxu0
        %v2928 = vadd.f32 0.0, %v2927
        %v2929 = vpop.f32.mrb[0].mxu0
        %2930 = vmatprep.mubr.bf16.mxu0 0
        %2931 = vmatmul.mubr.bf16.gmra.mrb[0].mxu0 %v2761
        %v2932 = vpop.f32.mrb[0].mxu0
        %v2933 = vadd.f32 0.0, %v2932
        %v2934 = vpop.f32.mrb[0].mxu0
        %v2935 = vpop.f32.mrb[0].mxu0
        %v2936 = vadd.f32 0.0, %v2935
        %v2937 = vpop.f32.mrb[0].mxu0
        %2938 = vmatprep.mubr.bf16.mxu0 0
        %2939 = vmatmul.mubr.bf16.gmra.mrb[0].mxu0 %v2762
        %v2940 = vpop.f32.mrb[0].mxu0
        %v2941 = vadd.f32 0.0, %v2940
        %v2942 = vpop.f32.mrb[0].mxu0
        %v2943 = vpop.f32.mrb[0].mxu0
        %v2944 = vadd.f32 0.0, %v2943
        %v2945 = vpop.f32.mrb[0].mxu0
        %2946 = vmatprep.mubr.bf16.mxu0 0
        %2947 = vmatmul.mubr.bf16.gmra.mrb[0].mxu0 %v2763
        %v2948 = vpop.f32.mrb[0].mxu0
        %v2949 = vadd.f32 0.0, %v2948
        %v2950 = vpop.f32.mrb[0].mxu0
        %v2951 = vpop.f32.mrb[0].mxu0
        %v2952 = vadd.f32 0.0, %v2951
        %v2953 = vpop.f32.mrb[0].mxu0
        %2954 = vmatprep.mubr.bf16.mxu0 0
        %2955 = vmatmul.mubr.bf16.gmra.mrb[0].mxu0 %v2764
        %v2956 = vpop.f32.mrb[0].mxu0
        %v2957 = vadd.f32 0.0, %v2956
        %v2958 = vpop.f32.mrb[0].mxu0
        %v2959 = vpop.f32.mrb[0].mxu0
        %v2960 = vadd.f32 0.0, %v2959
        %v2961 = vpop.f32.mrb[0].mxu0
        %2962 = vmatprep.mubr.bf16.mxu0 0
        %2963 = vmatmul.mubr.bf16.gmra.mrb[0].mxu0 %v2765
        %v2964 = vpop.f32.mrb[0].mxu0
        %v2965 = vadd.f32 0.0, %v2964
        %v2966 = vpop.f32.mrb[0].mxu0
        %v2967 = vpop.f32.mrb[0].mxu0
        %v2968 = vadd.f32 0.0, %v2967
        %v2969 = vpop.f32.mrb[0].mxu0
        %2970 = vmatprep.mubr.bf16.mxu0 0
        %2971 = vmatmul.mubr.bf16.gmra.mrb[0].mxu0 %v2766
        %v2972 = vpop.f32.mrb[0].mxu0
        %v2973 = vadd.f32 0.0, %v2972
        %v2974 = vpop.f32.mrb[0].mxu0
        %v2975 = vpop.f32.mrb[0].mxu0
        %v2976 = vadd.f32 0.0, %v2975
        %v2977 = vpop.f32.mrb[0].mxu0
        %2978 = vmatprep.mubr.bf16.mxu0 0
        %2979 = vmatmul.mubr.bf16.gmra.mrb[0].mxu0 %v2767
        %v2980 = vpop.f32.mrb[0].mxu0
        %v2981 = vadd.f32 0.0, %v2980
        %v2982 = vpop.f32.mrb[0].mxu0
        %v2983 = vpop.f32.mrb[0].mxu0
        %v2984 = vadd.f32 0.0, %v2983
        %v2985 = vpop.f32.mrb[0].mxu0
        %2986 = vmatprep.mubr.bf16.mxu0 0
        %2987 = vmatmul.mubr.bf16.gmra.mrb[0].mxu0 %v2768
        %v2988 = vpop.f32.mrb[0].mxu0
        %v2989 = vadd.f32 0.0, %v2988
        %v2990 = vpop.f32.mrb[0].mxu0
        %v2991 = vpop.f32.mrb[0].mxu0
        %v2992 = vadd.f32 0.0, %v2991
        %v2993 = vpop.f32.mrb[0].mxu0
        %2994 = vdwg.mxu0
        %v2995 = vadd.f32 %v2609, %v2869
        %v2996 = vadd.f32 %v2610, %v2872
        %v2997 = vadd.f32 %v2611, %v2877
        %v2998 = vadd.f32 %v2612, %v2880
        %v2999 = vadd.f32 %v2613, %v2885
        %v3000 = vadd.f32 %v2614, %v2888
        %v3001 = vadd.f32 %v2615, %v2893
        %v3002 = vadd.f32 %v2616, %v2896
        %v3003 = vadd.f32 %v2617, %v2901
        %v3004 = vadd.f32 %v2618, %v2904
        %v3005 = vadd.f32 %v2619, %v2909
        %v3006 = vadd.f32 %v2620, %v2912
        %v3007 = vadd.f32 %v2621, %v2917
        %v3008 = vadd.f32 %v2622, %v2920
        %v3009 = vadd.f32 %v2623, %v2925
        %v3010 = vadd.f32 %v2624, %v2928
        %v3011 = vadd.f32 %v2625, %v2933
        %v3012 = vadd.f32 %v2626, %v2936
        %v3013 = vadd.f32 %v2627, %v2941
        %v3014 = vadd.f32 %v2628, %v2944
        %v3015 = vadd.f32 %v2629, %v2949
        %v3016 = vadd.f32 %v2630, %v2952
        %v3017 = vadd.f32 %v2631, %v2957
        %v3018 = vadd.f32 %v2632, %v2960
        %v3019 = vadd.f32 %v2633, %v2965
        %v3020 = vadd.f32 %v2634, %v2968
        %v3021 = vadd.f32 %v2635, %v2973
        %v3022 = vadd.f32 %v2636, %v2976
        %v3023 = vadd.f32 %v2637, %v2981
        %v3024 = vadd.f32 %v2638, %v2984
        %v3025 = vadd.f32 %v2639, %v2989
        %v3026 = vadd.f32 %v2640, %v2992
        %s3027 = scalar_lea.vmem [#allocation2], 48
        %v3028 = vld [vmem:[%s3027] sm:$0xff]
        %v3029 = vld [vmem:[%s3027 + $0x8] sm:$0xff]
        %v3030 = vld [vmem:[%s3027 + $0x10] sm:$0xff]
        %v3031 = vld [vmem:[%s3027 + $0x18] sm:$0xff]
        %v3032 = vld [vmem:[%s3027 + $0x20] sm:$0xff]
        %v3033 = vld [vmem:[%s3027 + $0x28] sm:$0xff]
        %v3034 = vld [vmem:[%s3027 + $0x30] sm:$0xff]
        %v3035 = vld [vmem:[%s3027 + $0x38] sm:$0xff]
        %v3036 = vld [vmem:[%s3027 + $0x40] sm:$0xff]
        %v3037 = vld [vmem:[%s3027 + $0x48] sm:$0xff]
        %v3038 = vld [vmem:[%s3027 + $0x50] sm:$0xff]
        %v3039 = vld [vmem:[%s3027 + $0x58] sm:$0xff]
        %v3040 = vld [vmem:[%s3027 + $0x60] sm:$0xff]
        %v3041 = vld [vmem:[%s3027 + $0x68] sm:$0xff]
        %v3042 = vld [vmem:[%s3027 + $0x70] sm:$0xff]
        %v3043 = vld [vmem:[%s3027 + $0x78] sm:$0xff]
        %v3044 = vld [vmem:[%s3027 + $0x80] sm:$0xff]
        %v3045 = vld [vmem:[%s3027 + $0x88] sm:$0xff]
        %v3046 = vld [vmem:[%s3027 + $0x90] sm:$0xff]
        %v3047 = vld [vmem:[%s3027 + $0x98] sm:$0xff]
        %v3048 = vld [vmem:[%s3027 + $0xa0] sm:$0xff]
        %v3049 = vld [vmem:[%s3027 + $0xa8] sm:$0xff]
        %v3050 = vld [vmem:[%s3027 + $0xb0] sm:$0xff]
        %v3051 = vld [vmem:[%s3027 + $0xb8] sm:$0xff]
        %v3052 = vld [vmem:[%s3027 + $0xc0] sm:$0xff]
        %v3053 = vld [vmem:[%s3027 + $0xc8] sm:$0xff]
        %v3054 = vld [vmem:[%s3027 + $0xd0] sm:$0xff]
        %v3055 = vld [vmem:[%s3027 + $0xd8] sm:$0xff]
        %v3056 = vld [vmem:[%s3027 + $0xe0] sm:$0xff]
        %v3057 = vld [vmem:[%s3027 + $0xe8] sm:$0xff]
        %v3058 = vld [vmem:[%s3027 + $0xf0] sm:$0xff]
        %v3059 = vld [vmem:[%s3027 + $0xf8] sm:$0xff]
        %v3060 = vld [vmem:[%s3027 + $0x100] sm:$0xff]
        %v3061 = vld [vmem:[%s3027 + $0x108] sm:$0xff]
        %v3062 = vld [vmem:[%s3027 + $0x110] sm:$0xff]
        %v3063 = vld [vmem:[%s3027 + $0x118] sm:$0xff]
        %v3064 = vld [vmem:[%s3027 + $0x120] sm:$0xff]
        %v3065 = vld [vmem:[%s3027 + $0x128] sm:$0xff]
        %v3066 = vld [vmem:[%s3027 + $0x130] sm:$0xff]
        %v3067 = vld [vmem:[%s3027 + $0x138] sm:$0xff]
        %v3068 = vld [vmem:[%s3027 + $0x140] sm:$0xff]
        %v3069 = vld [vmem:[%s3027 + $0x148] sm:$0xff]
        %v3070 = vld [vmem:[%s3027 + $0x150] sm:$0xff]
        %v3071 = vld [vmem:[%s3027 + $0x158] sm:$0xff]
        %v3072 = vld [vmem:[%s3027 + $0x160] sm:$0xff]
        %v3073 = vld [vmem:[%s3027 + $0x168] sm:$0xff]
        %v3074 = vld [vmem:[%s3027 + $0x170] sm:$0xff]
        %v3075 = vld [vmem:[%s3027 + $0x178] sm:$0xff]
        %v3076 = vpack.c.bf16 %v3029, %v3028
        %v3077 = vpack.c.bf16 %v3032, %v3031
        %v3078 = vpack.c.bf16 %v3035, %v3034
        %v3079 = vpack.c.bf16 %v3038, %v3037
        %v3080 = vpack.c.bf16 %v3041, %v3040
        %v3081 = vpack.c.bf16 %v3044, %v3043
        %v3082 = vpack.c.bf16 %v3047, %v3046
        %v3083 = vpack.c.bf16 %v3050, %v3049
        %v3084 = vpack.c.bf16 %v3053, %v3052
        %v3085 = vpack.c.bf16 %v3056, %v3055
        %v3086 = vpack.c.bf16 %v3059, %v3058
        %v3087 = vpack.c.bf16 %v3062, %v3061
        %v3088 = vpack.c.bf16 %v3065, %v3064
        %v3089 = vpack.c.bf16 %v3068, %v3067
        %v3090 = vpack.c.bf16 %v3071, %v3070
        %v3091 = vpack.c.bf16 %v3074, %v3073
        %s3092 = scalar_lea.vmem [#allocation8], 384
        %v3093 = vld [vmem:[%s3092] sm:$0xf]
        %v3094 = vld [vmem:[%s3092 + $0x4] sm:$0xf]
        %v3095 = vld [vmem:[%s3092 + $0x8] sm:$0xf]
        %v3096 = vld [vmem:[%s3092 + $0xc] sm:$0xf]
        %v3097 = vld [vmem:[%s3092 + $0x10] sm:$0xf]
        %v3098 = vld [vmem:[%s3092 + $0x14] sm:$0xf]
        %v3099 = vld [vmem:[%s3092 + $0x18] sm:$0xf]
        %v3100 = vld [vmem:[%s3092 + $0x1c] sm:$0xf]
        %v3101 = vld [vmem:[%s3092 + $0x20] sm:$0xf]
        %v3102 = vld [vmem:[%s3092 + $0x24] sm:$0xf]
        %v3103 = vld [vmem:[%s3092 + $0x28] sm:$0xf]
        %v3104 = vld [vmem:[%s3092 + $0x2c] sm:$0xf]
        %v3105 = vld [vmem:[%s3092 + $0x30] sm:$0xf]
        %v3106 = vld [vmem:[%s3092 + $0x34] sm:$0xf]
        %v3107 = vld [vmem:[%s3092 + $0x38] sm:$0xf]
        %v3108 = vld [vmem:[%s3092 + $0x3c] sm:$0xf]
        %v3125 = vunpack.c.l.b16 %v3093
        %v3126 = vunpack.c.l.b16 %v3094
        %v3127 = vunpack.c.l.b16 %v3095
        %v3128 = vunpack.c.l.b16 %v3096
        %v3129 = vunpack.c.l.b16 %v3097
        %v3130 = vunpack.c.l.b16 %v3098
        %v3131 = vunpack.c.l.b16 %v3099
        %v3132 = vunpack.c.l.b16 %v3100
        %v3133 = vunpack.c.l.b16 %v3101
        %v3134 = vunpack.c.l.b16 %v3102
        %v3135 = vunpack.c.l.b16 %v3103
        %v3136 = vunpack.c.l.b16 %v3104
        %v3137 = vunpack.c.l.b16 %v3105
        %v3138 = vunpack.c.l.b16 %v3106
        %v3139 = vunpack.c.l.b16 %v3107
        %v3140 = vunpack.c.l.b16 %v3108
        %v3141 = vpack.c.b16 %v3126, %v3125
        %v3142 = vpack.c.b16 %v3128, %v3127
        %v3143 = vpack.c.b16 %v3130, %v3129
        %v3144 = vpack.c.b16 %v3132, %v3131
        %v3145 = vpack.c.b16 %v3134, %v3133
        %v3146 = vpack.c.b16 %v3136, %v3135
        %v3147 = vpack.c.b16 %v3138, %v3137
        %v3148 = vpack.c.b16 %v3140, %v3139
        %3157 = vmatprep.subr.bf16.mxu0 0
        %3158 = vmatpush1.bf16.msra.mxu0 %v3141
        %3159 = vmatprep.subr.bf16.mxu0 0
        %3160 = vmatpush1.bf16.msra.mxu0 %v3142
        %3161 = vmatprep.subr.bf16.mxu0 0
        %3162 = vmatpush1.bf16.msra.mxu0 %v3143
        %3163 = vmatprep.subr.bf16.mxu0 0
        %3164 = vmatpush1.bf16.msra.mxu0 %v3144
        %3165 = vmatprep.subr.bf16.mxu0 0
        %3166 = vmatpush1.bf16.msra.mxu0 %v3145
        %3167 = vmatprep.subr.bf16.mxu0 0
        %3168 = vmatpush1.bf16.msra.mxu0 %v3146
        %3169 = vmatprep.subr.bf16.mxu0 0
        %3170 = vmatpush1.bf16.msra.mxu0 %v3147
        %3171 = vmatprep.subr.bf16.mxu0 0
        %3172 = vmatpush1.bf16.msra.mxu0 %v3148
        %3173 = vmatprep.subr.bf16.mxu0 0
        %3174 = vmatpush1.bf16.msra.mxu0 0
        %3175 = vmatprep.subr.bf16.mxu0 0
        %3176 = vmatpush1.bf16.msra.mxu0 0
        %3177 = vmatprep.subr.bf16.mxu0 0
        %3178 = vmatpush1.bf16.msra.mxu0 0
        %3179 = vmatprep.subr.bf16.mxu0 0
        %3180 = vmatpush1.bf16.msra.mxu0 0
        %3181 = vmatprep.subr.bf16.mxu0 0
        %3182 = vmatpush1.bf16.msra.mxu0 0
        %3183 = vmatprep.subr.bf16.mxu0 0
        %3184 = vmatpush1.bf16.msra.mxu0 0
        %3185 = vmatprep.subr.bf16.mxu0 0
        %3186 = vmatpush1.bf16.msra.mxu0 0
        %3187 = vmatprep.subr.bf16.mxu0 0
        %3188 = vmatpush1.bf16.msra.mxu0 0
        %3189 = vmatprep.mubr.bf16.mxu0 0
        %3190 = vmatmul.mubr.bf16.gmra.mrb[0].mxu0 %v3076
        %v3191 = vpop.f32.mrb[0].mxu0
        %v3192 = vadd.f32 0.0, %v3191
        %v3193 = vpop.f32.mrb[0].mxu0
        %v3194 = vpop.f32.mrb[0].mxu0
        %v3195 = vadd.f32 0.0, %v3194
        %v3196 = vpop.f32.mrb[0].mxu0
        %3197 = vmatprep.mubr.bf16.mxu0 0
        %3198 = vmatmul.mubr.bf16.gmra.mrb[0].mxu0 %v3077
        %v3199 = vpop.f32.mrb[0].mxu0
        %v3200 = vadd.f32 0.0, %v3199
        %v3201 = vpop.f32.mrb[0].mxu0
        %v3202 = vpop.f32.mrb[0].mxu0
        %v3203 = vadd.f32 0.0, %v3202
        %v3204 = vpop.f32.mrb[0].mxu0
        %3205 = vmatprep.mubr.bf16.mxu0 0
        %3206 = vmatmul.mubr.bf16.gmra.mrb[0].mxu0 %v3078
        %v3207 = vpop.f32.mrb[0].mxu0
        %v3208 = vadd.f32 0.0, %v3207
        %v3209 = vpop.f32.mrb[0].mxu0
        %v3210 = vpop.f32.mrb[0].mxu0
        %v3211 = vadd.f32 0.0, %v3210
        %v3212 = vpop.f32.mrb[0].mxu0
        %3213 = vmatprep.mubr.bf16.mxu0 0
        %3214 = vmatmul.mubr.bf16.gmra.mrb[0].mxu0 %v3079
        %v3215 = vpop.f32.mrb[0].mxu0
        %v3216 = vadd.f32 0.0, %v3215
        %v3217 = vpop.f32.mrb[0].mxu0
        %v3218 = vpop.f32.mrb[0].mxu0
        %v3219 = vadd.f32 0.0, %v3218
        %v3220 = vpop.f32.mrb[0].mxu0
        %3221 = vmatprep.mubr.bf16.mxu0 0
        %3222 = vmatmul.mubr.bf16.gmra.mrb[0].mxu0 %v3080
        %v3223 = vpop.f32.mrb[0].mxu0
        %v3224 = vadd.f32 0.0, %v3223
        %v3225 = vpop.f32.mrb[0].mxu0
        %v3226 = vpop.f32.mrb[0].mxu0
        %v3227 = vadd.f32 0.0, %v3226
        %v3228 = vpop.f32.mrb[0].mxu0
        %3229 = vmatprep.mubr.bf16.mxu0 0
        %3230 = vmatmul.mubr.bf16.gmra.mrb[0].mxu0 %v3081
        %v3231 = vpop.f32.mrb[0].mxu0
        %v3232 = vadd.f32 0.0, %v3231
        %v3233 = vpop.f32.mrb[0].mxu0
        %v3234 = vpop.f32.mrb[0].mxu0
        %v3235 = vadd.f32 0.0, %v3234
        %v3236 = vpop.f32.mrb[0].mxu0
        %3237 = vmatprep.mubr.bf16.mxu0 0
        %3238 = vmatmul.mubr.bf16.gmra.mrb[0].mxu0 %v3082
        %v3239 = vpop.f32.mrb[0].mxu0
        %v3240 = vadd.f32 0.0, %v3239
        %v3241 = vpop.f32.mrb[0].mxu0
        %v3242 = vpop.f32.mrb[0].mxu0
        %v3243 = vadd.f32 0.0, %v3242
        %v3244 = vpop.f32.mrb[0].mxu0
        %3245 = vmatprep.mubr.bf16.mxu0 0
        %3246 = vmatmul.mubr.bf16.gmra.mrb[0].mxu0 %v3083
        %v3247 = vpop.f32.mrb[0].mxu0
        %v3248 = vadd.f32 0.0, %v3247
        %v3249 = vpop.f32.mrb[0].mxu0
        %v3250 = vpop.f32.mrb[0].mxu0
        %v3251 = vadd.f32 0.0, %v3250
        %v3252 = vpop.f32.mrb[0].mxu0
        %3253 = vmatprep.mubr.bf16.mxu0 0
        %3254 = vmatmul.mubr.bf16.gmra.mrb[0].mxu0 %v3084
        %v3255 = vpop.f32.mrb[0].mxu0
        %v3256 = vadd.f32 0.0, %v3255
        %v3257 = vpop.f32.mrb[0].mxu0
        %v3258 = vpop.f32.mrb[0].mxu0
        %v3259 = vadd.f32 0.0, %v3258
        %v3260 = vpop.f32.mrb[0].mxu0
        %3261 = vmatprep.mubr.bf16.mxu0 0
        %3262 = vmatmul.mubr.bf16.gmra.mrb[0].mxu0 %v3085
        %v3263 = vpop.f32.mrb[0].mxu0
        %v3264 = vadd.f32 0.0, %v3263
        %v3265 = vpop.f32.mrb[0].mxu0
        %v3266 = vpop.f32.mrb[0].mxu0
        %v3267 = vadd.f32 0.0, %v3266
        %v3268 = vpop.f32.mrb[0].mxu0
        %3269 = vmatprep.mubr.bf16.mxu0 0
        %3270 = vmatmul.mubr.bf16.gmra.mrb[0].mxu0 %v3086
        %v3271 = vpop.f32.mrb[0].mxu0
        %v3272 = vadd.f32 0.0, %v3271
        %v3273 = vpop.f32.mrb[0].mxu0
        %v3274 = vpop.f32.mrb[0].mxu0
        %v3275 = vadd.f32 0.0, %v3274
        %v3276 = vpop.f32.mrb[0].mxu0
        %3277 = vmatprep.mubr.bf16.mxu0 0
        %3278 = vmatmul.mubr.bf16.gmra.mrb[0].mxu0 %v3087
        %v3279 = vpop.f32.mrb[0].mxu0
        %v3280 = vadd.f32 0.0, %v3279
        %v3281 = vpop.f32.mrb[0].mxu0
        %v3282 = vpop.f32.mrb[0].mxu0
        %v3283 = vadd.f32 0.0, %v3282
        %v3284 = vpop.f32.mrb[0].mxu0
        %3285 = vmatprep.mubr.bf16.mxu0 0
        %3286 = vmatmul.mubr.bf16.gmra.mrb[0].mxu0 %v3088
        %v3287 = vpop.f32.mrb[0].mxu0
        %v3288 = vadd.f32 0.0, %v3287
        %v3289 = vpop.f32.mrb[0].mxu0
        %v3290 = vpop.f32.mrb[0].mxu0
        %v3291 = vadd.f32 0.0, %v3290
        %v3292 = vpop.f32.mrb[0].mxu0
        %3293 = vmatprep.mubr.bf16.mxu0 0
        %3294 = vmatmul.mubr.bf16.gmra.mrb[0].mxu0 %v3089
        %v3295 = vpop.f32.mrb[0].mxu0
        %v3296 = vadd.f32 0.0, %v3295
        %v3297 = vpop.f32.mrb[0].mxu0
        %v3298 = vpop.f32.mrb[0].mxu0
        %v3299 = vadd.f32 0.0, %v3298
        %v3300 = vpop.f32.mrb[0].mxu0
        %3301 = vmatprep.mubr.bf16.mxu0 0
        %3302 = vmatmul.mubr.bf16.gmra.mrb[0].mxu0 %v3090
        %v3303 = vpop.f32.mrb[0].mxu0
        %v3304 = vadd.f32 0.0, %v3303
        %v3305 = vpop.f32.mrb[0].mxu0
        %v3306 = vpop.f32.mrb[0].mxu0
        %v3307 = vadd.f32 0.0, %v3306
        %v3308 = vpop.f32.mrb[0].mxu0
        %3309 = vmatprep.mubr.bf16.mxu0 0
        %3310 = vmatmul.mubr.bf16.gmra.mrb[0].mxu0 %v3091
        %v3311 = vpop.f32.mrb[0].mxu0
        %v3312 = vadd.f32 0.0, %v3311
        %v3313 = vpop.f32.mrb[0].mxu0
        %v3314 = vpop.f32.mrb[0].mxu0
        %v3315 = vadd.f32 0.0, %v3314
        %v3316 = vpop.f32.mrb[0].mxu0
        %3317 = vdwg.mxu0
        %v3318 = vadd.f32 %v2995, %v3192
        %v3319 = vadd.f32 %v2996, %v3195
        %v3320 = vadd.f32 %v2997, %v3200
        %v3321 = vadd.f32 %v2998, %v3203
        %v3322 = vadd.f32 %v2999, %v3208
        %v3323 = vadd.f32 %v3000, %v3211
        %v3324 = vadd.f32 %v3001, %v3216
        %v3325 = vadd.f32 %v3002, %v3219
        %v3326 = vadd.f32 %v3003, %v3224
        %v3327 = vadd.f32 %v3004, %v3227
        %v3328 = vadd.f32 %v3005, %v3232
        %v3329 = vadd.f32 %v3006, %v3235
        %v3330 = vadd.f32 %v3007, %v3240
        %v3331 = vadd.f32 %v3008, %v3243
        %v3332 = vadd.f32 %v3009, %v3248
        %v3333 = vadd.f32 %v3010, %v3251
        %v3334 = vadd.f32 %v3011, %v3256
        %v3335 = vadd.f32 %v3012, %v3259
        %v3336 = vadd.f32 %v3013, %v3264
        %v3337 = vadd.f32 %v3014, %v3267
        %v3338 = vadd.f32 %v3015, %v3272
        %v3339 = vadd.f32 %v3016, %v3275
        %v3340 = vadd.f32 %v3017, %v3280
        %v3341 = vadd.f32 %v3018, %v3283
        %v3342 = vadd.f32 %v3019, %v3288
        %v3343 = vadd.f32 %v3020, %v3291
        %v3344 = vadd.f32 %v3021, %v3296
        %v3345 = vadd.f32 %v3022, %v3299
        %v3346 = vadd.f32 %v3023, %v3304
        %v3347 = vadd.f32 %v3024, %v3307
        %v3348 = vadd.f32 %v3025, %v3312
        %v3349 = vadd.f32 %v3026, %v3315
        %v3398 = vrot.slane %v3028, 1
        %v3399 = vrot.slane %v3029, 1
        %v3400 = vsel %vm934, %v3398, %v3399
        %v3401 = vrot.slane %v3030, 1
        %v3402 = vsel %vm934, %v3399, %v3401
        %v3403 = vrot.slane %v3031, 1
        %v3404 = vrot.slane %v3032, 1
        %v3405 = vsel %vm934, %v3403, %v3404
        %v3406 = vrot.slane %v3033, 1
        %v3407 = vsel %vm934, %v3404, %v3406
        %v3408 = vrot.slane %v3034, 1
        %v3409 = vrot.slane %v3035, 1
        %v3410 = vsel %vm934, %v3408, %v3409
        %v3411 = vrot.slane %v3036, 1
        %v3412 = vsel %vm934, %v3409, %v3411
        %v3413 = vrot.slane %v3037, 1
        %v3414 = vrot.slane %v3038, 1
        %v3415 = vsel %vm934, %v3413, %v3414
        %v3416 = vrot.slane %v3039, 1
        %v3417 = vsel %vm934, %v3414, %v3416
        %v3418 = vrot.slane %v3040, 1
        %v3419 = vrot.slane %v3041, 1
        %v3420 = vsel %vm934, %v3418, %v3419
        %v3421 = vrot.slane %v3042, 1
        %v3422 = vsel %vm934, %v3419, %v3421
        %v3423 = vrot.slane %v3043, 1
        %v3424 = vrot.slane %v3044, 1
        %v3425 = vsel %vm934, %v3423, %v3424
        %v3426 = vrot.slane %v3045, 1
        %v3427 = vsel %vm934, %v3424, %v3426
        %v3428 = vrot.slane %v3046, 1
        %v3429 = vrot.slane %v3047, 1
        %v3430 = vsel %vm934, %v3428, %v3429
        %v3431 = vrot.slane %v3048, 1
        %v3432 = vsel %vm934, %v3429, %v3431
        %v3433 = vrot.slane %v3049, 1
        %v3434 = vrot.slane %v3050, 1
        %v3435 = vsel %vm934, %v3433, %v3434
        %v3436 = vrot.slane %v3051, 1
        %v3437 = vsel %vm934, %v3434, %v3436
        %v3438 = vrot.slane %v3052, 1
        %v3439 = vrot.slane %v3053, 1
        %v3440 = vsel %vm934, %v3438, %v3439
        %v3441 = vrot.slane %v3054, 1
        %v3442 = vsel %vm934, %v3439, %v3441
        %v3443 = vrot.slane %v3055, 1
        %v3444 = vrot.slane %v3056, 1
        %v3445 = vsel %vm934, %v3443, %v3444
        %v3446 = vrot.slane %v3057, 1
        %v3447 = vsel %vm934, %v3444, %v3446
        %v3448 = vrot.slane %v3058, 1
        %v3449 = vrot.slane %v3059, 1
        %v3450 = vsel %vm934, %v3448, %v3449
        %v3451 = vrot.slane %v3060, 1
        %v3452 = vsel %vm934, %v3449, %v3451
        %v3453 = vrot.slane %v3061, 1
        %v3454 = vrot.slane %v3062, 1
        %v3455 = vsel %vm934, %v3453, %v3454
        %v3456 = vrot.slane %v3063, 1
        %v3457 = vsel %vm934, %v3454, %v3456
        %v3458 = vrot.slane %v3064, 1
        %v3459 = vrot.slane %v3065, 1
        %v3460 = vsel %vm934, %v3458, %v3459
        %v3461 = vrot.slane %v3066, 1
        %v3462 = vsel %vm934, %v3459, %v3461
        %v3463 = vrot.slane %v3067, 1
        %v3464 = vrot.slane %v3068, 1
        %v3465 = vsel %vm934, %v3463, %v3464
        %v3466 = vrot.slane %v3069, 1
        %v3467 = vsel %vm934, %v3464, %v3466
        %v3468 = vrot.slane %v3070, 1
        %v3469 = vrot.slane %v3071, 1
        %v3470 = vsel %vm934, %v3468, %v3469
        %v3471 = vrot.slane %v3072, 1
        %v3472 = vsel %vm934, %v3469, %v3471
        %v3473 = vrot.slane %v3073, 1
        %v3474 = vrot.slane %v3074, 1
        %v3475 = vsel %vm934, %v3473, %v3474
        %v3476 = vrot.slane %v3075, 1
        %v3477 = vsel %vm934, %v3474, %v3476
        %v3510 = vpack.c.bf16 %v3402, %v3400
        %v3511 = vpack.c.bf16 %v3407, %v3405
        %v3512 = vpack.c.bf16 %v3412, %v3410
        %v3513 = vpack.c.bf16 %v3417, %v3415
        %v3514 = vpack.c.bf16 %v3422, %v3420
        %v3515 = vpack.c.bf16 %v3427, %v3425
        %v3516 = vpack.c.bf16 %v3432, %v3430
        %v3517 = vpack.c.bf16 %v3437, %v3435
        %v3518 = vpack.c.bf16 %v3442, %v3440
        %v3519 = vpack.c.bf16 %v3447, %v3445
        %v3520 = vpack.c.bf16 %v3452, %v3450
        %v3521 = vpack.c.bf16 %v3457, %v3455
        %v3522 = vpack.c.bf16 %v3462, %v3460
        %v3523 = vpack.c.bf16 %v3467, %v3465
        %v3524 = vpack.c.bf16 %v3472, %v3470
        %v3525 = vpack.c.bf16 %v3477, %v3475
        %s3526 = scalar_lea.vmem [#allocation8], 448
        %v3527 = vld [vmem:[%s3526] sm:$0xf]
        %v3528 = vld [vmem:[%s3526 + $0x4] sm:$0xf]
        %v3529 = vld [vmem:[%s3526 + $0x8] sm:$0xf]
        %v3530 = vld [vmem:[%s3526 + $0xc] sm:$0xf]
        %v3531 = vld [vmem:[%s3526 + $0x10] sm:$0xf]
        %v3532 = vld [vmem:[%s3526 + $0x14] sm:$0xf]
        %v3533 = vld [vmem:[%s3526 + $0x18] sm:$0xf]
        %v3534 = vld [vmem:[%s3526 + $0x1c] sm:$0xf]
        %v3535 = vld [vmem:[%s3526 + $0x20] sm:$0xf]
        %v3536 = vld [vmem:[%s3526 + $0x24] sm:$0xf]
        %v3537 = vld [vmem:[%s3526 + $0x28] sm:$0xf]
        %v3538 = vld [vmem:[%s3526 + $0x2c] sm:$0xf]
        %v3539 = vld [vmem:[%s3526 + $0x30] sm:$0xf]
        %v3540 = vld [vmem:[%s3526 + $0x34] sm:$0xf]
        %v3541 = vld [vmem:[%s3526 + $0x38] sm:$0xf]
        %v3542 = vld [vmem:[%s3526 + $0x3c] sm:$0xf]
        %v3559 = vunpack.c.l.b16 %v3527
        %v3560 = vunpack.c.l.b16 %v3528
        %v3561 = vunpack.c.l.b16 %v3529
        %v3562 = vunpack.c.l.b16 %v3530
        %v3563 = vunpack.c.l.b16 %v3531
        %v3564 = vunpack.c.l.b16 %v3532
        %v3565 = vunpack.c.l.b16 %v3533
        %v3566 = vunpack.c.l.b16 %v3534
        %v3567 = vunpack.c.l.b16 %v3535
        %v3568 = vunpack.c.l.b16 %v3536
        %v3569 = vunpack.c.l.b16 %v3537
        %v3570 = vunpack.c.l.b16 %v3538
        %v3571 = vunpack.c.l.b16 %v3539
        %v3572 = vunpack.c.l.b16 %v3540
        %v3573 = vunpack.c.l.b16 %v3541
        %v3574 = vunpack.c.l.b16 %v3542
        %v3575 = vpack.c.b16 %v3560, %v3559
        %v3576 = vpack.c.b16 %v3562, %v3561
        %v3577 = vpack.c.b16 %v3564, %v3563
        %v3578 = vpack.c.b16 %v3566, %v3565
        %v3579 = vpack.c.b16 %v3568, %v3567
        %v3580 = vpack.c.b16 %v3570, %v3569
        %v3581 = vpack.c.b16 %v3572, %v3571
        %v3582 = vpack.c.b16 %v3574, %v3573
        %3591 = vmatprep.subr.bf16.mxu0 0
        %3592 = vmatpush1.bf16.msra.mxu0 %v3575
        %3593 = vmatprep.subr.bf16.mxu0 0
        %3594 = vmatpush1.bf16.msra.mxu0 %v3576
        %3595 = vmatprep.subr.bf16.mxu0 0
        %3596 = vmatpush1.bf16.msra.mxu0 %v3577
        %3597 = vmatprep.subr.bf16.mxu0 0
        %3598 = vmatpush1.bf16.msra.mxu0 %v3578
        %3599 = vmatprep.subr.bf16.mxu0 0
        %3600 = vmatpush1.bf16.msra.mxu0 %v3579
        %3601 = vmatprep.subr.bf16.mxu0 0
        %3602 = vmatpush1.bf16.msra.mxu0 %v3580
        %3603 = vmatprep.subr.bf16.mxu0 0
        %3604 = vmatpush1.bf16.msra.mxu0 %v3581
        %3605 = vmatprep.subr.bf16.mxu0 0
        %3606 = vmatpush1.bf16.msra.mxu0 %v3582
        %3607 = vmatprep.subr.bf16.mxu0 0
        %3608 = vmatpush1.bf16.msra.mxu0 0
        %3609 = vmatprep.subr.bf16.mxu0 0
        %3610 = vmatpush1.bf16.msra.mxu0 0
        %3611 = vmatprep.subr.bf16.mxu0 0
        %3612 = vmatpush1.bf16.msra.mxu0 0
        %3613 = vmatprep.subr.bf16.mxu0 0
        %3614 = vmatpush1.bf16.msra.mxu0 0
        %3615 = vmatprep.subr.bf16.mxu0 0
        %3616 = vmatpush1.bf16.msra.mxu0 0
        %3617 = vmatprep.subr.bf16.mxu0 0
        %3618 = vmatpush1.bf16.msra.mxu0 0
        %3619 = vmatprep.subr.bf16.mxu0 0
        %3620 = vmatpush1.bf16.msra.mxu0 0
        %3621 = vmatprep.subr.bf16.mxu0 0
        %3622 = vmatpush1.bf16.msra.mxu0 0
        %3623 = vmatprep.mubr.bf16.mxu0 0
        %3624 = vmatmul.mubr.bf16.gmra.mrb[0].mxu0 %v3510
        %v3625 = vpop.f32.mrb[0].mxu0
        %v3626 = vadd.f32 0.0, %v3625
        %v3627 = vpop.f32.mrb[0].mxu0
        %v3628 = vpop.f32.mrb[0].mxu0
        %v3629 = vadd.f32 0.0, %v3628
        %v3630 = vpop.f32.mrb[0].mxu0
        %3631 = vmatprep.mubr.bf16.mxu0 0
        %3632 = vmatmul.mubr.bf16.gmra.mrb[0].mxu0 %v3511
        %v3633 = vpop.f32.mrb[0].mxu0
        %v3634 = vadd.f32 0.0, %v3633
        %v3635 = vpop.f32.mrb[0].mxu0
        %v3636 = vpop.f32.mrb[0].mxu0
        %v3637 = vadd.f32 0.0, %v3636
        %v3638 = vpop.f32.mrb[0].mxu0
        %3639 = vmatprep.mubr.bf16.mxu0 0
        %3640 = vmatmul.mubr.bf16.gmra.mrb[0].mxu0 %v3512
        %v3641 = vpop.f32.mrb[0].mxu0
        %v3642 = vadd.f32 0.0, %v3641
        %v3643 = vpop.f32.mrb[0].mxu0
        %v3644 = vpop.f32.mrb[0].mxu0
        %v3645 = vadd.f32 0.0, %v3644
        %v3646 = vpop.f32.mrb[0].mxu0
        %3647 = vmatprep.mubr.bf16.mxu0 0
        %3648 = vmatmul.mubr.bf16.gmra.mrb[0].mxu0 %v3513
        %v3649 = vpop.f32.mrb[0].mxu0
        %v3650 = vadd.f32 0.0, %v3649
        %v3651 = vpop.f32.mrb[0].mxu0
        %v3652 = vpop.f32.mrb[0].mxu0
        %v3653 = vadd.f32 0.0, %v3652
        %v3654 = vpop.f32.mrb[0].mxu0
        %3655 = vmatprep.mubr.bf16.mxu0 0
        %3656 = vmatmul.mubr.bf16.gmra.mrb[0].mxu0 %v3514
        %v3657 = vpop.f32.mrb[0].mxu0
        %v3658 = vadd.f32 0.0, %v3657
        %v3659 = vpop.f32.mrb[0].mxu0
        %v3660 = vpop.f32.mrb[0].mxu0
        %v3661 = vadd.f32 0.0, %v3660
        %v3662 = vpop.f32.mrb[0].mxu0
        %3663 = vmatprep.mubr.bf16.mxu0 0
        %3664 = vmatmul.mubr.bf16.gmra.mrb[0].mxu0 %v3515
        %v3665 = vpop.f32.mrb[0].mxu0
        %v3666 = vadd.f32 0.0, %v3665
        %v3667 = vpop.f32.mrb[0].mxu0
        %v3668 = vpop.f32.mrb[0].mxu0
        %v3669 = vadd.f32 0.0, %v3668
        %v3670 = vpop.f32.mrb[0].mxu0
        %3671 = vmatprep.mubr.bf16.mxu0 0
        %3672 = vmatmul.mubr.bf16.gmra.mrb[0].mxu0 %v3516
        %v3673 = vpop.f32.mrb[0].mxu0
        %v3674 = vadd.f32 0.0, %v3673
        %v3675 = vpop.f32.mrb[0].mxu0
        %v3676 = vpop.f32.mrb[0].mxu0
        %v3677 = vadd.f32 0.0, %v3676
        %v3678 = vpop.f32.mrb[0].mxu0
        %3679 = vmatprep.mubr.bf16.mxu0 0
        %3680 = vmatmul.mubr.bf16.gmra.mrb[0].mxu0 %v3517
        %v3681 = vpop.f32.mrb[0].mxu0
        %v3682 = vadd.f32 0.0, %v3681
        %v3683 = vpop.f32.mrb[0].mxu0
        %v3684 = vpop.f32.mrb[0].mxu0
        %v3685 = vadd.f32 0.0, %v3684
        %v3686 = vpop.f32.mrb[0].mxu0
        %3687 = vmatprep.mubr.bf16.mxu0 0
        %3688 = vmatmul.mubr.bf16.gmra.mrb[0].mxu0 %v3518
        %v3689 = vpop.f32.mrb[0].mxu0
        %v3690 = vadd.f32 0.0, %v3689
        %v3691 = vpop.f32.mrb[0].mxu0
        %v3692 = vpop.f32.mrb[0].mxu0
        %v3693 = vadd.f32 0.0, %v3692
        %v3694 = vpop.f32.mrb[0].mxu0
        %3695 = vmatprep.mubr.bf16.mxu0 0
        %3696 = vmatmul.mubr.bf16.gmra.mrb[0].mxu0 %v3519
        %v3697 = vpop.f32.mrb[0].mxu0
        %v3698 = vadd.f32 0.0, %v3697
        %v3699 = vpop.f32.mrb[0].mxu0
        %v3700 = vpop.f32.mrb[0].mxu0
        %v3701 = vadd.f32 0.0, %v3700
        %v3702 = vpop.f32.mrb[0].mxu0
        %3703 = vmatprep.mubr.bf16.mxu0 0
        %3704 = vmatmul.mubr.bf16.gmra.mrb[0].mxu0 %v3520
        %v3705 = vpop.f32.mrb[0].mxu0
        %v3706 = vadd.f32 0.0, %v3705
        %v3707 = vpop.f32.mrb[0].mxu0
        %v3708 = vpop.f32.mrb[0].mxu0
        %v3709 = vadd.f32 0.0, %v3708
        %v3710 = vpop.f32.mrb[0].mxu0
        %3711 = vmatprep.mubr.bf16.mxu0 0
        %3712 = vmatmul.mubr.bf16.gmra.mrb[0].mxu0 %v3521
        %v3713 = vpop.f32.mrb[0].mxu0
        %v3714 = vadd.f32 0.0, %v3713
        %v3715 = vpop.f32.mrb[0].mxu0
        %v3716 = vpop.f32.mrb[0].mxu0
        %v3717 = vadd.f32 0.0, %v3716
        %v3718 = vpop.f32.mrb[0].mxu0
        %3719 = vmatprep.mubr.bf16.mxu0 0
        %3720 = vmatmul.mubr.bf16.gmra.mrb[0].mxu0 %v3522
        %v3721 = vpop.f32.mrb[0].mxu0
        %v3722 = vadd.f32 0.0, %v3721
        %v3723 = vpop.f32.mrb[0].mxu0
        %v3724 = vpop.f32.mrb[0].mxu0
        %v3725 = vadd.f32 0.0, %v3724
        %v3726 = vpop.f32.mrb[0].mxu0
        %3727 = vmatprep.mubr.bf16.mxu0 0
        %3728 = vmatmul.mubr.bf16.gmra.mrb[0].mxu0 %v3523
        %v3729 = vpop.f32.mrb[0].mxu0
        %v3730 = vadd.f32 0.0, %v3729
        %v3731 = vpop.f32.mrb[0].mxu0
        %v3732 = vpop.f32.mrb[0].mxu0
        %v3733 = vadd.f32 0.0, %v3732
        %v3734 = vpop.f32.mrb[0].mxu0
        %3735 = vmatprep.mubr.bf16.mxu0 0
        %3736 = vmatmul.mubr.bf16.gmra.mrb[0].mxu0 %v3524
        %v3737 = vpop.f32.mrb[0].mxu0
        %v3738 = vadd.f32 0.0, %v3737
        %v3739 = vpop.f32.mrb[0].mxu0
        %v3740 = vpop.f32.mrb[0].mxu0
        %v3741 = vadd.f32 0.0, %v3740
        %v3742 = vpop.f32.mrb[0].mxu0
        %3743 = vmatprep.mubr.bf16.mxu0 0
        %3744 = vmatmul.mubr.bf16.gmra.mrb[0].mxu0 %v3525
        %v3745 = vpop.f32.mrb[0].mxu0
        %v3746 = vadd.f32 0.0, %v3745
        %v3747 = vpop.f32.mrb[0].mxu0
        %v3748 = vpop.f32.mrb[0].mxu0
        %v3749 = vadd.f32 0.0, %v3748
        %v3750 = vpop.f32.mrb[0].mxu0
        %3751 = vdwg.mxu0
        %v3752 = vadd.f32 %v3318, %v3626
        %v3753 = vadd.f32 %v3319, %v3629
        %v3754 = vadd.f32 %v3320, %v3634
        %v3755 = vadd.f32 %v3321, %v3637
        %v3756 = vadd.f32 %v3322, %v3642
        %v3757 = vadd.f32 %v3323, %v3645
        %v3758 = vadd.f32 %v3324, %v3650
        %v3759 = vadd.f32 %v3325, %v3653
        %v3760 = vadd.f32 %v3326, %v3658
        %v3761 = vadd.f32 %v3327, %v3661
        %v3762 = vadd.f32 %v3328, %v3666
        %v3763 = vadd.f32 %v3329, %v3669
        %v3764 = vadd.f32 %v3330, %v3674
        %v3765 = vadd.f32 %v3331, %v3677
        %v3766 = vadd.f32 %v3332, %v3682
        %v3767 = vadd.f32 %v3333, %v3685
        %v3768 = vadd.f32 %v3334, %v3690
        %v3769 = vadd.f32 %v3335, %v3693
        %v3770 = vadd.f32 %v3336, %v3698
        %v3771 = vadd.f32 %v3337, %v3701
        %v3772 = vadd.f32 %v3338, %v3706
        %v3773 = vadd.f32 %v3339, %v3709
        %v3774 = vadd.f32 %v3340, %v3714
        %v3775 = vadd.f32 %v3341, %v3717
        %v3776 = vadd.f32 %v3342, %v3722
        %v3777 = vadd.f32 %v3343, %v3725
        %v3778 = vadd.f32 %v3344, %v3730
        %v3779 = vadd.f32 %v3345, %v3733
        %v3780 = vadd.f32 %v3346, %v3738
        %v3781 = vadd.f32 %v3347, %v3741
        %v3782 = vadd.f32 %v3348, %v3746
        %v3783 = vadd.f32 %v3349, %v3749
        %v3784 = vrot.slane %v3028, 2
        %v3785 = vrot.slane %v3029, 2
        %v3786 = vsel %vm1498, %v3784, %v3785
        %v3787 = vrot.slane %v3030, 2
        %v3788 = vsel %vm1498, %v3785, %v3787
        %v3789 = vrot.slane %v3031, 2
        %v3790 = vrot.slane %v3032, 2
        %v3791 = vsel %vm1498, %v3789, %v3790
        %v3792 = vrot.slane %v3033, 2
        %v3793 = vsel %vm1498, %v3790, %v3792
        %v3794 = vrot.slane %v3034, 2
        %v3795 = vrot.slane %v3035, 2
        %v3796 = vsel %vm1498, %v3794, %v3795
        %v3797 = vrot.slane %v3036, 2
        %v3798 = vsel %vm1498, %v3795, %v3797
        %v3799 = vrot.slane %v3037, 2
        %v3800 = vrot.slane %v3038, 2
        %v3801 = vsel %vm1498, %v3799, %v3800
        %v3802 = vrot.slane %v3039, 2
        %v3803 = vsel %vm1498, %v3800, %v3802
        %v3804 = vrot.slane %v3040, 2
        %v3805 = vrot.slane %v3041, 2
        %v3806 = vsel %vm1498, %v3804, %v3805
        %v3807 = vrot.slane %v3042, 2
        %v3808 = vsel %vm1498, %v3805, %v3807
        %v3809 = vrot.slane %v3043, 2
        %v3810 = vrot.slane %v3044, 2
        %v3811 = vsel %vm1498, %v3809, %v3810
        %v3812 = vrot.slane %v3045, 2
        %v3813 = vsel %vm1498, %v3810, %v3812
        %v3814 = vrot.slane %v3046, 2
        %v3815 = vrot.slane %v3047, 2
        %v3816 = vsel %vm1498, %v3814, %v3815
        %v3817 = vrot.slane %v3048, 2
        %v3818 = vsel %vm1498, %v3815, %v3817
        %v3819 = vrot.slane %v3049, 2
        %v3820 = vrot.slane %v3050, 2
        %v3821 = vsel %vm1498, %v3819, %v3820
        %v3822 = vrot.slane %v3051, 2
        %v3823 = vsel %vm1498, %v3820, %v3822
        %v3824 = vrot.slane %v3052, 2
        %v3825 = vrot.slane %v3053, 2
        %v3826 = vsel %vm1498, %v3824, %v3825
        %v3827 = vrot.slane %v3054, 2
        %v3828 = vsel %vm1498, %v3825, %v3827
        %v3829 = vrot.slane %v3055, 2
        %v3830 = vrot.slane %v3056, 2
        %v3831 = vsel %vm1498, %v3829, %v3830
        %v3832 = vrot.slane %v3057, 2
        %v3833 = vsel %vm1498, %v3830, %v3832
        %v3834 = vrot.slane %v3058, 2
        %v3835 = vrot.slane %v3059, 2
        %v3836 = vsel %vm1498, %v3834, %v3835
        %v3837 = vrot.slane %v3060, 2
        %v3838 = vsel %vm1498, %v3835, %v3837
        %v3839 = vrot.slane %v3061, 2
        %v3840 = vrot.slane %v3062, 2
        %v3841 = vsel %vm1498, %v3839, %v3840
        %v3842 = vrot.slane %v3063, 2
        %v3843 = vsel %vm1498, %v3840, %v3842
        %v3844 = vrot.slane %v3064, 2
        %v3845 = vrot.slane %v3065, 2
        %v3846 = vsel %vm1498, %v3844, %v3845
        %v3847 = vrot.slane %v3066, 2
        %v3848 = vsel %vm1498, %v3845, %v3847
        %v3849 = vrot.slane %v3067, 2
        %v3850 = vrot.slane %v3068, 2
        %v3851 = vsel %vm1498, %v3849, %v3850
        %v3852 = vrot.slane %v3069, 2
        %v3853 = vsel %vm1498, %v3850, %v3852
        %v3854 = vrot.slane %v3070, 2
        %v3855 = vrot.slane %v3071, 2
        %v3856 = vsel %vm1498, %v3854, %v3855
        %v3857 = vrot.slane %v3072, 2
        %v3858 = vsel %vm1498, %v3855, %v3857
        %v3859 = vrot.slane %v3073, 2
        %v3860 = vrot.slane %v3074, 2
        %v3861 = vsel %vm1498, %v3859, %v3860
        %v3862 = vrot.slane %v3075, 2
        %v3863 = vsel %vm1498, %v3860, %v3862
        %v3896 = vpack.c.bf16 %v3788, %v3786
        %v3897 = vpack.c.bf16 %v3793, %v3791
        %v3898 = vpack.c.bf16 %v3798, %v3796
        %v3899 = vpack.c.bf16 %v3803, %v3801
        %v3900 = vpack.c.bf16 %v3808, %v3806
        %v3901 = vpack.c.bf16 %v3813, %v3811
        %v3902 = vpack.c.bf16 %v3818, %v3816
        %v3903 = vpack.c.bf16 %v3823, %v3821
        %v3904 = vpack.c.bf16 %v3828, %v3826
        %v3905 = vpack.c.bf16 %v3833, %v3831
        %v3906 = vpack.c.bf16 %v3838, %v3836
        %v3907 = vpack.c.bf16 %v3843, %v3841
        %v3908 = vpack.c.bf16 %v3848, %v3846
        %v3909 = vpack.c.bf16 %v3853, %v3851
        %v3910 = vpack.c.bf16 %v3858, %v3856
        %v3911 = vpack.c.bf16 %v3863, %v3861
        %s3912 = scalar_lea.vmem [#allocation8], 512
        %v3913 = vld [vmem:[%s3912] sm:$0xf]
        %v3914 = vld [vmem:[%s3912 + $0x4] sm:$0xf]
        %v3915 = vld [vmem:[%s3912 + $0x8] sm:$0xf]
        %v3916 = vld [vmem:[%s3912 + $0xc] sm:$0xf]
        %v3917 = vld [vmem:[%s3912 + $0x10] sm:$0xf]
        %v3918 = vld [vmem:[%s3912 + $0x14] sm:$0xf]
        %v3919 = vld [vmem:[%s3912 + $0x18] sm:$0xf]
        %v3920 = vld [vmem:[%s3912 + $0x1c] sm:$0xf]
        %v3921 = vld [vmem:[%s3912 + $0x20] sm:$0xf]
        %v3922 = vld [vmem:[%s3912 + $0x24] sm:$0xf]
        %v3923 = vld [vmem:[%s3912 + $0x28] sm:$0xf]
        %v3924 = vld [vmem:[%s3912 + $0x2c] sm:$0xf]
        %v3925 = vld [vmem:[%s3912 + $0x30] sm:$0xf]
        %v3926 = vld [vmem:[%s3912 + $0x34] sm:$0xf]
        %v3927 = vld [vmem:[%s3912 + $0x38] sm:$0xf]
        %v3928 = vld [vmem:[%s3912 + $0x3c] sm:$0xf]
        %v3945 = vunpack.c.l.b16 %v3913
        %v3946 = vunpack.c.l.b16 %v3914
        %v3947 = vunpack.c.l.b16 %v3915
        %v3948 = vunpack.c.l.b16 %v3916
        %v3949 = vunpack.c.l.b16 %v3917
        %v3950 = vunpack.c.l.b16 %v3918
        %v3951 = vunpack.c.l.b16 %v3919
        %v3952 = vunpack.c.l.b16 %v3920
        %v3953 = vunpack.c.l.b16 %v3921
        %v3954 = vunpack.c.l.b16 %v3922
        %v3955 = vunpack.c.l.b16 %v3923
        %v3956 = vunpack.c.l.b16 %v3924
        %v3957 = vunpack.c.l.b16 %v3925
        %v3958 = vunpack.c.l.b16 %v3926
        %v3959 = vunpack.c.l.b16 %v3927
        %v3960 = vunpack.c.l.b16 %v3928
        %v3961 = vpack.c.b16 %v3946, %v3945
        %v3962 = vpack.c.b16 %v3948, %v3947
        %v3963 = vpack.c.b16 %v3950, %v3949
        %v3964 = vpack.c.b16 %v3952, %v3951
        %v3965 = vpack.c.b16 %v3954, %v3953
        %v3966 = vpack.c.b16 %v3956, %v3955
        %v3967 = vpack.c.b16 %v3958, %v3957
        %v3968 = vpack.c.b16 %v3960, %v3959
        %3977 = vmatprep.subr.bf16.mxu0 0
        %3978 = vmatpush1.bf16.msra.mxu0 %v3961
        %3979 = vmatprep.subr.bf16.mxu0 0
        %3980 = vmatpush1.bf16.msra.mxu0 %v3962
        %3981 = vmatprep.subr.bf16.mxu0 0
        %3982 = vmatpush1.bf16.msra.mxu0 %v3963
        %3983 = vmatprep.subr.bf16.mxu0 0
        %3984 = vmatpush1.bf16.msra.mxu0 %v3964
        %3985 = vmatprep.subr.bf16.mxu0 0
        %3986 = vmatpush1.bf16.msra.mxu0 %v3965
        %3987 = vmatprep.subr.bf16.mxu0 0
        %3988 = vmatpush1.bf16.msra.mxu0 %v3966
        %3989 = vmatprep.subr.bf16.mxu0 0
        %3990 = vmatpush1.bf16.msra.mxu0 %v3967
        %3991 = vmatprep.subr.bf16.mxu0 0
        %3992 = vmatpush1.bf16.msra.mxu0 %v3968
        %3993 = vmatprep.subr.bf16.mxu0 0
        %3994 = vmatpush1.bf16.msra.mxu0 0
        %3995 = vmatprep.subr.bf16.mxu0 0
        %3996 = vmatpush1.bf16.msra.mxu0 0
        %3997 = vmatprep.subr.bf16.mxu0 0
        %3998 = vmatpush1.bf16.msra.mxu0 0
        %3999 = vmatprep.subr.bf16.mxu0 0
        %4000 = vmatpush1.bf16.msra.mxu0 0
        %4001 = vmatprep.subr.bf16.mxu0 0
        %4002 = vmatpush1.bf16.msra.mxu0 0
        %4003 = vmatprep.subr.bf16.mxu0 0
        %4004 = vmatpush1.bf16.msra.mxu0 0
        %4005 = vmatprep.subr.bf16.mxu0 0
        %4006 = vmatpush1.bf16.msra.mxu0 0
        %4007 = vmatprep.subr.bf16.mxu0 0
        %4008 = vmatpush1.bf16.msra.mxu0 0
        %4009 = vmatprep.mubr.bf16.mxu0 0
        %4010 = vmatmul.mubr.bf16.gmra.mrb[0].mxu0 %v3896
        %v4011 = vpop.f32.mrb[0].mxu0
        %v4012 = vadd.f32 0.0, %v4011
        %v4013 = vpop.f32.mrb[0].mxu0
        %v4014 = vpop.f32.mrb[0].mxu0
        %v4015 = vadd.f32 0.0, %v4014
        %v4016 = vpop.f32.mrb[0].mxu0
        %4017 = vmatprep.mubr.bf16.mxu0 0
        %4018 = vmatmul.mubr.bf16.gmra.mrb[0].mxu0 %v3897
        %v4019 = vpop.f32.mrb[0].mxu0
        %v4020 = vadd.f32 0.0, %v4019
        %v4021 = vpop.f32.mrb[0].mxu0
        %v4022 = vpop.f32.mrb[0].mxu0
        %v4023 = vadd.f32 0.0, %v4022
        %v4024 = vpop.f32.mrb[0].mxu0
        %4025 = vmatprep.mubr.bf16.mxu0 0
        %4026 = vmatmul.mubr.bf16.gmra.mrb[0].mxu0 %v3898
        %v4027 = vpop.f32.mrb[0].mxu0
        %v4028 = vadd.f32 0.0, %v4027
        %v4029 = vpop.f32.mrb[0].mxu0
        %v4030 = vpop.f32.mrb[0].mxu0
        %v4031 = vadd.f32 0.0, %v4030
        %v4032 = vpop.f32.mrb[0].mxu0
        %4033 = vmatprep.mubr.bf16.mxu0 0
        %4034 = vmatmul.mubr.bf16.gmra.mrb[0].mxu0 %v3899
        %v4035 = vpop.f32.mrb[0].mxu0
        %v4036 = vadd.f32 0.0, %v4035
        %v4037 = vpop.f32.mrb[0].mxu0
        %v4038 = vpop.f32.mrb[0].mxu0
        %v4039 = vadd.f32 0.0, %v4038
        %v4040 = vpop.f32.mrb[0].mxu0
        %4041 = vmatprep.mubr.bf16.mxu0 0
        %4042 = vmatmul.mubr.bf16.gmra.mrb[0].mxu0 %v3900
        %v4043 = vpop.f32.mrb[0].mxu0
        %v4044 = vadd.f32 0.0, %v4043
        %v4045 = vpop.f32.mrb[0].mxu0
        %v4046 = vpop.f32.mrb[0].mxu0
        %v4047 = vadd.f32 0.0, %v4046
        %v4048 = vpop.f32.mrb[0].mxu0
        %4049 = vmatprep.mubr.bf16.mxu0 0
        %4050 = vmatmul.mubr.bf16.gmra.mrb[0].mxu0 %v3901
        %v4051 = vpop.f32.mrb[0].mxu0
        %v4052 = vadd.f32 0.0, %v4051
        %v4053 = vpop.f32.mrb[0].mxu0
        %v4054 = vpop.f32.mrb[0].mxu0
        %v4055 = vadd.f32 0.0, %v4054
        %v4056 = vpop.f32.mrb[0].mxu0
        %4057 = vmatprep.mubr.bf16.mxu0 0
        %4058 = vmatmul.mubr.bf16.gmra.mrb[0].mxu0 %v3902
        %v4059 = vpop.f32.mrb[0].mxu0
        %v4060 = vadd.f32 0.0, %v4059
        %v4061 = vpop.f32.mrb[0].mxu0
        %v4062 = vpop.f32.mrb[0].mxu0
        %v4063 = vadd.f32 0.0, %v4062
        %v4064 = vpop.f32.mrb[0].mxu0
        %4065 = vmatprep.mubr.bf16.mxu0 0
        %4066 = vmatmul.mubr.bf16.gmra.mrb[0].mxu0 %v3903
        %v4067 = vpop.f32.mrb[0].mxu0
        %v4068 = vadd.f32 0.0, %v4067
        %v4069 = vpop.f32.mrb[0].mxu0
        %v4070 = vpop.f32.mrb[0].mxu0
        %v4071 = vadd.f32 0.0, %v4070
        %v4072 = vpop.f32.mrb[0].mxu0
        %4073 = vmatprep.mubr.bf16.mxu0 0
        %4074 = vmatmul.mubr.bf16.gmra.mrb[0].mxu0 %v3904
        %v4075 = vpop.f32.mrb[0].mxu0
        %v4076 = vadd.f32 0.0, %v4075
        %v4077 = vpop.f32.mrb[0].mxu0
        %v4078 = vpop.f32.mrb[0].mxu0
        %v4079 = vadd.f32 0.0, %v4078
        %v4080 = vpop.f32.mrb[0].mxu0
        %4081 = vmatprep.mubr.bf16.mxu0 0
        %4082 = vmatmul.mubr.bf16.gmra.mrb[0].mxu0 %v3905
        %v4083 = vpop.f32.mrb[0].mxu0
        %v4084 = vadd.f32 0.0, %v4083
        %v4085 = vpop.f32.mrb[0].mxu0
        %v4086 = vpop.f32.mrb[0].mxu0
        %v4087 = vadd.f32 0.0, %v4086
        %v4088 = vpop.f32.mrb[0].mxu0
        %4089 = vmatprep.mubr.bf16.mxu0 0
        %4090 = vmatmul.mubr.bf16.gmra.mrb[0].mxu0 %v3906
        %v4091 = vpop.f32.mrb[0].mxu0
        %v4092 = vadd.f32 0.0, %v4091
        %v4093 = vpop.f32.mrb[0].mxu0
        %v4094 = vpop.f32.mrb[0].mxu0
        %v4095 = vadd.f32 0.0, %v4094
        %v4096 = vpop.f32.mrb[0].mxu0
        %4097 = vmatprep.mubr.bf16.mxu0 0
        %4098 = vmatmul.mubr.bf16.gmra.mrb[0].mxu0 %v3907
        %v4099 = vpop.f32.mrb[0].mxu0
        %v4100 = vadd.f32 0.0, %v4099
        %v4101 = vpop.f32.mrb[0].mxu0
        %v4102 = vpop.f32.mrb[0].mxu0
        %v4103 = vadd.f32 0.0, %v4102
        %v4104 = vpop.f32.mrb[0].mxu0
        %4105 = vmatprep.mubr.bf16.mxu0 0
        %4106 = vmatmul.mubr.bf16.gmra.mrb[0].mxu0 %v3908
        %v4107 = vpop.f32.mrb[0].mxu0
        %v4108 = vadd.f32 0.0, %v4107
        %v4109 = vpop.f32.mrb[0].mxu0
        %v4110 = vpop.f32.mrb[0].mxu0
        %v4111 = vadd.f32 0.0, %v4110
        %v4112 = vpop.f32.mrb[0].mxu0
        %4113 = vmatprep.mubr.bf16.mxu0 0
        %4114 = vmatmul.mubr.bf16.gmra.mrb[0].mxu0 %v3909
        %v4115 = vpop.f32.mrb[0].mxu0
        %v4116 = vadd.f32 0.0, %v4115
        %v4117 = vpop.f32.mrb[0].mxu0
        %v4118 = vpop.f32.mrb[0].mxu0
        %v4119 = vadd.f32 0.0, %v4118
        %v4120 = vpop.f32.mrb[0].mxu0
        %4121 = vmatprep.mubr.bf16.mxu0 0
        %4122 = vmatmul.mubr.bf16.gmra.mrb[0].mxu0 %v3910
        %v4123 = vpop.f32.mrb[0].mxu0
        %v4124 = vadd.f32 0.0, %v4123
        %v4125 = vpop.f32.mrb[0].mxu0
        %v4126 = vpop.f32.mrb[0].mxu0
        %v4127 = vadd.f32 0.0, %v4126
        %v4128 = vpop.f32.mrb[0].mxu0
        %4129 = vmatprep.mubr.bf16.mxu0 0
        %4130 = vmatmul.mubr.bf16.gmra.mrb[0].mxu0 %v3911
        %v4131 = vpop.f32.mrb[0].mxu0
        %v4132 = vadd.f32 0.0, %v4131
        %v4133 = vpop.f32.mrb[0].mxu0
        %v4134 = vpop.f32.mrb[0].mxu0
        %v4135 = vadd.f32 0.0, %v4134
        %v4136 = vpop.f32.mrb[0].mxu0
        %4137 = vdwg.mxu0
        %v4138 = vadd.f32 %v3752, %v4012
        %v4139 = vadd.f32 %v3753, %v4015
        %v4140 = vadd.f32 %v3754, %v4020
        %v4141 = vadd.f32 %v3755, %v4023
        %v4142 = vadd.f32 %v3756, %v4028
        %v4143 = vadd.f32 %v3757, %v4031
        %v4144 = vadd.f32 %v3758, %v4036
        %v4145 = vadd.f32 %v3759, %v4039
        %v4146 = vadd.f32 %v3760, %v4044
        %v4147 = vadd.f32 %v3761, %v4047
        %v4148 = vadd.f32 %v3762, %v4052
        %v4149 = vadd.f32 %v3763, %v4055
        %v4150 = vadd.f32 %v3764, %v4060
        %v4151 = vadd.f32 %v3765, %v4063
        %v4152 = vadd.f32 %v3766, %v4068
        %v4153 = vadd.f32 %v3767, %v4071
        %v4154 = vadd.f32 %v3768, %v4076
        %v4155 = vadd.f32 %v3769, %v4079
        %v4156 = vadd.f32 %v3770, %v4084
        %v4157 = vadd.f32 %v3771, %v4087
        %v4158 = vadd.f32 %v3772, %v4092
        %v4159 = vadd.f32 %v3773, %v4095
        %v4160 = vadd.f32 %v3774, %v4100
        %v4161 = vadd.f32 %v3775, %v4103
        %v4162 = vadd.f32 %v3776, %v4108
        %v4163 = vadd.f32 %v3777, %v4111
        %v4164 = vadd.f32 %v3778, %v4116
        %v4165 = vadd.f32 %v3779, %v4119
        %v4166 = vadd.f32 %v3780, %v4124
        %v4167 = vadd.f32 %v3781, %v4127
        %v4168 = vadd.f32 %v3782, %v4132
        %v4169 = vadd.f32 %v3783, %v4135
        %v4170 = vld [vmem:[%s4] sm:$0x1]
        %v4172 = vlaneseq
        %v4173 = vshrl.u32 %v4172, 7
        %v4174 = vsub.s32 0, %v4173
        %v4175 = vrot.slane %v4170, %v4174
        %v4177 = vadd.f32 %v4138, %v4175
        %v4178 = vadd.f32 %v4139, %v4175
        %v4179 = vadd.f32 %v4140, %v4175
        %v4180 = vadd.f32 %v4141, %v4175
        %v4181 = vadd.f32 %v4142, %v4175
        %v4182 = vadd.f32 %v4143, %v4175
        %v4183 = vadd.f32 %v4144, %v4175
        %v4184 = vadd.f32 %v4145, %v4175
        %v4185 = vadd.f32 %v4146, %v4175
        %v4186 = vadd.f32 %v4147, %v4175
        %v4187 = vadd.f32 %v4148, %v4175
        %v4188 = vadd.f32 %v4149, %v4175
        %v4189 = vadd.f32 %v4150, %v4175
        %v4190 = vadd.f32 %v4151, %v4175
        %v4191 = vadd.f32 %v4152, %v4175
        %v4192 = vadd.f32 %v4153, %v4175
        %v4193 = vadd.f32 %v4154, %v4175
        %v4194 = vadd.f32 %v4155, %v4175
        %v4195 = vadd.f32 %v4156, %v4175
        %v4196 = vadd.f32 %v4157, %v4175
        %v4197 = vadd.f32 %v4158, %v4175
        %v4198 = vadd.f32 %v4159, %v4175
        %v4199 = vadd.f32 %v4160, %v4175
        %v4200 = vadd.f32 %v4161, %v4175
        %v4201 = vadd.f32 %v4162, %v4175
        %v4202 = vadd.f32 %v4163, %v4175
        %v4203 = vadd.f32 %v4164, %v4175
        %v4204 = vadd.f32 %v4165, %v4175
        %v4205 = vadd.f32 %v4166, %v4175
        %v4206 = vadd.f32 %v4167, %v4175
        %v4207 = vadd.f32 %v4168, %v4175
        %v4208 = vadd.f32 %v4169, %v4175
        %v4209 = vmax.f32 %v4177, 0.0
        %v4210 = vmax.f32 %v4178, 0.0
        %v4211 = vmax.f32 %v4179, 0.0
        %v4212 = vmax.f32 %v4180, 0.0
        %v4213 = vmax.f32 %v4181, 0.0
        %v4214 = vmax.f32 %v4182, 0.0
        %v4215 = vmax.f32 %v4183, 0.0
        %v4216 = vmax.f32 %v4184, 0.0
        %v4217 = vmax.f32 %v4185, 0.0
        %v4218 = vmax.f32 %v4186, 0.0
        %v4219 = vmax.f32 %v4187, 0.0
        %v4220 = vmax.f32 %v4188, 0.0
        %v4221 = vmax.f32 %v4189, 0.0
        %v4222 = vmax.f32 %v4190, 0.0
        %v4223 = vmax.f32 %v4191, 0.0
        %v4224 = vmax.f32 %v4192, 0.0
        %v4225 = vmax.f32 %v4193, 0.0
        %v4226 = vmax.f32 %v4194, 0.0
        %v4227 = vmax.f32 %v4195, 0.0
        %v4228 = vmax.f32 %v4196, 0.0
        %v4229 = vmax.f32 %v4197, 0.0
        %v4230 = vmax.f32 %v4198, 0.0
        %v4231 = vmax.f32 %v4199, 0.0
        %v4232 = vmax.f32 %v4200, 0.0
        %v4233 = vmax.f32 %v4201, 0.0
        %v4234 = vmax.f32 %v4202, 0.0
        %v4235 = vmax.f32 %v4203, 0.0
        %v4236 = vmax.f32 %v4204, 0.0
        %v4237 = vmax.f32 %v4205, 0.0
        %v4238 = vmax.f32 %v4206, 0.0
        %v4239 = vmax.f32 %v4207, 0.0
        %v4240 = vmax.f32 %v4208, 0.0
        %v4241 = vpack.c.bf16 %v4210, %v4209
        %v4242 = vpack.c.bf16 %v4212, %v4211
        %v4243 = vpack.c.bf16 %v4214, %v4213
        %v4244 = vpack.c.bf16 %v4216, %v4215
        %v4245 = vpack.c.bf16 %v4218, %v4217
        %v4246 = vpack.c.bf16 %v4220, %v4219
        %v4247 = vpack.c.bf16 %v4222, %v4221
        %v4248 = vpack.c.bf16 %v4224, %v4223
        %v4249 = vpack.c.bf16 %v4226, %v4225
        %v4250 = vpack.c.bf16 %v4228, %v4227
        %v4251 = vpack.c.bf16 %v4230, %v4229
        %v4252 = vpack.c.bf16 %v4232, %v4231
        %v4253 = vpack.c.bf16 %v4234, %v4233
        %v4254 = vpack.c.bf16 %v4236, %v4235
        %v4255 = vpack.c.bf16 %v4238, %v4237
        %v4256 = vpack.c.bf16 %v4240, %v4239
        %v4257 = vld [vmem:[#allocation9] sm:$0xf]
        %v4258 = vld [vmem:[#allocation9 + $0x4] sm:$0xf]
        %v4259 = vld [vmem:[#allocation9 + $0x8] sm:$0xf]
        %v4260 = vld [vmem:[#allocation9 + $0xc] sm:$0xf]
        %v4261 = vld [vmem:[#allocation9 + $0x10] sm:$0xf]
        %v4262 = vld [vmem:[#allocation9 + $0x14] sm:$0xf]
        %v4263 = vld [vmem:[#allocation9 + $0x18] sm:$0xf]
        %v4264 = vld [vmem:[#allocation9 + $0x1c] sm:$0xf]
        %v4265 = vld [vmem:[#allocation9 + $0x20] sm:$0xf]
        %v4266 = vld [vmem:[#allocation9 + $0x24] sm:$0xf]
        %v4267 = vld [vmem:[#allocation9 + $0x28] sm:$0xf]
        %v4268 = vld [vmem:[#allocation9 + $0x2c] sm:$0xf]
        %v4269 = vld [vmem:[#allocation9 + $0x30] sm:$0xf]
        %v4270 = vld [vmem:[#allocation9 + $0x34] sm:$0xf]
        %v4271 = vld [vmem:[#allocation9 + $0x38] sm:$0xf]
        %v4272 = vld [vmem:[#allocation9 + $0x3c] sm:$0xf]
        %v4273 = vld [vmem:[%s6] sm:$0x1]
        %v4275 = vlaneseq
        %v4276 = vshrl.u32 %v4275, 7
        %v4277 = vsub.s32 0, %v4276
        %v4278 = vrot.slane %v4273, %v4277
        %v4296 = vunpack.c.l.b16 %v4257
        %v4297 = vunpack.c.l.b16 %v4258
        %v4298 = vunpack.c.l.b16 %v4259
        %v4299 = vunpack.c.l.b16 %v4260
        %v4300 = vunpack.c.l.b16 %v4261
        %v4301 = vunpack.c.l.b16 %v4262
        %v4302 = vunpack.c.l.b16 %v4263
        %v4303 = vunpack.c.l.b16 %v4264
        %v4304 = vunpack.c.l.b16 %v4265
        %v4305 = vunpack.c.l.b16 %v4266
        %v4306 = vunpack.c.l.b16 %v4267
        %v4307 = vunpack.c.l.b16 %v4268
        %v4308 = vunpack.c.l.b16 %v4269
        %v4309 = vunpack.c.l.b16 %v4270
        %v4310 = vunpack.c.l.b16 %v4271
        %v4311 = vunpack.c.l.b16 %v4272
        %v4312 = vpack.c.b16 %v4297, %v4296
        %v4313 = vpack.c.b16 %v4299, %v4298
        %v4314 = vpack.c.b16 %v4301, %v4300
        %v4315 = vpack.c.b16 %v4303, %v4302
        %v4316 = vpack.c.b16 %v4305, %v4304
        %v4317 = vpack.c.b16 %v4307, %v4306
        %v4318 = vpack.c.b16 %v4309, %v4308
        %v4319 = vpack.c.b16 %v4311, %v4310
        %4328 = vmatprep.subr.bf16.mxu0 0
        %4329 = vmatpush1.bf16.msra.mxu0 %v4312
        %4330 = vmatprep.subr.bf16.mxu0 0
        %4331 = vmatpush1.bf16.msra.mxu0 %v4313
        %4332 = vmatprep.subr.bf16.mxu0 0
        %4333 = vmatpush1.bf16.msra.mxu0 %v4314
        %4334 = vmatprep.subr.bf16.mxu0 0
        %4335 = vmatpush1.bf16.msra.mxu0 %v4315
        %4336 = vmatprep.subr.bf16.mxu0 0
        %4337 = vmatpush1.bf16.msra.mxu0 %v4316
        %4338 = vmatprep.subr.bf16.mxu0 0
        %4339 = vmatpush1.bf16.msra.mxu0 %v4317
        %4340 = vmatprep.subr.bf16.mxu0 0
        %4341 = vmatpush1.bf16.msra.mxu0 %v4318
        %4342 = vmatprep.subr.bf16.mxu0 0
        %4343 = vmatpush1.bf16.msra.mxu0 %v4319
        %4344 = vmatprep.subr.bf16.mxu0 0
        %4345 = vmatpush1.bf16.msra.mxu0 0
        %4346 = vmatprep.subr.bf16.mxu0 0
        %4347 = vmatpush1.bf16.msra.mxu0 0
        %4348 = vmatprep.subr.bf16.mxu0 0
        %4349 = vmatpush1.bf16.msra.mxu0 0
        %4350 = vmatprep.subr.bf16.mxu0 0
        %4351 = vmatpush1.bf16.msra.mxu0 0
        %4352 = vmatprep.subr.bf16.mxu0 0
        %4353 = vmatpush1.bf16.msra.mxu0 0
        %4354 = vmatprep.subr.bf16.mxu0 0
        %4355 = vmatpush1.bf16.msra.mxu0 0
        %4356 = vmatprep.subr.bf16.mxu0 0
        %4357 = vmatpush1.bf16.msra.mxu0 0
        %4358 = vmatprep.subr.bf16.mxu0 0
        %4359 = vmatpush1.bf16.msra.mxu0 0
        %4360 = vmatprep.mubr.bf16.mxu0 0
        %4361 = vmatmul.mubr.bf16.gmra.mrb[0].mxu0 %v4241
        %v4362 = vpop.f32.mrb[0].mxu0
        %v4363 = vadd.f32 %v4278, %v4362
        %v4364 = vpop.f32.mrb[0].mxu0
        %v4365 = vpop.f32.mrb[0].mxu0
        %v4366 = vadd.f32 %v4278, %v4365
        %v4367 = vpop.f32.mrb[0].mxu0
        %4368 = vmatprep.mubr.bf16.mxu0 0
        %4369 = vmatmul.mubr.bf16.gmra.mrb[0].mxu0 %v4242
        %v4370 = vpop.f32.mrb[0].mxu0
        %v4371 = vadd.f32 %v4278, %v4370
        %v4372 = vpop.f32.mrb[0].mxu0
        %v4373 = vpop.f32.mrb[0].mxu0
        %v4374 = vadd.f32 %v4278, %v4373
        %v4375 = vpop.f32.mrb[0].mxu0
        %4376 = vmatprep.mubr.bf16.mxu0 0
        %4377 = vmatmul.mubr.bf16.gmra.mrb[0].mxu0 %v4243
        %v4378 = vpop.f32.mrb[0].mxu0
        %v4379 = vadd.f32 %v4278, %v4378
        %v4380 = vpop.f32.mrb[0].mxu0
        %v4381 = vpop.f32.mrb[0].mxu0
        %v4382 = vadd.f32 %v4278, %v4381
        %v4383 = vpop.f32.mrb[0].mxu0
        %4384 = vmatprep.mubr.bf16.mxu0 0
        %4385 = vmatmul.mubr.bf16.gmra.mrb[0].mxu0 %v4244
        %v4386 = vpop.f32.mrb[0].mxu0
        %v4387 = vadd.f32 %v4278, %v4386
        %v4388 = vpop.f32.mrb[0].mxu0
        %v4389 = vpop.f32.mrb[0].mxu0
        %v4390 = vadd.f32 %v4278, %v4389
        %v4391 = vpop.f32.mrb[0].mxu0
        %4392 = vmatprep.mubr.bf16.mxu0 0
        %4393 = vmatmul.mubr.bf16.gmra.mrb[0].mxu0 %v4245
        %v4394 = vpop.f32.mrb[0].mxu0
        %v4395 = vadd.f32 %v4278, %v4394
        %v4396 = vpop.f32.mrb[0].mxu0
        %v4397 = vpop.f32.mrb[0].mxu0
        %v4398 = vadd.f32 %v4278, %v4397
        %v4399 = vpop.f32.mrb[0].mxu0
        %4400 = vmatprep.mubr.bf16.mxu0 0
        %4401 = vmatmul.mubr.bf16.gmra.mrb[0].mxu0 %v4246
        %v4402 = vpop.f32.mrb[0].mxu0
        %v4403 = vadd.f32 %v4278, %v4402
        %v4404 = vpop.f32.mrb[0].mxu0
        %v4405 = vpop.f32.mrb[0].mxu0
        %v4406 = vadd.f32 %v4278, %v4405
        %v4407 = vpop.f32.mrb[0].mxu0
        %4408 = vmatprep.mubr.bf16.mxu0 0
        %4409 = vmatmul.mubr.bf16.gmra.mrb[0].mxu0 %v4247
        %v4410 = vpop.f32.mrb[0].mxu0
        %v4411 = vadd.f32 %v4278, %v4410
        %v4412 = vpop.f32.mrb[0].mxu0
        %v4413 = vpop.f32.mrb[0].mxu0
        %v4414 = vadd.f32 %v4278, %v4413
        %v4415 = vpop.f32.mrb[0].mxu0
        %4416 = vmatprep.mubr.bf16.mxu0 0
        %4417 = vmatmul.mubr.bf16.gmra.mrb[0].mxu0 %v4248
        %v4418 = vpop.f32.mrb[0].mxu0
        %v4419 = vadd.f32 %v4278, %v4418
        %v4420 = vpop.f32.mrb[0].mxu0
        %v4421 = vpop.f32.mrb[0].mxu0
        %v4422 = vadd.f32 %v4278, %v4421
        %v4423 = vpop.f32.mrb[0].mxu0
        %4424 = vmatprep.mubr.bf16.mxu0 0
        %4425 = vmatmul.mubr.bf16.gmra.mrb[0].mxu0 %v4249
        %v4426 = vpop.f32.mrb[0].mxu0
        %v4427 = vadd.f32 %v4278, %v4426
        %v4428 = vpop.f32.mrb[0].mxu0
        %v4429 = vpop.f32.mrb[0].mxu0
        %v4430 = vadd.f32 %v4278, %v4429
        %v4431 = vpop.f32.mrb[0].mxu0
        %4432 = vmatprep.mubr.bf16.mxu0 0
        %4433 = vmatmul.mubr.bf16.gmra.mrb[0].mxu0 %v4250
        %v4434 = vpop.f32.mrb[0].mxu0
        %v4435 = vadd.f32 %v4278, %v4434
        %v4436 = vpop.f32.mrb[0].mxu0
        %v4437 = vpop.f32.mrb[0].mxu0
        %v4438 = vadd.f32 %v4278, %v4437
        %v4439 = vpop.f32.mrb[0].mxu0
        %4440 = vmatprep.mubr.bf16.mxu0 0
        %4441 = vmatmul.mubr.bf16.gmra.mrb[0].mxu0 %v4251
        %v4442 = vpop.f32.mrb[0].mxu0
        %v4443 = vadd.f32 %v4278, %v4442
        %v4444 = vpop.f32.mrb[0].mxu0
        %v4445 = vpop.f32.mrb[0].mxu0
        %v4446 = vadd.f32 %v4278, %v4445
        %v4447 = vpop.f32.mrb[0].mxu0
        %4448 = vmatprep.mubr.bf16.mxu0 0
        %4449 = vmatmul.mubr.bf16.gmra.mrb[0].mxu0 %v4252
        %v4450 = vpop.f32.mrb[0].mxu0
        %v4451 = vadd.f32 %v4278, %v4450
        %v4452 = vpop.f32.mrb[0].mxu0
        %v4453 = vpop.f32.mrb[0].mxu0
        %v4454 = vadd.f32 %v4278, %v4453
        %v4455 = vpop.f32.mrb[0].mxu0
        %4456 = vmatprep.mubr.bf16.mxu0 0
        %4457 = vmatmul.mubr.bf16.gmra.mrb[0].mxu0 %v4253
        %v4458 = vpop.f32.mrb[0].mxu0
        %v4459 = vadd.f32 %v4278, %v4458
        %v4460 = vpop.f32.mrb[0].mxu0
        %v4461 = vpop.f32.mrb[0].mxu0
        %v4462 = vadd.f32 %v4278, %v4461
        %v4463 = vpop.f32.mrb[0].mxu0
        %4464 = vmatprep.mubr.bf16.mxu0 0
        %4465 = vmatmul.mubr.bf16.gmra.mrb[0].mxu0 %v4254
        %v4466 = vpop.f32.mrb[0].mxu0
        %v4467 = vadd.f32 %v4278, %v4466
        %v4468 = vpop.f32.mrb[0].mxu0
        %v4469 = vpop.f32.mrb[0].mxu0
        %v4470 = vadd.f32 %v4278, %v4469
        %v4471 = vpop.f32.mrb[0].mxu0
        %4472 = vmatprep.mubr.bf16.mxu0 0
        %4473 = vmatmul.mubr.bf16.gmra.mrb[0].mxu0 %v4255
        %v4474 = vpop.f32.mrb[0].mxu0
        %v4475 = vadd.f32 %v4278, %v4474
        %v4476 = vpop.f32.mrb[0].mxu0
        %v4477 = vpop.f32.mrb[0].mxu0
        %v4478 = vadd.f32 %v4278, %v4477
        %v4479 = vpop.f32.mrb[0].mxu0
        %4480 = vmatprep.mubr.bf16.mxu0 0
        %4481 = vmatmul.mubr.bf16.gmra.mrb[0].mxu0 %v4256
        %v4482 = vpop.f32.mrb[0].mxu0
        %v4483 = vadd.f32 %v4278, %v4482
        %v4484 = vpop.f32.mrb[0].mxu0
        %v4485 = vpop.f32.mrb[0].mxu0
        %v4486 = vadd.f32 %v4278, %v4485
        %v4487 = vpop.f32.mrb[0].mxu0
        %4488 = vdwg.mxu0
        %v4489 = vunpack.c.l.bf16 %v382
        %v4490 = vunpack.c.l.bf16 %v383
        %v4491 = vunpack.c.l.bf16 %v384
        %v4492 = vunpack.c.l.bf16 %v385
        %v4493 = vunpack.c.l.bf16 %v386
        %v4494 = vunpack.c.l.bf16 %v387
        %v4495 = vunpack.c.l.bf16 %v388
        %v4496 = vunpack.c.l.bf16 %v389
        %v4497 = vunpack.c.l.bf16 %v390
        %v4498 = vunpack.c.l.bf16 %v391
        %v4499 = vunpack.c.l.bf16 %v392
        %v4500 = vunpack.c.l.bf16 %v393
        %v4501 = vunpack.c.l.bf16 %v394
        %v4502 = vunpack.c.l.bf16 %v395
        %v4503 = vunpack.c.l.bf16 %v396
        %v4504 = vunpack.c.l.bf16 %v397
        %v4505 = vunpack.c.l.bf16 %v398
        %v4506 = vunpack.c.l.bf16 %v399
        %v4507 = vunpack.c.l.bf16 %v400
        %v4508 = vunpack.c.l.bf16 %v401
        %v4509 = vunpack.c.l.bf16 %v402
        %v4510 = vunpack.c.l.bf16 %v403
        %v4511 = vunpack.c.l.bf16 %v404
        %v4512 = vunpack.c.l.bf16 %v405
        %v4513 = vunpack.c.l.bf16 %v406
        %v4514 = vunpack.c.l.bf16 %v407
        %v4515 = vunpack.c.l.bf16 %v408
        %v4516 = vunpack.c.l.bf16 %v409
        %v4517 = vunpack.c.l.bf16 %v410
        %v4518 = vunpack.c.l.bf16 %v411
        %v4519 = vunpack.c.l.bf16 %v412
        %v4520 = vunpack.c.l.bf16 %v413
        %v4521 = vadd.f32 %v4363, %v4489
        %v4522 = vadd.f32 %v4366, %v4490
        %v4523 = vadd.f32 %v4371, %v4491
        %v4524 = vadd.f32 %v4374, %v4492
        %v4525 = vadd.f32 %v4379, %v4493
        %v4526 = vadd.f32 %v4382, %v4494
        %v4527 = vadd.f32 %v4387, %v4495
        %v4528 = vadd.f32 %v4390, %v4496
        %v4529 = vadd.f32 %v4395, %v4497
        %v4530 = vadd.f32 %v4398, %v4498
        %v4531 = vadd.f32 %v4403, %v4499
        %v4532 = vadd.f32 %v4406, %v4500
        %v4533 = vadd.f32 %v4411, %v4501
        %v4534 = vadd.f32 %v4414, %v4502
        %v4535 = vadd.f32 %v4419, %v4503
        %v4536 = vadd.f32 %v4422, %v4504
        %v4537 = vadd.f32 %v4427, %v4505
        %v4538 = vadd.f32 %v4430, %v4506
        %v4539 = vadd.f32 %v4435, %v4507
        %v4540 = vadd.f32 %v4438, %v4508
        %v4541 = vadd.f32 %v4443, %v4509
        %v4542 = vadd.f32 %v4446, %v4510
        %v4543 = vadd.f32 %v4451, %v4511
        %v4544 = vadd.f32 %v4454, %v4512
        %v4545 = vadd.f32 %v4459, %v4513
        %v4546 = vadd.f32 %v4462, %v4514
        %v4547 = vadd.f32 %v4467, %v4515
        %v4548 = vadd.f32 %v4470, %v4516
        %v4549 = vadd.f32 %v4475, %v4517
        %v4550 = vadd.f32 %v4478, %v4518
        %v4551 = vadd.f32 %v4483, %v4519
        %v4552 = vadd.f32 %v4486, %v4520
        %v4553 = vmax.f32 %v4521, 0.0
        %v4554 = vmax.f32 %v4522, 0.0
        %v4555 = vmax.f32 %v4523, 0.0
        %v4556 = vmax.f32 %v4524, 0.0
        %v4557 = vmax.f32 %v4525, 0.0
        %v4558 = vmax.f32 %v4526, 0.0
        %v4559 = vmax.f32 %v4527, 0.0
        %v4560 = vmax.f32 %v4528, 0.0
        %v4561 = vmax.f32 %v4529, 0.0
        %v4562 = vmax.f32 %v4530, 0.0
        %v4563 = vmax.f32 %v4531, 0.0
        %v4564 = vmax.f32 %v4532, 0.0
        %v4565 = vmax.f32 %v4533, 0.0
        %v4566 = vmax.f32 %v4534, 0.0
        %v4567 = vmax.f32 %v4535, 0.0
        %v4568 = vmax.f32 %v4536, 0.0
        %v4569 = vmax.f32 %v4537, 0.0
        %v4570 = vmax.f32 %v4538, 0.0
        %v4571 = vmax.f32 %v4539, 0.0
        %v4572 = vmax.f32 %v4540, 0.0
        %v4573 = vmax.f32 %v4541, 0.0
        %v4574 = vmax.f32 %v4542, 0.0
        %v4575 = vmax.f32 %v4543, 0.0
        %v4576 = vmax.f32 %v4544, 0.0
        %v4577 = vmax.f32 %v4545, 0.0
        %v4578 = vmax.f32 %v4546, 0.0
        %v4579 = vmax.f32 %v4547, 0.0
        %v4580 = vmax.f32 %v4548, 0.0
        %v4581 = vmax.f32 %v4549, 0.0
        %v4582 = vmax.f32 %v4550, 0.0
        %v4583 = vmax.f32 %v4551, 0.0
        %v4584 = vmax.f32 %v4552, 0.0
        %v4585 = vmax.f32 %v4553, %v4557
        %v4586 = vmax.f32 %v4554, %v4558
        %v4587 = vmax.f32 %v4555, %v4559
        %v4588 = vmax.f32 %v4556, %v4560
        %v4589 = vmax.f32 %v4585, %v4561
        %v4590 = vmax.f32 %v4586, %v4562
        %v4591 = vmax.f32 %v4587, %v4563
        %v4592 = vmax.f32 %v4588, %v4564
        %v4593 = vmax.f32 %v4589, %v4565
        %v4594 = vmax.f32 %v4590, %v4566
        %v4595 = vmax.f32 %v4591, %v4567
        %v4596 = vmax.f32 %v4592, %v4568
        %v4597 = vmax.f32 %v4593, %v4569
        %v4598 = vmax.f32 %v4594, %v4570
        %v4599 = vmax.f32 %v4595, %v4571
        %v4600 = vmax.f32 %v4596, %v4572
        %v4601 = vmax.f32 %v4597, %v4573
        %v4602 = vmax.f32 %v4598, %v4574
        %v4603 = vmax.f32 %v4599, %v4575
        %v4604 = vmax.f32 %v4600, %v4576
        %v4605 = vmax.f32 %v4601, %v4577
        %v4606 = vmax.f32 %v4602, %v4578
        %v4607 = vmax.f32 %v4603, %v4579
        %v4608 = vmax.f32 %v4604, %v4580
        %v4609 = vmax.f32 %v4605, %v4581
        %v4610 = vmax.f32 %v4606, %v4582
        %v4611 = vmax.f32 %v4607, %v4583
        %v4612 = vmax.f32 %v4608, %v4584
        %v4613 = vmax.f32 %v4609, %v4610
        %v4614 = vmax.f32 %v4611, %v4612
        %v4615 = vmax.f32 %v4613, %v4614
        %v4616 = vrot.slane %v4615, 4
        %v4617 = vmax.f32 %v4615, %v4616
        %v4618 = vrot.slane %v4617, 2
        %v4619 = vmax.f32 %v4617, %v4618
        %v4620 = vrot.slane %v4619, 1
        %v4621 = vmax.f32 %v4619, %v4620
        %v4622 = vmul.f32 %v4621, 0.55
        %v4623 = vmin.f32 %v4553, %v4622
        %v4624 = vmin.f32 %v4554, %v4622
        %v4625 = vmin.f32 %v4555, %v4622
        %v4626 = vmin.f32 %v4556, %v4622
        %v4627 = vmin.f32 %v4557, %v4622
        %v4628 = vmin.f32 %v4558, %v4622
        %v4629 = vmin.f32 %v4559, %v4622
        %v4630 = vmin.f32 %v4560, %v4622
        %v4631 = vmin.f32 %v4561, %v4622
        %v4632 = vmin.f32 %v4562, %v4622
        %v4633 = vmin.f32 %v4563, %v4622
        %v4634 = vmin.f32 %v4564, %v4622
        %v4635 = vmin.f32 %v4565, %v4622
        %v4636 = vmin.f32 %v4566, %v4622
        %v4637 = vmin.f32 %v4567, %v4622
        %v4638 = vmin.f32 %v4568, %v4622
        %v4639 = vmin.f32 %v4569, %v4622
        %v4640 = vmin.f32 %v4570, %v4622
        %v4641 = vmin.f32 %v4571, %v4622
        %v4642 = vmin.f32 %v4572, %v4622
        %v4643 = vmin.f32 %v4573, %v4622
        %v4644 = vmin.f32 %v4574, %v4622
        %v4645 = vmin.f32 %v4575, %v4622
        %v4646 = vmin.f32 %v4576, %v4622
        %v4647 = vmin.f32 %v4577, %v4622
        %v4648 = vmin.f32 %v4578, %v4622
        %v4649 = vmin.f32 %v4579, %v4622
        %v4650 = vmin.f32 %v4580, %v4622
        %v4651 = vmin.f32 %v4581, %v4622
        %v4652 = vmin.f32 %v4582, %v4622
        %v4653 = vmin.f32 %v4583, %v4622
        %v4654 = vmin.f32 %v4584, %v4622
        %4655 = vst [vmem:[%s340] sm:$0xff] %v4623
        %4656 = vst [vmem:[%s340 + $0x8] sm:$0xff] %v4624
        %4657 = vst [vmem:[%s340 + $0x10] sm:$0xff] %v4625
        %4658 = vst [vmem:[%s340 + $0x18] sm:$0xff] %v4626
        %4659 = vst [vmem:[%s340 + $0x20] sm:$0xff] %v4627
        %4660 = vst [vmem:[%s340 + $0x28] sm:$0xff] %v4628
        %4661 = vst [vmem:[%s340 + $0x30] sm:$0xff] %v4629
        %4662 = vst [vmem:[%s340 + $0x38] sm:$0xff] %v4630
        %4663 = vst [vmem:[%s340 + $0x40] sm:$0xff] %v4631
        %4664 = vst [vmem:[%s340 + $0x48] sm:$0xff] %v4632
        %4665 = vst [vmem:[%s340 + $0x50] sm:$0xff] %v4633
        %4666 = vst [vmem:[%s340 + $0x58] sm:$0xff] %v4634
        %4667 = vst [vmem:[%s340 + $0x60] sm:$0xff] %v4635
        %4668 = vst [vmem:[%s340 + $0x68] sm:$0xff] %v4636
        %4669 = vst [vmem:[%s340 + $0x70] sm:$0xff] %v4637
        %4670 = vst [vmem:[%s340 + $0x78] sm:$0xff] %v4638
        %4671 = vst [vmem:[%s340 + $0x80] sm:$0xff] %v4639
        %4672 = vst [vmem:[%s340 + $0x88] sm:$0xff] %v4640
        %4673 = vst [vmem:[%s340 + $0x90] sm:$0xff] %v4641
        %4674 = vst [vmem:[%s340 + $0x98] sm:$0xff] %v4642
        %4675 = vst [vmem:[%s340 + $0xa0] sm:$0xff] %v4643
        %4676 = vst [vmem:[%s340 + $0xa8] sm:$0xff] %v4644
        %4677 = vst [vmem:[%s340 + $0xb0] sm:$0xff] %v4645
        %4678 = vst [vmem:[%s340 + $0xb8] sm:$0xff] %v4646
        %4679 = vst [vmem:[%s340 + $0xc0] sm:$0xff] %v4647
        %4680 = vst [vmem:[%s340 + $0xc8] sm:$0xff] %v4648
        %4681 = vst [vmem:[%s340 + $0xd0] sm:$0xff] %v4649
        %4682 = vst [vmem:[%s340 + $0xd8] sm:$0xff] %v4650
        %4683 = vst [vmem:[%s340 + $0xe0] sm:$0xff] %v4651
        %4684 = vst [vmem:[%s340 + $0xe8] sm:$0xff] %v4652
        %4685 = vst [vmem:[%s340 + $0xf0] sm:$0xff] %v4653
        %4686 = vst [vmem:[%s340 + $0xf8] sm:$0xff] %v4654
        %s4687 = sand.u32 %s186, 1
        %s4688 = scalar_lea.sflag [#allocation5], %s4687
        %s4689 = sand.u32 %s186, 1
        %s4690 = smul.addr %s4689, 256
        %s4691 = scalar_lea.vmem [#allocation11], %s4690
        // Predicated region
        $region65: #{tpu_custom_call.1} parent=47 // pred_check
          %p4692 = pneg %p196
        $region66: #{tpu_custom_call.1} parent=47 // pred_check_branch
          %4694 = sbr.rel (%p4692) target = $region68
        $region67: #{tpu_custom_call.1} parent=47 // pred_region
          %s4696 = ssub.s32 4096, 4096
          %4697 = vsyncadd %s4688, %s4696
          %s4698 = smul.addr %s26, 32
          %s4699 = smul.addr %s4698, 128
          %s4700 = scalar_lea.hbm %s7, %s4699
          %s4701 = sshll.u32 %s4691, 4
          %s4702 = int_to_ptr.vmem [resolvable:$true] %s4701
          %4707 = dma.vmem_to_hbm [thread:$0]  %s4702, 4096, %s4700, %s4688, 128, 128, 8
        $region68: #{tpu_custom_call.1} parent=47 // pred_fallthru
          _
      $region48: #{tpu_custom_call.1} parent=5 // pred_fallthru
        _
      %p4708 = scmp.le.s32.totalorder 2, %s21
      // Predicated region
      $region69: #{tpu_custom_call.1} parent=5 // pred_check
        %p4709 = pneg %p4708
      $region70: #{tpu_custom_call.1} parent=5 // pred_check_branch
        %4711 = sbr.rel (%p4709) target = $region72
      $region71: #{tpu_custom_call.1} parent=5 // pred_region
        %s4712 = ssub.s32 %s21, 2
        // Predicated region
        $region73: #{tpu_custom_call.1} parent=71 // pred_check
          %p4713 = pneg %p202
        $region74: #{tpu_custom_call.1} parent=71 // pred_check_branch
          %4715 = sbr.rel (%p4713) target = $region76
        $region75: #{tpu_custom_call.1} parent=71 // pred_region
          %s4716 = sand.u32 %s187, 1
          %s4717 = scalar_lea.sflag [#allocation5], %s4716
          %s4718 = sand.u32 %s187, 1
          %s4719 = smul.addr %s4718, 256
          %s4720 = scalar_lea.vmem [#allocation11], %s4719
          %4721 = dma.done %s4717, 4096
        $region76: #{tpu_custom_call.1} parent=71 // pred_fallthru
          _
      $region72: #{tpu_custom_call.1} parent=5 // pred_fallthru
        _
    $region6: #{tpu_custom_call.1} parent=1 // loop_footer
      %s25 = sadd.s32 1, %s21
    $region7: #{tpu_custom_call.1} parent=1 // loop_footer_branch
      %20 = sbr.rel target = $region3
    $region8: #{tpu_custom_call.1} parent=1 // loop_exit
      _
    %4722 = vsyncpa [#allocation4], 1
    %s4723 = scalar_lea.sflag [#allocation4], 1
    %4724 = vsyncpa %s4723, 1
    %4725 = vsyncpa [#allocation7], 1
    %4726 = vsyncpa [#allocation10], 1
    %4727 = vsyncpa [#allocation5], 1
    %s4728 = scalar_lea.sflag [#allocation5], 1
    %4729 = vsyncpa %s4728, 1

</llo_original>
